<compile_context>
chip_gen: v6e
topology: v6e:2x2x1
jax: 0.10.0
libtpu: 0.0.40
codegen_flags: <defaults>
</compile_context>

<pallas_src>
import functools

import jax
import jax.numpy as jnp
from jax.experimental import pallas as pl
from jax.experimental.pallas import tpu as pltpu


def _capsule_routing_kernel(x_ref, w_ref, o_ref, *,
                            num_capsules: int,
                            out_channels: int,
                            num_iterations: int):
    """Single-step kernel handling all capsules for the full batch.

    x_ref: (B, R, IC)       -- input capsules, as given (IC on lanes)
    w_ref: (IC, R, C*OC)    -- route weights, contraction axis leading,
                               (capsule, out_channel) folded into the lane dim
    o_ref: (B, C*OC)        -- squashed outputs, lane-dense slab
    """
    C, OC = num_capsules, out_channels
    x = x_ref[...]                                   # [B, R, IC]
    B, R, IC = x.shape
    CO = C * OC

    # ---- priors[b, r, c*OC + o] = sum_i x[b, r, i] * w[i, r, c*OC + o] ----
    # IC is a leading (untiled) axis of w, so the contraction unrolls into
    # lane-dense VPU multiply-adds on a [B, R, C*OC] accumulator (no XLU
    # reductions, no tiny per-route MXU matmuls).
    priors = x[:, :, 0:1] * w_ref[0][None]           # [B, R, CO]
    for i in range(1, IC):
        priors = priors + x[:, :, i:i + 1] * w_ref[i][None]

    # ---- helpers: exact per-capsule lane-group expand / reduce ----
    def expand_c(v):
        # [..., C] -> [..., C*OC] (repeat each capsule value across its OC lanes)
        return jnp.concatenate(
            [jnp.broadcast_to(v[..., c:c + 1], v.shape[:-1] + (OC,))
             for c in range(C)],
            axis=-1)

    def reduce_oc(v):
        # [..., C*OC] -> [..., C] (sum each contiguous OC-lane group)
        return jnp.concatenate(
            [jnp.sum(v[..., c * OC:(c + 1) * OC], axis=-1, keepdims=True)
             for c in range(C)],
            axis=-1)

    # ---- dynamic routing ----
    # logits is rank-1 along OC in the reference (zero init + keepdim delta),
    # so it is carried compactly as [B, R, C].
    inv_r = 1.0 / float(R)
    logits = None
    outputs = None
    for it in range(num_iterations):
        if it == 0:
            # softmax of all-zero logits over R is exactly 1/R -> a mean.
            s = jnp.sum(priors, axis=1) * inv_r                      # [B, CO]
        else:
            m = jnp.max(logits, axis=1, keepdims=True)               # [B, 1, C]
            e = jnp.exp(logits - m)                                  # [B, R, C]
            denom = jnp.sum(e, axis=1, keepdims=True)                # [B, 1, C]
            probs = e * pl.reciprocal(denom, approx=False)           # [B, R, C]
            s = jnp.sum(expand_c(probs) * priors, axis=1)            # [B, CO]

        # squash over out_channels (per-capsule group of OC lanes); exact
        # divide/sqrt to preserve 1e-5 parity with the reference.
        sq = reduce_oc(s * s)                                        # [B, C]
        factor = (sq / (1.0 + sq)) / jnp.sqrt(sq)                    # [B, C]
        outputs = s * expand_c(factor)                               # [B, CO]

        if it != num_iterations - 1:
            # agreement: identical across OC columns in the reference update
            delta = reduce_oc(priors * outputs[:, None, :])          # [B, R, C]
            logits = delta if logits is None else logits + delta

    o_ref[...] = outputs.astype(o_ref.dtype)


def prepare_route_weights(route_weights):
    """One-time (parameter-init-time) re-layout of the route weights.

    [C, R, IC, OC] -> [IC, R, C*OC]   (contraction axis leading, lane-dense minor)
    Hoisted out of the per-call path so the 160 KiB transpose + HBM round trip
    does not run on every forward call.
    """
    C, R, IC, OC = route_weights.shape
    return jnp.transpose(route_weights, (2, 1, 0, 3)).reshape(IC, R, C * OC)


def capsule_layer_routing(x, w_fmt, *, num_capsules, out_channels,
                          num_iterations=3):
    """Pallas implementation of CapsuleLayer.forward (routing branch).

    x:     [B, R, IC] float32
    w_fmt: [IC, R, C*OC] float32  (from `prepare_route_weights`)
    returns [C, B, 1, 1, OC] float32 (same layout as the PyTorch module)
    """
    B, R, IC = x.shape
    IC2, R2, CO = w_fmt.shape
    C, OC = num_capsules, out_channels
    assert IC == IC2 and R == R2 and CO == C * OC
    assert num_iterations >= 1

    kernel = functools.partial(_capsule_routing_kernel,
                               num_capsules=C,
                               out_channels=OC,
                               num_iterations=num_iterations)

    out = pl.pallas_call(
        kernel,
        out_shape=jax.ShapeDtypeStruct((B, CO), jnp.float32),
        grid=(1,),
        in_specs=[
            pl.BlockSpec((B, R, IC), lambda h: (0, 0, 0)),
            pl.BlockSpec((IC, R, CO), lambda h: (0, 0, 0)),
        ],
        out_specs=pl.BlockSpec((B, CO), lambda h: (0, 0)),
        compiler_params=pltpu.CompilerParams(
            dimension_semantics=("arbitrary",)),
    )(x, w_fmt)

    # Tiny (1.3 KiB) wrapper-side layout fixup to the reference output shape.
    return out.reshape(B, C, OC).transpose(1, 0, 2).reshape(C, B, 1, 1, OC)


def _reference_routing(x, route_weights, num_iterations=3):
    """Pure-JAX reference mirroring the PyTorch code, for validation."""
    # priors: [C, B, R, 1, OC]
    priors = jnp.matmul(x[None, :, :, None, :], route_weights[:, None, :, :, :],
                        precision=jax.lax.Precision.HIGHEST)
    logits = jnp.zeros_like(priors)

    def squash(t, axis=-1):
        sq = jnp.sum(t * t, axis=axis, keepdims=True)
        return (sq / (1.0 + sq)) * t / jnp.sqrt(sq)

    outputs = None
    for i in range(num_iterations):
        probs = jax.nn.softmax(logits, axis=2)
        outputs = squash(jnp.sum(probs * priors, axis=2, keepdims=True))
        if i != num_iterations - 1:
            delta = jnp.sum(priors * outputs, axis=-1, keepdims=True)
            logits = logits + delta
    return outputs  # [C, B, 1, 1, OC]


if __name__ == "__main__":
    # Module config (routing branch): num_capsules=10, num_route_nodes=32,
    # in_channels=8, out_channels=16, num_iterations=3.
    C, R, IC, OC = 10, 32, 8, 16
    B = 2

    key = jax.random.PRNGKey(0)
    k_w, k_x = jax.random.split(key)
    route_weights = jax.random.normal(k_w, (C, R, IC, OC), dtype=jnp.float32)
    x = jax.random.normal(k_x, (B, R, IC), dtype=jnp.float32)

    # One-time weight re-layout (parameter-init time, not per-call).
    w_fmt = jax.block_until_ready(prepare_route_weights(route_weights))

    out = capsule_layer_routing(x, w_fmt, num_capsules=C, out_channels=OC,
                                num_iterations=3)
    out = jax.block_until_ready(out)

    ref = _reference_routing(x, route_weights, num_iterations=3)
    assert out.shape == (C, B, 1, 1, OC)
    assert jnp.allclose(out, ref, atol=1e-5, rtol=1e-5), "mismatch vs reference"

    print("KERNEL_OK")
</pallas_src>

<mosaic_0001>
module attributes {stable_mosaic.version = 11 : i64} {
  func.func @_capsule_routing_kernel(%arg0: i32, %arg1: memref<2x32x8xf32, #tpu.memory_space<vmem>>, %arg2: memref<8x32x160xf32, #tpu.memory_space<vmem>>, %arg3: memref<2x160xf32, #tpu.memory_space<vmem>>) attributes {dimension_semantics = [#tpu.dimension_semantics<arbitrary>], iteration_bounds = array<i64: 1>, scalar_prefetch = 0 : i64, scratch_operands = 0 : i64, tpu.core_type = #tpu.core_type<tc>, window_params = [{pipeline_mode = #tpu.pipeline_mode<synchronous>, transform_indices = @transform_0, window_bounds = array<i64: 2, 32, 8>}, {pipeline_mode = #tpu.pipeline_mode<synchronous>, transform_indices = @transform_1, window_bounds = array<i64: 8, 32, 160>}, {pipeline_mode = #tpu.pipeline_mode<synchronous>, transform_indices = @transform_2, window_bounds = array<i64: 2, 160>}]} {
    %c0 = arith.constant 0 : index
    %c0_0 = arith.constant 0 : index
    %c0_1 = arith.constant 0 : index
    %0 = vector.load %arg1[%c0, %c0_0, %c0_1] : memref<2x32x8xf32, #tpu.memory_space<vmem>>, vector<2x32x8xf32>
    %1 = vector.extract_strided_slice %0 {offsets = [0, 0, 0], sizes = [2, 32, 1], strides = [1, 1, 1]} : vector<2x32x8xf32> to vector<2x32x1xf32>
    %c0_2 = arith.constant 0 : index
    %c0_3 = arith.constant 0 : index
    %c0_4 = arith.constant 0 : index
    %2 = vector.load %arg2[%c0_2, %c0_3, %c0_4] : memref<8x32x160xf32, #tpu.memory_space<vmem>>, vector<1x32x160xf32>
    %3 = vector.shape_cast %2 : vector<1x32x160xf32> to vector<32x160xf32>
    %4 = vector.shape_cast %3 : vector<32x160xf32> to vector<1x32x160xf32>
    %5 = vector.broadcast %1 : vector<2x32x1xf32> to vector<2x32x160xf32>
    %6 = vector.broadcast %4 : vector<1x32x160xf32> to vector<2x32x160xf32>
    %7 = arith.mulf %5, %6 : vector<2x32x160xf32>
    %8 = vector.extract_strided_slice %0 {offsets = [0, 0, 1], sizes = [2, 32, 1], strides = [1, 1, 1]} : vector<2x32x8xf32> to vector<2x32x1xf32>
    %c1 = arith.constant 1 : index
    %c0_5 = arith.constant 0 : index
    %c0_6 = arith.constant 0 : index
    %9 = vector.load %arg2[%c1, %c0_5, %c0_6] : memref<8x32x160xf32, #tpu.memory_space<vmem>>, vector<1x32x160xf32>
    %10 = vector.shape_cast %9 : vector<1x32x160xf32> to vector<32x160xf32>
    %11 = vector.shape_cast %10 : vector<32x160xf32> to vector<1x32x160xf32>
    %12 = vector.broadcast %8 : vector<2x32x1xf32> to vector<2x32x160xf32>
    %13 = vector.broadcast %11 : vector<1x32x160xf32> to vector<2x32x160xf32>
    %14 = arith.mulf %12, %13 : vector<2x32x160xf32>
    %15 = arith.addf %7, %14 : vector<2x32x160xf32>
    %16 = vector.extract_strided_slice %0 {offsets = [0, 0, 2], sizes = [2, 32, 1], strides = [1, 1, 1]} : vector<2x32x8xf32> to vector<2x32x1xf32>
    %c2 = arith.constant 2 : index
    %c0_7 = arith.constant 0 : index
    %c0_8 = arith.constant 0 : index
    %17 = vector.load %arg2[%c2, %c0_7, %c0_8] : memref<8x32x160xf32, #tpu.memory_space<vmem>>, vector<1x32x160xf32>
    %18 = vector.shape_cast %17 : vector<1x32x160xf32> to vector<32x160xf32>
    %19 = vector.shape_cast %18 : vector<32x160xf32> to vector<1x32x160xf32>
    %20 = vector.broadcast %16 : vector<2x32x1xf32> to vector<2x32x160xf32>
    %21 = vector.broadcast %19 : vector<1x32x160xf32> to vector<2x32x160xf32>
    %22 = arith.mulf %20, %21 : vector<2x32x160xf32>
    %23 = arith.addf %15, %22 : vector<2x32x160xf32>
    %24 = vector.extract_strided_slice %0 {offsets = [0, 0, 3], sizes = [2, 32, 1], strides = [1, 1, 1]} : vector<2x32x8xf32> to vector<2x32x1xf32>
    %c3 = arith.constant 3 : index
    %c0_9 = arith.constant 0 : index
    %c0_10 = arith.constant 0 : index
    %25 = vector.load %arg2[%c3, %c0_9, %c0_10] : memref<8x32x160xf32, #tpu.memory_space<vmem>>, vector<1x32x160xf32>
    %26 = vector.shape_cast %25 : vector<1x32x160xf32> to vector<32x160xf32>
    %27 = vector.shape_cast %26 : vector<32x160xf32> to vector<1x32x160xf32>
    %28 = vector.broadcast %24 : vector<2x32x1xf32> to vector<2x32x160xf32>
    %29 = vector.broadcast %27 : vector<1x32x160xf32> to vector<2x32x160xf32>
    %30 = arith.mulf %28, %29 : vector<2x32x160xf32>
    %31 = arith.addf %23, %30 : vector<2x32x160xf32>
    %32 = vector.extract_strided_slice %0 {offsets = [0, 0, 4], sizes = [2, 32, 1], strides = [1, 1, 1]} : vector<2x32x8xf32> to vector<2x32x1xf32>
    %c4 = arith.constant 4 : index
    %c0_11 = arith.constant 0 : index
    %c0_12 = arith.constant 0 : index
    %33 = vector.load %arg2[%c4, %c0_11, %c0_12] : memref<8x32x160xf32, #tpu.memory_space<vmem>>, vector<1x32x160xf32>
    %34 = vector.shape_cast %33 : vector<1x32x160xf32> to vector<32x160xf32>
    %35 = vector.shape_cast %34 : vector<32x160xf32> to vector<1x32x160xf32>
    %36 = vector.broadcast %32 : vector<2x32x1xf32> to vector<2x32x160xf32>
    %37 = vector.broadcast %35 : vector<1x32x160xf32> to vector<2x32x160xf32>
    %38 = arith.mulf %36, %37 : vector<2x32x160xf32>
    %39 = arith.addf %31, %38 : vector<2x32x160xf32>
    %40 = vector.extract_strided_slice %0 {offsets = [0, 0, 5], sizes = [2, 32, 1], strides = [1, 1, 1]} : vector<2x32x8xf32> to vector<2x32x1xf32>
    %c5 = arith.constant 5 : index
    %c0_13 = arith.constant 0 : index
    %c0_14 = arith.constant 0 : index
    %41 = vector.load %arg2[%c5, %c0_13, %c0_14] : memref<8x32x160xf32, #tpu.memory_space<vmem>>, vector<1x32x160xf32>
    %42 = vector.shape_cast %41 : vector<1x32x160xf32> to vector<32x160xf32>
    %43 = vector.shape_cast %42 : vector<32x160xf32> to vector<1x32x160xf32>
    %44 = vector.broadcast %40 : vector<2x32x1xf32> to vector<2x32x160xf32>
    %45 = vector.broadcast %43 : vector<1x32x160xf32> to vector<2x32x160xf32>
    %46 = arith.mulf %44, %45 : vector<2x32x160xf32>
    %47 = arith.addf %39, %46 : vector<2x32x160xf32>
    %48 = vector.extract_strided_slice %0 {offsets = [0, 0, 6], sizes = [2, 32, 1], strides = [1, 1, 1]} : vector<2x32x8xf32> to vector<2x32x1xf32>
    %c6 = arith.constant 6 : index
    %c0_15 = arith.constant 0 : index
    %c0_16 = arith.constant 0 : index
    %49 = vector.load %arg2[%c6, %c0_15, %c0_16] : memref<8x32x160xf32, #tpu.memory_space<vmem>>, vector<1x32x160xf32>
    %50 = vector.shape_cast %49 : vector<1x32x160xf32> to vector<32x160xf32>
    %51 = vector.shape_cast %50 : vector<32x160xf32> to vector<1x32x160xf32>
    %52 = vector.broadcast %48 : vector<2x32x1xf32> to vector<2x32x160xf32>
    %53 = vector.broadcast %51 : vector<1x32x160xf32> to vector<2x32x160xf32>
    %54 = arith.mulf %52, %53 : vector<2x32x160xf32>
    %55 = arith.addf %47, %54 : vector<2x32x160xf32>
    %56 = vector.extract_strided_slice %0 {offsets = [0, 0, 7], sizes = [2, 32, 1], strides = [1, 1, 1]} : vector<2x32x8xf32> to vector<2x32x1xf32>
    %c7 = arith.constant 7 : index
    %c0_17 = arith.constant 0 : index
    %c0_18 = arith.constant 0 : index
    %57 = vector.load %arg2[%c7, %c0_17, %c0_18] : memref<8x32x160xf32, #tpu.memory_space<vmem>>, vector<1x32x160xf32>
    %58 = vector.shape_cast %57 : vector<1x32x160xf32> to vector<32x160xf32>
    %59 = vector.shape_cast %58 : vector<32x160xf32> to vector<1x32x160xf32>
    %60 = vector.broadcast %56 : vector<2x32x1xf32> to vector<2x32x160xf32>
    %61 = vector.broadcast %59 : vector<1x32x160xf32> to vector<2x32x160xf32>
    %62 = arith.mulf %60, %61 : vector<2x32x160xf32>
    %63 = arith.addf %55, %62 : vector<2x32x160xf32>
    %cst = arith.constant dense<0.000000e+00> : vector<2x160xf32>
    %64 = vector.multi_reduction <add>, %63, %cst [1] : vector<2x32x160xf32> to vector<2x160xf32>
    %cst_19 = arith.constant 3.125000e-02 : f32
    %65 = vector.broadcast %cst_19 : f32 to vector<2x160xf32>
    %66 = arith.mulf %64, %65 : vector<2x160xf32>
    %67 = arith.mulf %66, %66 : vector<2x160xf32>
    %68 = vector.extract_strided_slice %67 {offsets = [0, 0], sizes = [2, 16], strides = [1, 1]} : vector<2x160xf32> to vector<2x16xf32>
    %cst_20 = arith.constant dense<0.000000e+00> : vector<2xf32>
    %69 = vector.multi_reduction <add>, %68, %cst_20 [1] : vector<2x16xf32> to vector<2xf32>
    %70 = vector.shape_cast %69 : vector<2xf32> to vector<2x1xf32>
    %71 = vector.extract_strided_slice %67 {offsets = [0, 16], sizes = [2, 16], strides = [1, 1]} : vector<2x160xf32> to vector<2x16xf32>
    %cst_21 = arith.constant dense<0.000000e+00> : vector<2xf32>
    %72 = vector.multi_reduction <add>, %71, %cst_21 [1] : vector<2x16xf32> to vector<2xf32>
    %73 = vector.shape_cast %72 : vector<2xf32> to vector<2x1xf32>
    %74 = vector.extract_strided_slice %67 {offsets = [0, 32], sizes = [2, 16], strides = [1, 1]} : vector<2x160xf32> to vector<2x16xf32>
    %cst_22 = arith.constant dense<0.000000e+00> : vector<2xf32>
    %75 = vector.multi_reduction <add>, %74, %cst_22 [1] : vector<2x16xf32> to vector<2xf32>
    %76 = vector.shape_cast %75 : vector<2xf32> to vector<2x1xf32>
    %77 = vector.extract_strided_slice %67 {offsets = [0, 48], sizes = [2, 16], strides = [1, 1]} : vector<2x160xf32> to vector<2x16xf32>
    %cst_23 = arith.constant dense<0.000000e+00> : vector<2xf32>
    %78 = vector.multi_reduction <add>, %77, %cst_23 [1] : vector<2x16xf32> to vector<2xf32>
    %79 = vector.shape_cast %78 : vector<2xf32> to vector<2x1xf32>
    %80 = vector.extract_strided_slice %67 {offsets = [0, 64], sizes = [2, 16], strides = [1, 1]} : vector<2x160xf32> to vector<2x16xf32>
    %cst_24 = arith.constant dense<0.000000e+00> : vector<2xf32>
    %81 = vector.multi_reduction <add>, %80, %cst_24 [1] : vector<2x16xf32> to vector<2xf32>
    %82 = vector.shape_cast %81 : vector<2xf32> to vector<2x1xf32>
    %83 = vector.extract_strided_slice %67 {offsets = [0, 80], sizes = [2, 16], strides = [1, 1]} : vector<2x160xf32> to vector<2x16xf32>
    %cst_25 = arith.constant dense<0.000000e+00> : vector<2xf32>
    %84 = vector.multi_reduction <add>, %83, %cst_25 [1] : vector<2x16xf32> to vector<2xf32>
    %85 = vector.shape_cast %84 : vector<2xf32> to vector<2x1xf32>
    %86 = vector.extract_strided_slice %67 {offsets = [0, 96], sizes = [2, 16], strides = [1, 1]} : vector<2x160xf32> to vector<2x16xf32>
    %cst_26 = arith.constant dense<0.000000e+00> : vector<2xf32>
    %87 = vector.multi_reduction <add>, %86, %cst_26 [1] : vector<2x16xf32> to vector<2xf32>
    %88 = vector.shape_cast %87 : vector<2xf32> to vector<2x1xf32>
    %89 = vector.extract_strided_slice %67 {offsets = [0, 112], sizes = [2, 16], strides = [1, 1]} : vector<2x160xf32> to vector<2x16xf32>
    %cst_27 = arith.constant dense<0.000000e+00> : vector<2xf32>
    %90 = vector.multi_reduction <add>, %89, %cst_27 [1] : vector<2x16xf32> to vector<2xf32>
    %91 = vector.shape_cast %90 : vector<2xf32> to vector<2x1xf32>
    %92 = vector.extract_strided_slice %67 {offsets = [0, 128], sizes = [2, 16], strides = [1, 1]} : vector<2x160xf32> to vector<2x16xf32>
    %cst_28 = arith.constant dense<0.000000e+00> : vector<2xf32>
    %93 = vector.multi_reduction <add>, %92, %cst_28 [1] : vector<2x16xf32> to vector<2xf32>
    %94 = vector.shape_cast %93 : vector<2xf32> to vector<2x1xf32>
    %95 = vector.extract_strided_slice %67 {offsets = [0, 144], sizes = [2, 16], strides = [1, 1]} : vector<2x160xf32> to vector<2x16xf32>
    %cst_29 = arith.constant dense<0.000000e+00> : vector<2xf32>
    %96 = vector.multi_reduction <add>, %95, %cst_29 [1] : vector<2x16xf32> to vector<2xf32>
    %97 = vector.shape_cast %96 : vector<2xf32> to vector<2x1xf32>
    %98 = tpu.concatenate %70, %73, %76, %79, %82, %85, %88, %91, %94, %97 in 1 : vector<2x1xf32>, vector<2x1xf32>, vector<2x1xf32>, vector<2x1xf32>, vector<2x1xf32>, vector<2x1xf32>, vector<2x1xf32>, vector<2x1xf32>, vector<2x1xf32>, vector<2x1xf32> -> vector<2x10xf32>
    %cst_30 = arith.constant 1.000000e+00 : f32
    %99 = vector.broadcast %cst_30 : f32 to vector<2x10xf32>
    %100 = arith.addf %99, %98 : vector<2x10xf32>
    %101 = arith.divf %98, %100 : vector<2x10xf32>
    %102 = math.sqrt %98 : vector<2x10xf32>
    %103 = arith.divf %101, %102 : vector<2x10xf32>
    %104 = vector.extract_strided_slice %103 {offsets = [0, 0], sizes = [2, 1], strides = [1, 1]} : vector<2x10xf32> to vector<2x1xf32>
    %105 = vector.shape_cast %104 : vector<2x1xf32> to vector<2x1xf32>
    %106 = vector.broadcast %105 : vector<2x1xf32> to vector<2x16xf32>
    %107 = vector.extract_strided_slice %103 {offsets = [0, 1], sizes = [2, 1], strides = [1, 1]} : vector<2x10xf32> to vector<2x1xf32>
    %108 = vector.shape_cast %107 : vector<2x1xf32> to vector<2x1xf32>
    %109 = vector.broadcast %108 : vector<2x1xf32> to vector<2x16xf32>
    %110 = vector.extract_strided_slice %103 {offsets = [0, 2], sizes = [2, 1], strides = [1, 1]} : vector<2x10xf32> to vector<2x1xf32>
    %111 = vector.shape_cast %110 : vector<2x1xf32> to vector<2x1xf32>
    %112 = vector.broadcast %111 : vector<2x1xf32> to vector<2x16xf32>
    %113 = vector.extract_strided_slice %103 {offsets = [0, 3], sizes = [2, 1], strides = [1, 1]} : vector<2x10xf32> to vector<2x1xf32>
    %114 = vector.shape_cast %113 : vector<2x1xf32> to vector<2x1xf32>
    %115 = vector.broadcast %114 : vector<2x1xf32> to vector<2x16xf32>
    %116 = vector.extract_strided_slice %103 {offsets = [0, 4], sizes = [2, 1], strides = [1, 1]} : vector<2x10xf32> to vector<2x1xf32>
    %117 = vector.shape_cast %116 : vector<2x1xf32> to vector<2x1xf32>
    %118 = vector.broadcast %117 : vector<2x1xf32> to vector<2x16xf32>
    %119 = vector.extract_strided_slice %103 {offsets = [0, 5], sizes = [2, 1], strides = [1, 1]} : vector<2x10xf32> to vector<2x1xf32>
    %120 = vector.shape_cast %119 : vector<2x1xf32> to vector<2x1xf32>
    %121 = vector.broadcast %120 : vector<2x1xf32> to vector<2x16xf32>
    %122 = vector.extract_strided_slice %103 {offsets = [0, 6], sizes = [2, 1], strides = [1, 1]} : vector<2x10xf32> to vector<2x1xf32>
    %123 = vector.shape_cast %122 : vector<2x1xf32> to vector<2x1xf32>
    %124 = vector.broadcast %123 : vector<2x1xf32> to vector<2x16xf32>
    %125 = vector.extract_strided_slice %103 {offsets = [0, 7], sizes = [2, 1], strides = [1, 1]} : vector<2x10xf32> to vector<2x1xf32>
    %126 = vector.shape_cast %125 : vector<2x1xf32> to vector<2x1xf32>
    %127 = vector.broadcast %126 : vector<2x1xf32> to vector<2x16xf32>
    %128 = vector.extract_strided_slice %103 {offsets = [0, 8], sizes = [2, 1], strides = [1, 1]} : vector<2x10xf32> to vector<2x1xf32>
    %129 = vector.shape_cast %128 : vector<2x1xf32> to vector<2x1xf32>
    %130 = vector.broadcast %129 : vector<2x1xf32> to vector<2x16xf32>
    %131 = vector.extract_strided_slice %103 {offsets = [0, 9], sizes = [2, 1], strides = [1, 1]} : vector<2x10xf32> to vector<2x1xf32>
    %132 = vector.shape_cast %131 : vector<2x1xf32> to vector<2x1xf32>
    %133 = vector.broadcast %132 : vector<2x1xf32> to vector<2x16xf32>
    %134 = tpu.concatenate %106, %109, %112, %115, %118, %121, %124, %127, %130, %133 in 1 : vector<2x16xf32>, vector<2x16xf32>, vector<2x16xf32>, vector<2x16xf32>, vector<2x16xf32>, vector<2x16xf32>, vector<2x16xf32>, vector<2x16xf32>, vector<2x16xf32>, vector<2x16xf32> -> vector<2x160xf32>
    %135 = arith.mulf %66, %134 : vector<2x160xf32>
    %136 = vector.shape_cast %135 : vector<2x160xf32> to vector<2x1x160xf32>
    %137 = vector.broadcast %136 : vector<2x1x160xf32> to vector<2x32x160xf32>
    %138 = arith.mulf %63, %137 : vector<2x32x160xf32>
    %139 = vector.extract_strided_slice %138 {offsets = [0, 0, 0], sizes = [2, 32, 16], strides = [1, 1, 1]} : vector<2x32x160xf32> to vector<2x32x16xf32>
    %cst_31 = arith.constant dense<0.000000e+00> : vector<2x32xf32>
    %140 = vector.multi_reduction <add>, %139, %cst_31 [2] : vector<2x32x16xf32> to vector<2x32xf32>
    %141 = vector.shape_cast %140 : vector<2x32xf32> to vector<2x32x1xf32>
    %142 = vector.extract_strided_slice %138 {offsets = [0, 0, 16], sizes = [2, 32, 16], strides = [1, 1, 1]} : vector<2x32x160xf32> to vector<2x32x16xf32>
    %cst_32 = arith.constant dense<0.000000e+00> : vector<2x32xf32>
    %143 = vector.multi_reduction <add>, %142, %cst_32 [2] : vector<2x32x16xf32> to vector<2x32xf32>
    %144 = vector.shape_cast %143 : vector<2x32xf32> to vector<2x32x1xf32>
    %145 = vector.extract_strided_slice %138 {offsets = [0, 0, 32], sizes = [2, 32, 16], strides = [1, 1, 1]} : vector<2x32x160xf32> to vector<2x32x16xf32>
    %cst_33 = arith.constant dense<0.000000e+00> : vector<2x32xf32>
    %146 = vector.multi_reduction <add>, %145, %cst_33 [2] : vector<2x32x16xf32> to vector<2x32xf32>
    %147 = vector.shape_cast %146 : vector<2x32xf32> to vector<2x32x1xf32>
    %148 = vector.extract_strided_slice %138 {offsets = [0, 0, 48], sizes = [2, 32, 16], strides = [1, 1, 1]} : vector<2x32x160xf32> to vector<2x32x16xf32>
    %cst_34 = arith.constant dense<0.000000e+00> : vector<2x32xf32>
    %149 = vector.multi_reduction <add>, %148, %cst_34 [2] : vector<2x32x16xf32> to vector<2x32xf32>
    %150 = vector.shape_cast %149 : vector<2x32xf32> to vector<2x32x1xf32>
    %151 = vector.extract_strided_slice %138 {offsets = [0, 0, 64], sizes = [2, 32, 16], strides = [1, 1, 1]} : vector<2x32x160xf32> to vector<2x32x16xf32>
    %cst_35 = arith.constant dense<0.000000e+00> : vector<2x32xf32>
    %152 = vector.multi_reduction <add>, %151, %cst_35 [2] : vector<2x32x16xf32> to vector<2x32xf32>
    %153 = vector.shape_cast %152 : vector<2x32xf32> to vector<2x32x1xf32>
    %154 = vector.extract_strided_slice %138 {offsets = [0, 0, 80], sizes = [2, 32, 16], strides = [1, 1, 1]} : vector<2x32x160xf32> to vector<2x32x16xf32>
    %cst_36 = arith.constant dense<0.000000e+00> : vector<2x32xf32>
    %155 = vector.multi_reduction <add>, %154, %cst_36 [2] : vector<2x32x16xf32> to vector<2x32xf32>
    %156 = vector.shape_cast %155 : vector<2x32xf32> to vector<2x32x1xf32>
    %157 = vector.extract_strided_slice %138 {offsets = [0, 0, 96], sizes = [2, 32, 16], strides = [1, 1, 1]} : vector<2x32x160xf32> to vector<2x32x16xf32>
    %cst_37 = arith.constant dense<0.000000e+00> : vector<2x32xf32>
    %158 = vector.multi_reduction <add>, %157, %cst_37 [2] : vector<2x32x16xf32> to vector<2x32xf32>
    %159 = vector.shape_cast %158 : vector<2x32xf32> to vector<2x32x1xf32>
    %160 = vector.extract_strided_slice %138 {offsets = [0, 0, 112], sizes = [2, 32, 16], strides = [1, 1, 1]} : vector<2x32x160xf32> to vector<2x32x16xf32>
    %cst_38 = arith.constant dense<0.000000e+00> : vector<2x32xf32>
    %161 = vector.multi_reduction <add>, %160, %cst_38 [2] : vector<2x32x16xf32> to vector<2x32xf32>
    %162 = vector.shape_cast %161 : vector<2x32xf32> to vector<2x32x1xf32>
    %163 = vector.extract_strided_slice %138 {offsets = [0, 0, 128], sizes = [2, 32, 16], strides = [1, 1, 1]} : vector<2x32x160xf32> to vector<2x32x16xf32>
    %cst_39 = arith.constant dense<0.000000e+00> : vector<2x32xf32>
    %164 = vector.multi_reduction <add>, %163, %cst_39 [2] : vector<2x32x16xf32> to vector<2x32xf32>
    %165 = vector.shape_cast %164 : vector<2x32xf32> to vector<2x32x1xf32>
    %166 = vector.extract_strided_slice %138 {offsets = [0, 0, 144], sizes = [2, 32, 16], strides = [1, 1, 1]} : vector<2x32x160xf32> to vector<2x32x16xf32>
    %cst_40 = arith.constant dense<0.000000e+00> : vector<2x32xf32>
    %167 = vector.multi_reduction <add>, %166, %cst_40 [2] : vector<2x32x16xf32> to vector<2x32xf32>
    %168 = vector.shape_cast %167 : vector<2x32xf32> to vector<2x32x1xf32>
    %169 = tpu.concatenate %141, %144, %147, %150, %153, %156, %159, %162, %165, %168 in 2 : vector<2x32x1xf32>, vector<2x32x1xf32>, vector<2x32x1xf32>, vector<2x32x1xf32>, vector<2x32x1xf32>, vector<2x32x1xf32>, vector<2x32x1xf32>, vector<2x32x1xf32>, vector<2x32x1xf32>, vector<2x32x1xf32> -> vector<2x32x10xf32>
    %cst_41 = arith.constant dense<0xFF800000> : vector<2x10xf32>
    %170 = vector.multi_reduction <maximumf>, %169, %cst_41 [1] : vector<2x32x10xf32> to vector<2x10xf32>
    %171 = vector.shape_cast %170 : vector<2x10xf32> to vector<2x1x10xf32>
    %172 = vector.broadcast %171 : vector<2x1x10xf32> to vector<2x32x10xf32>
    %173 = arith.subf %169, %172 : vector<2x32x10xf32>
    %174 = math.exp %173 : vector<2x32x10xf32>
    %cst_42 = arith.constant dense<0.000000e+00> : vector<2x10xf32>
    %175 = vector.multi_reduction <add>, %174, %cst_42 [1] : vector<2x32x10xf32> to vector<2x10xf32>
    %176 = vector.shape_cast %175 : vector<2x10xf32> to vector<2x1x10xf32>
    %177 = tpu.reciprocal %176 : vector<2x1x10xf32> -> vector<2x1x10xf32>
    %178 = vector.broadcast %177 : vector<2x1x10xf32> to vector<2x32x10xf32>
    %179 = arith.mulf %174, %178 : vector<2x32x10xf32>
    %180 = vector.extract_strided_slice %179 {offsets = [0, 0, 0], sizes = [2, 32, 1], strides = [1, 1, 1]} : vector<2x32x10xf32> to vector<2x32x1xf32>
    %181 = vector.shape_cast %180 : vector<2x32x1xf32> to vector<2x32x1xf32>
    %182 = vector.broadcast %181 : vector<2x32x1xf32> to vector<2x32x16xf32>
    %183 = vector.extract_strided_slice %179 {offsets = [0, 0, 1], sizes = [2, 32, 1], strides = [1, 1, 1]} : vector<2x32x10xf32> to vector<2x32x1xf32>
    %184 = vector.shape_cast %183 : vector<2x32x1xf32> to vector<2x32x1xf32>
    %185 = vector.broadcast %184 : vector<2x32x1xf32> to vector<2x32x16xf32>
    %186 = vector.extract_strided_slice %179 {offsets = [0, 0, 2], sizes = [2, 32, 1], strides = [1, 1, 1]} : vector<2x32x10xf32> to vector<2x32x1xf32>
    %187 = vector.shape_cast %186 : vector<2x32x1xf32> to vector<2x32x1xf32>
    %188 = vector.broadcast %187 : vector<2x32x1xf32> to vector<2x32x16xf32>
    %189 = vector.extract_strided_slice %179 {offsets = [0, 0, 3], sizes = [2, 32, 1], strides = [1, 1, 1]} : vector<2x32x10xf32> to vector<2x32x1xf32>
    %190 = vector.shape_cast %189 : vector<2x32x1xf32> to vector<2x32x1xf32>
    %191 = vector.broadcast %190 : vector<2x32x1xf32> to vector<2x32x16xf32>
    %192 = vector.extract_strided_slice %179 {offsets = [0, 0, 4], sizes = [2, 32, 1], strides = [1, 1, 1]} : vector<2x32x10xf32> to vector<2x32x1xf32>
    %193 = vector.shape_cast %192 : vector<2x32x1xf32> to vector<2x32x1xf32>
    %194 = vector.broadcast %193 : vector<2x32x1xf32> to vector<2x32x16xf32>
    %195 = vector.extract_strided_slice %179 {offsets = [0, 0, 5], sizes = [2, 32, 1], strides = [1, 1, 1]} : vector<2x32x10xf32> to vector<2x32x1xf32>
    %196 = vector.shape_cast %195 : vector<2x32x1xf32> to vector<2x32x1xf32>
    %197 = vector.broadcast %196 : vector<2x32x1xf32> to vector<2x32x16xf32>
    %198 = vector.extract_strided_slice %179 {offsets = [0, 0, 6], sizes = [2, 32, 1], strides = [1, 1, 1]} : vector<2x32x10xf32> to vector<2x32x1xf32>
    %199 = vector.shape_cast %198 : vector<2x32x1xf32> to vector<2x32x1xf32>
    %200 = vector.broadcast %199 : vector<2x32x1xf32> to vector<2x32x16xf32>
    %201 = vector.extract_strided_slice %179 {offsets = [0, 0, 7], sizes = [2, 32, 1], strides = [1, 1, 1]} : vector<2x32x10xf32> to vector<2x32x1xf32>
    %202 = vector.shape_cast %201 : vector<2x32x1xf32> to vector<2x32x1xf32>
    %203 = vector.broadcast %202 : vector<2x32x1xf32> to vector<2x32x16xf32>
    %204 = vector.extract_strided_slice %179 {offsets = [0, 0, 8], sizes = [2, 32, 1], strides = [1, 1, 1]} : vector<2x32x10xf32> to vector<2x32x1xf32>
    %205 = vector.shape_cast %204 : vector<2x32x1xf32> to vector<2x32x1xf32>
    %206 = vector.broadcast %205 : vector<2x32x1xf32> to vector<2x32x16xf32>
    %207 = vector.extract_strided_slice %179 {offsets = [0, 0, 9], sizes = [2, 32, 1], strides = [1, 1, 1]} : vector<2x32x10xf32> to vector<2x32x1xf32>
    %208 = vector.shape_cast %207 : vector<2x32x1xf32> to vector<2x32x1xf32>
    %209 = vector.broadcast %208 : vector<2x32x1xf32> to vector<2x32x16xf32>
    %210 = tpu.concatenate %182, %185, %188, %191, %194, %197, %200, %203, %206, %209 in 2 : vector<2x32x16xf32>, vector<2x32x16xf32>, vector<2x32x16xf32>, vector<2x32x16xf32>, vector<2x32x16xf32>, vector<2x32x16xf32>, vector<2x32x16xf32>, vector<2x32x16xf32>, vector<2x32x16xf32>, vector<2x32x16xf32> -> vector<2x32x160xf32>
    %211 = arith.mulf %210, %63 : vector<2x32x160xf32>
    %cst_43 = arith.constant dense<0.000000e+00> : vector<2x160xf32>
    %212 = vector.multi_reduction <add>, %211, %cst_43 [1] : vector<2x32x160xf32> to vector<2x160xf32>
    %213 = arith.mulf %212, %212 : vector<2x160xf32>
    %214 = vector.extract_strided_slice %213 {offsets = [0, 0], sizes = [2, 16], strides = [1, 1]} : vector<2x160xf32> to vector<2x16xf32>
    %cst_44 = arith.constant dense<0.000000e+00> : vector<2xf32>
    %215 = vector.multi_reduction <add>, %214, %cst_44 [1] : vector<2x16xf32> to vector<2xf32>
    %216 = vector.shape_cast %215 : vector<2xf32> to vector<2x1xf32>
    %217 = vector.extract_strided_slice %213 {offsets = [0, 16], sizes = [2, 16], strides = [1, 1]} : vector<2x160xf32> to vector<2x16xf32>
    %cst_45 = arith.constant dense<0.000000e+00> : vector<2xf32>
    %218 = vector.multi_reduction <add>, %217, %cst_45 [1] : vector<2x16xf32> to vector<2xf32>
    %219 = vector.shape_cast %218 : vector<2xf32> to vector<2x1xf32>
    %220 = vector.extract_strided_slice %213 {offsets = [0, 32], sizes = [2, 16], strides = [1, 1]} : vector<2x160xf32> to vector<2x16xf32>
    %cst_46 = arith.constant dense<0.000000e+00> : vector<2xf32>
    %221 = vector.multi_reduction <add>, %220, %cst_46 [1] : vector<2x16xf32> to vector<2xf32>
    %222 = vector.shape_cast %221 : vector<2xf32> to vector<2x1xf32>
    %223 = vector.extract_strided_slice %213 {offsets = [0, 48], sizes = [2, 16], strides = [1, 1]} : vector<2x160xf32> to vector<2x16xf32>
    %cst_47 = arith.constant dense<0.000000e+00> : vector<2xf32>
    %224 = vector.multi_reduction <add>, %223, %cst_47 [1] : vector<2x16xf32> to vector<2xf32>
    %225 = vector.shape_cast %224 : vector<2xf32> to vector<2x1xf32>
    %226 = vector.extract_strided_slice %213 {offsets = [0, 64], sizes = [2, 16], strides = [1, 1]} : vector<2x160xf32> to vector<2x16xf32>
    %cst_48 = arith.constant dense<0.000000e+00> : vector<2xf32>
    %227 = vector.multi_reduction <add>, %226, %cst_48 [1] : vector<2x16xf32> to vector<2xf32>
    %228 = vector.shape_cast %227 : vector<2xf32> to vector<2x1xf32>
    %229 = vector.extract_strided_slice %213 {offsets = [0, 80], sizes = [2, 16], strides = [1, 1]} : vector<2x160xf32> to vector<2x16xf32>
    %cst_49 = arith.constant dense<0.000000e+00> : vector<2xf32>
    %230 = vector.multi_reduction <add>, %229, %cst_49 [1] : vector<2x16xf32> to vector<2xf32>
    %231 = vector.shape_cast %230 : vector<2xf32> to vector<2x1xf32>
    %232 = vector.extract_strided_slice %213 {offsets = [0, 96], sizes = [2, 16], strides = [1, 1]} : vector<2x160xf32> to vector<2x16xf32>
    %cst_50 = arith.constant dense<0.000000e+00> : vector<2xf32>
    %233 = vector.multi_reduction <add>, %232, %cst_50 [1] : vector<2x16xf32> to vector<2xf32>
    %234 = vector.shape_cast %233 : vector<2xf32> to vector<2x1xf32>
    %235 = vector.extract_strided_slice %213 {offsets = [0, 112], sizes = [2, 16], strides = [1, 1]} : vector<2x160xf32> to vector<2x16xf32>
    %cst_51 = arith.constant dense<0.000000e+00> : vector<2xf32>
    %236 = vector.multi_reduction <add>, %235, %cst_51 [1] : vector<2x16xf32> to vector<2xf32>
    %237 = vector.shape_cast %236 : vector<2xf32> to vector<2x1xf32>
    %238 = vector.extract_strided_slice %213 {offsets = [0, 128], sizes = [2, 16], strides = [1, 1]} : vector<2x160xf32> to vector<2x16xf32>
    %cst_52 = arith.constant dense<0.000000e+00> : vector<2xf32>
    %239 = vector.multi_reduction <add>, %238, %cst_52 [1] : vector<2x16xf32> to vector<2xf32>
    %240 = vector.shape_cast %239 : vector<2xf32> to vector<2x1xf32>
    %241 = vector.extract_strided_slice %213 {offsets = [0, 144], sizes = [2, 16], strides = [1, 1]} : vector<2x160xf32> to vector<2x16xf32>
    %cst_53 = arith.constant dense<0.000000e+00> : vector<2xf32>
    %242 = vector.multi_reduction <add>, %241, %cst_53 [1] : vector<2x16xf32> to vector<2xf32>
    %243 = vector.shape_cast %242 : vector<2xf32> to vector<2x1xf32>
    %244 = tpu.concatenate %216, %219, %222, %225, %228, %231, %234, %237, %240, %243 in 1 : vector<2x1xf32>, vector<2x1xf32>, vector<2x1xf32>, vector<2x1xf32>, vector<2x1xf32>, vector<2x1xf32>, vector<2x1xf32>, vector<2x1xf32>, vector<2x1xf32>, vector<2x1xf32> -> vector<2x10xf32>
    %cst_54 = arith.constant 1.000000e+00 : f32
    %245 = vector.broadcast %cst_54 : f32 to vector<2x10xf32>
    %246 = arith.addf %245, %244 : vector<2x10xf32>
    %247 = arith.divf %244, %246 : vector<2x10xf32>
    %248 = math.sqrt %244 : vector<2x10xf32>
    %249 = arith.divf %247, %248 : vector<2x10xf32>
    %250 = vector.extract_strided_slice %249 {offsets = [0, 0], sizes = [2, 1], strides = [1, 1]} : vector<2x10xf32> to vector<2x1xf32>
    %251 = vector.shape_cast %250 : vector<2x1xf32> to vector<2x1xf32>
    %252 = vector.broadcast %251 : vector<2x1xf32> to vector<2x16xf32>
    %253 = vector.extract_strided_slice %249 {offsets = [0, 1], sizes = [2, 1], strides = [1, 1]} : vector<2x10xf32> to vector<2x1xf32>
    %254 = vector.shape_cast %253 : vector<2x1xf32> to vector<2x1xf32>
    %255 = vector.broadcast %254 : vector<2x1xf32> to vector<2x16xf32>
    %256 = vector.extract_strided_slice %249 {offsets = [0, 2], sizes = [2, 1], strides = [1, 1]} : vector<2x10xf32> to vector<2x1xf32>
    %257 = vector.shape_cast %256 : vector<2x1xf32> to vector<2x1xf32>
    %258 = vector.broadcast %257 : vector<2x1xf32> to vector<2x16xf32>
    %259 = vector.extract_strided_slice %249 {offsets = [0, 3], sizes = [2, 1], strides = [1, 1]} : vector<2x10xf32> to vector<2x1xf32>
    %260 = vector.shape_cast %259 : vector<2x1xf32> to vector<2x1xf32>
    %261 = vector.broadcast %260 : vector<2x1xf32> to vector<2x16xf32>
    %262 = vector.extract_strided_slice %249 {offsets = [0, 4], sizes = [2, 1], strides = [1, 1]} : vector<2x10xf32> to vector<2x1xf32>
    %263 = vector.shape_cast %262 : vector<2x1xf32> to vector<2x1xf32>
    %264 = vector.broadcast %263 : vector<2x1xf32> to vector<2x16xf32>
    %265 = vector.extract_strided_slice %249 {offsets = [0, 5], sizes = [2, 1], strides = [1, 1]} : vector<2x10xf32> to vector<2x1xf32>
    %266 = vector.shape_cast %265 : vector<2x1xf32> to vector<2x1xf32>
    %267 = vector.broadcast %266 : vector<2x1xf32> to vector<2x16xf32>
    %268 = vector.extract_strided_slice %249 {offsets = [0, 6], sizes = [2, 1], strides = [1, 1]} : vector<2x10xf32> to vector<2x1xf32>
    %269 = vector.shape_cast %268 : vector<2x1xf32> to vector<2x1xf32>
    %270 = vector.broadcast %269 : vector<2x1xf32> to vector<2x16xf32>
    %271 = vector.extract_strided_slice %249 {offsets = [0, 7], sizes = [2, 1], strides = [1, 1]} : vector<2x10xf32> to vector<2x1xf32>
    %272 = vector.shape_cast %271 : vector<2x1xf32> to vector<2x1xf32>
    %273 = vector.broadcast %272 : vector<2x1xf32> to vector<2x16xf32>
    %274 = vector.extract_strided_slice %249 {offsets = [0, 8], sizes = [2, 1], strides = [1, 1]} : vector<2x10xf32> to vector<2x1xf32>
    %275 = vector.shape_cast %274 : vector<2x1xf32> to vector<2x1xf32>
    %276 = vector.broadcast %275 : vector<2x1xf32> to vector<2x16xf32>
    %277 = vector.extract_strided_slice %249 {offsets = [0, 9], sizes = [2, 1], strides = [1, 1]} : vector<2x10xf32> to vector<2x1xf32>
    %278 = vector.shape_cast %277 : vector<2x1xf32> to vector<2x1xf32>
    %279 = vector.broadcast %278 : vector<2x1xf32> to vector<2x16xf32>
    %280 = tpu.concatenate %252, %255, %258, %261, %264, %267, %270, %273, %276, %279 in 1 : vector<2x16xf32>, vector<2x16xf32>, vector<2x16xf32>, vector<2x16xf32>, vector<2x16xf32>, vector<2x16xf32>, vector<2x16xf32>, vector<2x16xf32>, vector<2x16xf32>, vector<2x16xf32> -> vector<2x160xf32>
    %281 = arith.mulf %212, %280 : vector<2x160xf32>
    %282 = vector.shape_cast %281 : vector<2x160xf32> to vector<2x1x160xf32>
    %283 = vector.broadcast %282 : vector<2x1x160xf32> to vector<2x32x160xf32>
    %284 = arith.mulf %63, %283 : vector<2x32x160xf32>
    %285 = vector.extract_strided_slice %284 {offsets = [0, 0, 0], sizes = [2, 32, 16], strides = [1, 1, 1]} : vector<2x32x160xf32> to vector<2x32x16xf32>
    %cst_55 = arith.constant dense<0.000000e+00> : vector<2x32xf32>
    %286 = vector.multi_reduction <add>, %285, %cst_55 [2] : vector<2x32x16xf32> to vector<2x32xf32>
    %287 = vector.shape_cast %286 : vector<2x32xf32> to vector<2x32x1xf32>
    %288 = vector.extract_strided_slice %284 {offsets = [0, 0, 16], sizes = [2, 32, 16], strides = [1, 1, 1]} : vector<2x32x160xf32> to vector<2x32x16xf32>
    %cst_56 = arith.constant dense<0.000000e+00> : vector<2x32xf32>
    %289 = vector.multi_reduction <add>, %288, %cst_56 [2] : vector<2x32x16xf32> to vector<2x32xf32>
    %290 = vector.shape_cast %289 : vector<2x32xf32> to vector<2x32x1xf32>
    %291 = vector.extract_strided_slice %284 {offsets = [0, 0, 32], sizes = [2, 32, 16], strides = [1, 1, 1]} : vector<2x32x160xf32> to vector<2x32x16xf32>
    %cst_57 = arith.constant dense<0.000000e+00> : vector<2x32xf32>
    %292 = vector.multi_reduction <add>, %291, %cst_57 [2] : vector<2x32x16xf32> to vector<2x32xf32>
    %293 = vector.shape_cast %292 : vector<2x32xf32> to vector<2x32x1xf32>
    %294 = vector.extract_strided_slice %284 {offsets = [0, 0, 48], sizes = [2, 32, 16], strides = [1, 1, 1]} : vector<2x32x160xf32> to vector<2x32x16xf32>
    %cst_58 = arith.constant dense<0.000000e+00> : vector<2x32xf32>
    %295 = vector.multi_reduction <add>, %294, %cst_58 [2] : vector<2x32x16xf32> to vector<2x32xf32>
    %296 = vector.shape_cast %295 : vector<2x32xf32> to vector<2x32x1xf32>
    %297 = vector.extract_strided_slice %284 {offsets = [0, 0, 64], sizes = [2, 32, 16], strides = [1, 1, 1]} : vector<2x32x160xf32> to vector<2x32x16xf32>
    %cst_59 = arith.constant dense<0.000000e+00> : vector<2x32xf32>
    %298 = vector.multi_reduction <add>, %297, %cst_59 [2] : vector<2x32x16xf32> to vector<2x32xf32>
    %299 = vector.shape_cast %298 : vector<2x32xf32> to vector<2x32x1xf32>
    %300 = vector.extract_strided_slice %284 {offsets = [0, 0, 80], sizes = [2, 32, 16], strides = [1, 1, 1]} : vector<2x32x160xf32> to vector<2x32x16xf32>
    %cst_60 = arith.constant dense<0.000000e+00> : vector<2x32xf32>
    %301 = vector.multi_reduction <add>, %300, %cst_60 [2] : vector<2x32x16xf32> to vector<2x32xf32>
    %302 = vector.shape_cast %301 : vector<2x32xf32> to vector<2x32x1xf32>
    %303 = vector.extract_strided_slice %284 {offsets = [0, 0, 96], sizes = [2, 32, 16], strides = [1, 1, 1]} : vector<2x32x160xf32> to vector<2x32x16xf32>
    %cst_61 = arith.constant dense<0.000000e+00> : vector<2x32xf32>
    %304 = vector.multi_reduction <add>, %303, %cst_61 [2] : vector<2x32x16xf32> to vector<2x32xf32>
    %305 = vector.shape_cast %304 : vector<2x32xf32> to vector<2x32x1xf32>
    %306 = vector.extract_strided_slice %284 {offsets = [0, 0, 112], sizes = [2, 32, 16], strides = [1, 1, 1]} : vector<2x32x160xf32> to vector<2x32x16xf32>
    %cst_62 = arith.constant dense<0.000000e+00> : vector<2x32xf32>
    %307 = vector.multi_reduction <add>, %306, %cst_62 [2] : vector<2x32x16xf32> to vector<2x32xf32>
    %308 = vector.shape_cast %307 : vector<2x32xf32> to vector<2x32x1xf32>
    %309 = vector.extract_strided_slice %284 {offsets = [0, 0, 128], sizes = [2, 32, 16], strides = [1, 1, 1]} : vector<2x32x160xf32> to vector<2x32x16xf32>
    %cst_63 = arith.constant dense<0.000000e+00> : vector<2x32xf32>
    %310 = vector.multi_reduction <add>, %309, %cst_63 [2] : vector<2x32x16xf32> to vector<2x32xf32>
    %311 = vector.shape_cast %310 : vector<2x32xf32> to vector<2x32x1xf32>
    %312 = vector.extract_strided_slice %284 {offsets = [0, 0, 144], sizes = [2, 32, 16], strides = [1, 1, 1]} : vector<2x32x160xf32> to vector<2x32x16xf32>
    %cst_64 = arith.constant dense<0.000000e+00> : vector<2x32xf32>
    %313 = vector.multi_reduction <add>, %312, %cst_64 [2] : vector<2x32x16xf32> to vector<2x32xf32>
    %314 = vector.shape_cast %313 : vector<2x32xf32> to vector<2x32x1xf32>
    %315 = tpu.concatenate %287, %290, %293, %296, %299, %302, %305, %308, %311, %314 in 2 : vector<2x32x1xf32>, vector<2x32x1xf32>, vector<2x32x1xf32>, vector<2x32x1xf32>, vector<2x32x1xf32>, vector<2x32x1xf32>, vector<2x32x1xf32>, vector<2x32x1xf32>, vector<2x32x1xf32>, vector<2x32x1xf32> -> vector<2x32x10xf32>
    %316 = arith.addf %169, %315 : vector<2x32x10xf32>
    %cst_65 = arith.constant dense<0xFF800000> : vector<2x10xf32>
    %317 = vector.multi_reduction <maximumf>, %316, %cst_65 [1] : vector<2x32x10xf32> to vector<2x10xf32>
    %318 = vector.shape_cast %317 : vector<2x10xf32> to vector<2x1x10xf32>
    %319 = vector.broadcast %318 : vector<2x1x10xf32> to vector<2x32x10xf32>
    %320 = arith.subf %316, %319 : vector<2x32x10xf32>
    %321 = math.exp %320 : vector<2x32x10xf32>
    %cst_66 = arith.constant dense<0.000000e+00> : vector<2x10xf32>
    %322 = vector.multi_reduction <add>, %321, %cst_66 [1] : vector<2x32x10xf32> to vector<2x10xf32>
    %323 = vector.shape_cast %322 : vector<2x10xf32> to vector<2x1x10xf32>
    %324 = tpu.reciprocal %323 : vector<2x1x10xf32> -> vector<2x1x10xf32>
    %325 = vector.broadcast %324 : vector<2x1x10xf32> to vector<2x32x10xf32>
    %326 = arith.mulf %321, %325 : vector<2x32x10xf32>
    %327 = vector.extract_strided_slice %326 {offsets = [0, 0, 0], sizes = [2, 32, 1], strides = [1, 1, 1]} : vector<2x32x10xf32> to vector<2x32x1xf32>
    %328 = vector.shape_cast %327 : vector<2x32x1xf32> to vector<2x32x1xf32>
    %329 = vector.broadcast %328 : vector<2x32x1xf32> to vector<2x32x16xf32>
    %330 = vector.extract_strided_slice %326 {offsets = [0, 0, 1], sizes = [2, 32, 1], strides = [1, 1, 1]} : vector<2x32x10xf32> to vector<2x32x1xf32>
    %331 = vector.shape_cast %330 : vector<2x32x1xf32> to vector<2x32x1xf32>
    %332 = vector.broadcast %331 : vector<2x32x1xf32> to vector<2x32x16xf32>
    %333 = vector.extract_strided_slice %326 {offsets = [0, 0, 2], sizes = [2, 32, 1], strides = [1, 1, 1]} : vector<2x32x10xf32> to vector<2x32x1xf32>
    %334 = vector.shape_cast %333 : vector<2x32x1xf32> to vector<2x32x1xf32>
    %335 = vector.broadcast %334 : vector<2x32x1xf32> to vector<2x32x16xf32>
    %336 = vector.extract_strided_slice %326 {offsets = [0, 0, 3], sizes = [2, 32, 1], strides = [1, 1, 1]} : vector<2x32x10xf32> to vector<2x32x1xf32>
    %337 = vector.shape_cast %336 : vector<2x32x1xf32> to vector<2x32x1xf32>
    %338 = vector.broadcast %337 : vector<2x32x1xf32> to vector<2x32x16xf32>
    %339 = vector.extract_strided_slice %326 {offsets = [0, 0, 4], sizes = [2, 32, 1], strides = [1, 1, 1]} : vector<2x32x10xf32> to vector<2x32x1xf32>
    %340 = vector.shape_cast %339 : vector<2x32x1xf32> to vector<2x32x1xf32>
    %341 = vector.broadcast %340 : vector<2x32x1xf32> to vector<2x32x16xf32>
    %342 = vector.extract_strided_slice %326 {offsets = [0, 0, 5], sizes = [2, 32, 1], strides = [1, 1, 1]} : vector<2x32x10xf32> to vector<2x32x1xf32>
    %343 = vector.shape_cast %342 : vector<2x32x1xf32> to vector<2x32x1xf32>
    %344 = vector.broadcast %343 : vector<2x32x1xf32> to vector<2x32x16xf32>
    %345 = vector.extract_strided_slice %326 {offsets = [0, 0, 6], sizes = [2, 32, 1], strides = [1, 1, 1]} : vector<2x32x10xf32> to vector<2x32x1xf32>
    %346 = vector.shape_cast %345 : vector<2x32x1xf32> to vector<2x32x1xf32>
    %347 = vector.broadcast %346 : vector<2x32x1xf32> to vector<2x32x16xf32>
    %348 = vector.extract_strided_slice %326 {offsets = [0, 0, 7], sizes = [2, 32, 1], strides = [1, 1, 1]} : vector<2x32x10xf32> to vector<2x32x1xf32>
    %349 = vector.shape_cast %348 : vector<2x32x1xf32> to vector<2x32x1xf32>
    %350 = vector.broadcast %349 : vector<2x32x1xf32> to vector<2x32x16xf32>
    %351 = vector.extract_strided_slice %326 {offsets = [0, 0, 8], sizes = [2, 32, 1], strides = [1, 1, 1]} : vector<2x32x10xf32> to vector<2x32x1xf32>
    %352 = vector.shape_cast %351 : vector<2x32x1xf32> to vector<2x32x1xf32>
    %353 = vector.broadcast %352 : vector<2x32x1xf32> to vector<2x32x16xf32>
    %354 = vector.extract_strided_slice %326 {offsets = [0, 0, 9], sizes = [2, 32, 1], strides = [1, 1, 1]} : vector<2x32x10xf32> to vector<2x32x1xf32>
    %355 = vector.shape_cast %354 : vector<2x32x1xf32> to vector<2x32x1xf32>
    %356 = vector.broadcast %355 : vector<2x32x1xf32> to vector<2x32x16xf32>
    %357 = tpu.concatenate %329, %332, %335, %338, %341, %344, %347, %350, %353, %356 in 2 : vector<2x32x16xf32>, vector<2x32x16xf32>, vector<2x32x16xf32>, vector<2x32x16xf32>, vector<2x32x16xf32>, vector<2x32x16xf32>, vector<2x32x16xf32>, vector<2x32x16xf32>, vector<2x32x16xf32>, vector<2x32x16xf32> -> vector<2x32x160xf32>
    %358 = arith.mulf %357, %63 : vector<2x32x160xf32>
    %cst_67 = arith.constant dense<0.000000e+00> : vector<2x160xf32>
    %359 = vector.multi_reduction <add>, %358, %cst_67 [1] : vector<2x32x160xf32> to vector<2x160xf32>
    %360 = arith.mulf %359, %359 : vector<2x160xf32>
    %361 = vector.extract_strided_slice %360 {offsets = [0, 0], sizes = [2, 16], strides = [1, 1]} : vector<2x160xf32> to vector<2x16xf32>
    %cst_68 = arith.constant dense<0.000000e+00> : vector<2xf32>
    %362 = vector.multi_reduction <add>, %361, %cst_68 [1] : vector<2x16xf32> to vector<2xf32>
    %363 = vector.shape_cast %362 : vector<2xf32> to vector<2x1xf32>
    %364 = vector.extract_strided_slice %360 {offsets = [0, 16], sizes = [2, 16], strides = [1, 1]} : vector<2x160xf32> to vector<2x16xf32>
    %cst_69 = arith.constant dense<0.000000e+00> : vector<2xf32>
    %365 = vector.multi_reduction <add>, %364, %cst_69 [1] : vector<2x16xf32> to vector<2xf32>
    %366 = vector.shape_cast %365 : vector<2xf32> to vector<2x1xf32>
    %367 = vector.extract_strided_slice %360 {offsets = [0, 32], sizes = [2, 16], strides = [1, 1]} : vector<2x160xf32> to vector<2x16xf32>
    %cst_70 = arith.constant dense<0.000000e+00> : vector<2xf32>
    %368 = vector.multi_reduction <add>, %367, %cst_70 [1] : vector<2x16xf32> to vector<2xf32>
    %369 = vector.shape_cast %368 : vector<2xf32> to vector<2x1xf32>
    %370 = vector.extract_strided_slice %360 {offsets = [0, 48], sizes = [2, 16], strides = [1, 1]} : vector<2x160xf32> to vector<2x16xf32>
    %cst_71 = arith.constant dense<0.000000e+00> : vector<2xf32>
    %371 = vector.multi_reduction <add>, %370, %cst_71 [1] : vector<2x16xf32> to vector<2xf32>
    %372 = vector.shape_cast %371 : vector<2xf32> to vector<2x1xf32>
    %373 = vector.extract_strided_slice %360 {offsets = [0, 64], sizes = [2, 16], strides = [1, 1]} : vector<2x160xf32> to vector<2x16xf32>
    %cst_72 = arith.constant dense<0.000000e+00> : vector<2xf32>
    %374 = vector.multi_reduction <add>, %373, %cst_72 [1] : vector<2x16xf32> to vector<2xf32>
    %375 = vector.shape_cast %374 : vector<2xf32> to vector<2x1xf32>
    %376 = vector.extract_strided_slice %360 {offsets = [0, 80], sizes = [2, 16], strides = [1, 1]} : vector<2x160xf32> to vector<2x16xf32>
    %cst_73 = arith.constant dense<0.000000e+00> : vector<2xf32>
    %377 = vector.multi_reduction <add>, %376, %cst_73 [1] : vector<2x16xf32> to vector<2xf32>
    %378 = vector.shape_cast %377 : vector<2xf32> to vector<2x1xf32>
    %379 = vector.extract_strided_slice %360 {offsets = [0, 96], sizes = [2, 16], strides = [1, 1]} : vector<2x160xf32> to vector<2x16xf32>
    %cst_74 = arith.constant dense<0.000000e+00> : vector<2xf32>
    %380 = vector.multi_reduction <add>, %379, %cst_74 [1] : vector<2x16xf32> to vector<2xf32>
    %381 = vector.shape_cast %380 : vector<2xf32> to vector<2x1xf32>
    %382 = vector.extract_strided_slice %360 {offsets = [0, 112], sizes = [2, 16], strides = [1, 1]} : vector<2x160xf32> to vector<2x16xf32>
    %cst_75 = arith.constant dense<0.000000e+00> : vector<2xf32>
    %383 = vector.multi_reduction <add>, %382, %cst_75 [1] : vector<2x16xf32> to vector<2xf32>
    %384 = vector.shape_cast %383 : vector<2xf32> to vector<2x1xf32>
    %385 = vector.extract_strided_slice %360 {offsets = [0, 128], sizes = [2, 16], strides = [1, 1]} : vector<2x160xf32> to vector<2x16xf32>
    %cst_76 = arith.constant dense<0.000000e+00> : vector<2xf32>
    %386 = vector.multi_reduction <add>, %385, %cst_76 [1] : vector<2x16xf32> to vector<2xf32>
    %387 = vector.shape_cast %386 : vector<2xf32> to vector<2x1xf32>
    %388 = vector.extract_strided_slice %360 {offsets = [0, 144], sizes = [2, 16], strides = [1, 1]} : vector<2x160xf32> to vector<2x16xf32>
    %cst_77 = arith.constant dense<0.000000e+00> : vector<2xf32>
    %389 = vector.multi_reduction <add>, %388, %cst_77 [1] : vector<2x16xf32> to vector<2xf32>
    %390 = vector.shape_cast %389 : vector<2xf32> to vector<2x1xf32>
    %391 = tpu.concatenate %363, %366, %369, %372, %375, %378, %381, %384, %387, %390 in 1 : vector<2x1xf32>, vector<2x1xf32>, vector<2x1xf32>, vector<2x1xf32>, vector<2x1xf32>, vector<2x1xf32>, vector<2x1xf32>, vector<2x1xf32>, vector<2x1xf32>, vector<2x1xf32> -> vector<2x10xf32>
    %cst_78 = arith.constant 1.000000e+00 : f32
    %392 = vector.broadcast %cst_78 : f32 to vector<2x10xf32>
    %393 = arith.addf %392, %391 : vector<2x10xf32>
    %394 = arith.divf %391, %393 : vector<2x10xf32>
    %395 = math.sqrt %391 : vector<2x10xf32>
    %396 = arith.divf %394, %395 : vector<2x10xf32>
    %397 = vector.extract_strided_slice %396 {offsets = [0, 0], sizes = [2, 1], strides = [1, 1]} : vector<2x10xf32> to vector<2x1xf32>
    %398 = vector.shape_cast %397 : vector<2x1xf32> to vector<2x1xf32>
    %399 = vector.broadcast %398 : vector<2x1xf32> to vector<2x16xf32>
    %400 = vector.extract_strided_slice %396 {offsets = [0, 1], sizes = [2, 1], strides = [1, 1]} : vector<2x10xf32> to vector<2x1xf32>
    %401 = vector.shape_cast %400 : vector<2x1xf32> to vector<2x1xf32>
    %402 = vector.broadcast %401 : vector<2x1xf32> to vector<2x16xf32>
    %403 = vector.extract_strided_slice %396 {offsets = [0, 2], sizes = [2, 1], strides = [1, 1]} : vector<2x10xf32> to vector<2x1xf32>
    %404 = vector.shape_cast %403 : vector<2x1xf32> to vector<2x1xf32>
    %405 = vector.broadcast %404 : vector<2x1xf32> to vector<2x16xf32>
    %406 = vector.extract_strided_slice %396 {offsets = [0, 3], sizes = [2, 1], strides = [1, 1]} : vector<2x10xf32> to vector<2x1xf32>
    %407 = vector.shape_cast %406 : vector<2x1xf32> to vector<2x1xf32>
    %408 = vector.broadcast %407 : vector<2x1xf32> to vector<2x16xf32>
    %409 = vector.extract_strided_slice %396 {offsets = [0, 4], sizes = [2, 1], strides = [1, 1]} : vector<2x10xf32> to vector<2x1xf32>
    %410 = vector.shape_cast %409 : vector<2x1xf32> to vector<2x1xf32>
    %411 = vector.broadcast %410 : vector<2x1xf32> to vector<2x16xf32>
    %412 = vector.extract_strided_slice %396 {offsets = [0, 5], sizes = [2, 1], strides = [1, 1]} : vector<2x10xf32> to vector<2x1xf32>
    %413 = vector.shape_cast %412 : vector<2x1xf32> to vector<2x1xf32>
    %414 = vector.broadcast %413 : vector<2x1xf32> to vector<2x16xf32>
    %415 = vector.extract_strided_slice %396 {offsets = [0, 6], sizes = [2, 1], strides = [1, 1]} : vector<2x10xf32> to vector<2x1xf32>
    %416 = vector.shape_cast %415 : vector<2x1xf32> to vector<2x1xf32>
    %417 = vector.broadcast %416 : vector<2x1xf32> to vector<2x16xf32>
    %418 = vector.extract_strided_slice %396 {offsets = [0, 7], sizes = [2, 1], strides = [1, 1]} : vector<2x10xf32> to vector<2x1xf32>
    %419 = vector.shape_cast %418 : vector<2x1xf32> to vector<2x1xf32>
    %420 = vector.broadcast %419 : vector<2x1xf32> to vector<2x16xf32>
    %421 = vector.extract_strided_slice %396 {offsets = [0, 8], sizes = [2, 1], strides = [1, 1]} : vector<2x10xf32> to vector<2x1xf32>
    %422 = vector.shape_cast %421 : vector<2x1xf32> to vector<2x1xf32>
    %423 = vector.broadcast %422 : vector<2x1xf32> to vector<2x16xf32>
    %424 = vector.extract_strided_slice %396 {offsets = [0, 9], sizes = [2, 1], strides = [1, 1]} : vector<2x10xf32> to vector<2x1xf32>
    %425 = vector.shape_cast %424 : vector<2x1xf32> to vector<2x1xf32>
    %426 = vector.broadcast %425 : vector<2x1xf32> to vector<2x16xf32>
    %427 = tpu.concatenate %399, %402, %405, %408, %411, %414, %417, %420, %423, %426 in 1 : vector<2x16xf32>, vector<2x16xf32>, vector<2x16xf32>, vector<2x16xf32>, vector<2x16xf32>, vector<2x16xf32>, vector<2x16xf32>, vector<2x16xf32>, vector<2x16xf32>, vector<2x16xf32> -> vector<2x160xf32>
    %428 = arith.mulf %359, %427 : vector<2x160xf32>
    %c0_79 = arith.constant 0 : index
    %c0_80 = arith.constant 0 : index
    %429 = vector.load %arg3[%c0_79, %c0_80] : memref<2x160xf32, #tpu.memory_space<vmem>>, vector<2x160xf32>
    tpu.vector_store %arg3[%c0_79, %c0_80], %428 {strides = array<i32>} : memref<2x160xf32, #tpu.memory_space<vmem>>, vector<2x160xf32>,
    return
  }
  func.func @transform_0(%arg0: i32) -> (i32, i32, i32) {
    %c0_i32 = arith.constant 0 : i32
    %c0_i32_0 = arith.constant 0 : i32
    %c0_i32_1 = arith.constant 0 : i32
    %c0_i32_2 = arith.constant 0 : i32
    return %c0_i32, %c0_i32_0, %c0_i32_1 : i32, i32, i32
  }
  func.func @transform_1(%arg0: i32) -> (i32, i32, i32) {
    %c0_i32 = arith.constant 0 : i32
    %c0_i32_0 = arith.constant 0 : i32
    %c0_i32_1 = arith.constant 0 : i32
    %c0_i32_2 = arith.constant 0 : i32
    return %c0_i32, %c0_i32_0, %c0_i32_1 : i32, i32, i32
  }
  func.func @transform_2(%arg0: i32) -> (i32, i32) {
    %c0_i32 = arith.constant 0 : i32
    %c0_i32_0 = arith.constant 0 : i32
    %c0_i32_1 = arith.constant 0 : i32
    return %c0_i32, %c0_i32_0 : i32, i32
  }
}

</mosaic_0001>

<llo_original>
// kernel: tpu_custom_call.1
$region0: #{tpu_custom_call.1}
  #allocation0 [shape = 'u32[]', space=smem, size = 0x4, offset = 0x4, fixed_abs, tag = 'smem constant byte address 0x4 - core index']
  #allocation1 [shape = 'u32[144,128]{1,0:T(1,128)}', space=vmem, size = 0x12000, scoped, tag = 'internal scratch']
  %s0 = inlined_call_operand.vmem [shape: f32[2,32,8], index: 0, kind: input, shape index: {}]
  %s1 = inlined_call_operand.hbm [shape: f32[8,32,160], index: 1, kind: input, shape index: {}]
  %s2 = inlined_call_operand.hbm [shape: f32[2,160], index: 2, kind: output, shape index: {}]
  %s3 = sld [smem:[#allocation0]]
  $region22: #{tpu_custom_call.1} parent=0
    _
  %s5 = ssub.s32 1, %s3
  %s6 = scalar_select 0, %s5, %s3
  $region1: #{tpu_custom_call.1} parent=0
    #allocation2 [shape = 'u8[262144]{0}', space=vmem, size = 0x40000, scoped, tag = 'input window, operand 1, single buffered']
    #allocation3 [shape = 's32[1]{0}', space=sflag, size = 0x4, scoped, tag = 'scoped memory for tpu_custom_call.1']
    #allocation4 [shape = 's32[1]{0}', space=sflag, size = 0x4, scoped, tag = 'scoped memory for tpu_custom_call.1']
    #allocation5 [shape = 'u8[2048]{0}', space=vmem, size = 0x800, scoped, tag = 'output window, operand 0, single buffered']
    %7 = vsyncpa [#allocation3], 0
    %8 = vsyncpa [#allocation4], 0
    // Predicated region
    $region2: #{tpu_custom_call.1} parent=1 // pred_check
      _
    $region3: #{tpu_custom_call.1} parent=1 // pred_check_branch
      %10 = sbr.rel (0) target = $region5
    $region4: #{tpu_custom_call.1} parent=1 // pred_region
      _
    $region5: #{tpu_custom_call.1} parent=1 // pred_fallthru
      _
    // Predicated region
    $region6: #{tpu_custom_call.1} parent=1 // pred_check
      _
    $region7: #{tpu_custom_call.1} parent=1 // pred_check_branch
      %12 = sbr.rel (0) target = $region9
    $region8: #{tpu_custom_call.1} parent=1 // pred_region
      %s14 = ssub.s32 8192, 8192
      %15 = vsyncadd [#allocation3], %s14
      %s16 = sshll.u32 [#allocation2], 4
      %s17 = int_to_ptr.vmem [resolvable:$true] %s16
      %22 = dma.hbm_to_vmem [thread:$0]  %s1, 8192, %s17, [#allocation3], 256, 256, 16
    $region9: #{tpu_custom_call.1} parent=1 // pred_fallthru
      _
    // Predicated region
    $region10: #{tpu_custom_call.1} parent=1 // pred_check
      _
    $region11: #{tpu_custom_call.1} parent=1 // pred_check_branch
      %24 = sbr.rel (0) target = $region13
    $region12: #{tpu_custom_call.1} parent=1 // pred_region
      %25 = dma.done [#allocation3], 8192
    $region13: #{tpu_custom_call.1} parent=1 // pred_fallthru
      _
    %v26 = vld [vmem:[%s0] sm:$0xff]
    %v27 = vld [vmem:[%s0 + $0x8] sm:$0xff]
    %v28 = vld [vmem:[%s0 + $0x10] sm:$0xff]
    %v29 = vld [vmem:[%s0 + $0x18] sm:$0xff]
    %v30 = vld [vmem:[%s0 + $0x20] sm:$0xff]
    %v31 = vld [vmem:[%s0 + $0x28] sm:$0xff]
    %v32 = vld [vmem:[%s0 + $0x30] sm:$0xff]
    %v33 = vld [vmem:[%s0 + $0x38] sm:$0xff]
    %v34 = vld [vmem:[#allocation2] sm:$0xff]
    %v35 = vld [vmem:[#allocation2 + $0x8] sm:$0xff]
    %v36 = vld [vmem:[#allocation2 + $0x10] sm:$0xff]
    %v37 = vld [vmem:[#allocation2 + $0x18] sm:$0xff]
    %v38 = vld [vmem:[#allocation2 + $0x20] sm:$0xff]
    %v39 = vld [vmem:[#allocation2 + $0x28] sm:$0xff]
    %v40 = vld [vmem:[#allocation2 + $0x30] sm:$0xff]
    %v41 = vld [vmem:[#allocation2 + $0x38] sm:$0xff]
    %43 = vset.pattern.permute.xlu0 0
    %44 = vperm.xlu0 %43, %v26
    %v45 = vpop.permute.xlu0 %44
    %48 = vset.pattern.permute.xlu0 0
    %49 = vperm.xlu0 %48, %v27
    %v50 = vpop.permute.xlu0 %49
    %53 = vset.pattern.permute.xlu0 0
    %54 = vperm.xlu0 %53, %v28
    %v55 = vpop.permute.xlu0 %54
    %58 = vset.pattern.permute.xlu0 0
    %59 = vperm.xlu0 %58, %v29
    %v60 = vpop.permute.xlu0 %59
    %63 = vset.pattern.permute.xlu0 0
    %64 = vperm.xlu0 %63, %v30
    %v65 = vpop.permute.xlu0 %64
    %68 = vset.pattern.permute.xlu0 0
    %69 = vperm.xlu0 %68, %v31
    %v70 = vpop.permute.xlu0 %69
    %73 = vset.pattern.permute.xlu0 0
    %74 = vperm.xlu0 %73, %v32
    %v75 = vpop.permute.xlu0 %74
    %78 = vset.pattern.permute.xlu0 0
    %79 = vperm.xlu0 %78, %v33
    %v80 = vpop.permute.xlu0 %79
    %v82 = vmul.f32 %v45, %v34
    %v83 = vmul.f32 %v45, %v35
    %v84 = vmul.f32 %v50, %v36
    %v85 = vmul.f32 %v50, %v37
    %v86 = vmul.f32 %v55, %v38
    %v87 = vmul.f32 %v55, %v39
    %v88 = vmul.f32 %v60, %v40
    %v89 = vmul.f32 %v60, %v41
    %v90 = vmul.f32 %v65, %v34
    %v91 = vmul.f32 %v65, %v35
    %v92 = vmul.f32 %v70, %v36
    %v93 = vmul.f32 %v70, %v37
    %v94 = vmul.f32 %v75, %v38
    %v95 = vmul.f32 %v75, %v39
    %v96 = vmul.f32 %v80, %v40
    %v97 = vmul.f32 %v80, %v41
    %s98 = scalar_lea.vmem [#allocation2], 64
    %v99 = vld [vmem:[%s98] sm:$0xff]
    %v100 = vld [vmem:[%s98 + $0x8] sm:$0xff]
    %v101 = vld [vmem:[%s98 + $0x10] sm:$0xff]
    %v102 = vld [vmem:[%s98 + $0x18] sm:$0xff]
    %v103 = vld [vmem:[%s98 + $0x20] sm:$0xff]
    %v104 = vld [vmem:[%s98 + $0x28] sm:$0xff]
    %v105 = vld [vmem:[%s98 + $0x30] sm:$0xff]
    %v106 = vld [vmem:[%s98 + $0x38] sm:$0xff]
    %107 = vset.pattern.permute.xlu0 1
    %108 = vperm.xlu0 %107, %v26
    %v109 = vpop.permute.xlu0 %108
    %111 = vset.pattern.permute.xlu0 1
    %112 = vperm.xlu0 %111, %v27
    %v113 = vpop.permute.xlu0 %112
    %115 = vset.pattern.permute.xlu0 1
    %116 = vperm.xlu0 %115, %v28
    %v117 = vpop.permute.xlu0 %116
    %119 = vset.pattern.permute.xlu0 1
    %120 = vperm.xlu0 %119, %v29
    %v121 = vpop.permute.xlu0 %120
    %123 = vset.pattern.permute.xlu0 1
    %124 = vperm.xlu0 %123, %v30
    %v125 = vpop.permute.xlu0 %124
    %127 = vset.pattern.permute.xlu0 1
    %128 = vperm.xlu0 %127, %v31
    %v129 = vpop.permute.xlu0 %128
    %131 = vset.pattern.permute.xlu0 1
    %132 = vperm.xlu0 %131, %v32
    %v133 = vpop.permute.xlu0 %132
    %135 = vset.pattern.permute.xlu0 1
    %136 = vperm.xlu0 %135, %v33
    %v137 = vpop.permute.xlu0 %136
    %v139 = vmul.f32 %v109, %v99
    %v140 = vmul.f32 %v109, %v100
    %v141 = vmul.f32 %v113, %v101
    %v142 = vmul.f32 %v113, %v102
    %v143 = vmul.f32 %v117, %v103
    %v144 = vmul.f32 %v117, %v104
    %v145 = vmul.f32 %v121, %v105
    %v146 = vmul.f32 %v121, %v106
    %v147 = vmul.f32 %v125, %v99
    %v148 = vmul.f32 %v125, %v100
    %v149 = vmul.f32 %v129, %v101
    %v150 = vmul.f32 %v129, %v102
    %v151 = vmul.f32 %v133, %v103
    %v152 = vmul.f32 %v133, %v104
    %v153 = vmul.f32 %v137, %v105
    %v154 = vmul.f32 %v137, %v106
    %v155 = vadd.f32 %v82, %v139
    %v156 = vadd.f32 %v83, %v140
    %v157 = vadd.f32 %v84, %v141
    %v158 = vadd.f32 %v85, %v142
    %v159 = vadd.f32 %v86, %v143
    %v160 = vadd.f32 %v87, %v144
    %v161 = vadd.f32 %v88, %v145
    %v162 = vadd.f32 %v89, %v146
    %v163 = vadd.f32 %v90, %v147
    %v164 = vadd.f32 %v91, %v148
    %v165 = vadd.f32 %v92, %v149
    %v166 = vadd.f32 %v93, %v150
    %v167 = vadd.f32 %v94, %v151
    %v168 = vadd.f32 %v95, %v152
    %v169 = vadd.f32 %v96, %v153
    %v170 = vadd.f32 %v97, %v154
    %s171 = scalar_lea.vmem [#allocation2], 128
    %v172 = vld [vmem:[%s171] sm:$0xff]
    %v173 = vld [vmem:[%s171 + $0x8] sm:$0xff]
    %v174 = vld [vmem:[%s171 + $0x10] sm:$0xff]
    %v175 = vld [vmem:[%s171 + $0x18] sm:$0xff]
    %v176 = vld [vmem:[%s171 + $0x20] sm:$0xff]
    %v177 = vld [vmem:[%s171 + $0x28] sm:$0xff]
    %v178 = vld [vmem:[%s171 + $0x30] sm:$0xff]
    %v179 = vld [vmem:[%s171 + $0x38] sm:$0xff]
    %180 = vset.pattern.permute.xlu0 2
    %181 = vperm.xlu0 %180, %v26
    %v182 = vpop.permute.xlu0 %181
    %184 = vset.pattern.permute.xlu0 2
    %185 = vperm.xlu0 %184, %v27
    %v186 = vpop.permute.xlu0 %185
    %188 = vset.pattern.permute.xlu0 2
    %189 = vperm.xlu0 %188, %v28
    %v190 = vpop.permute.xlu0 %189
    %192 = vset.pattern.permute.xlu0 2
    %193 = vperm.xlu0 %192, %v29
    %v194 = vpop.permute.xlu0 %193
    %196 = vset.pattern.permute.xlu0 2
    %197 = vperm.xlu0 %196, %v30
    %v198 = vpop.permute.xlu0 %197
    %200 = vset.pattern.permute.xlu0 2
    %201 = vperm.xlu0 %200, %v31
    %v202 = vpop.permute.xlu0 %201
    %204 = vset.pattern.permute.xlu0 2
    %205 = vperm.xlu0 %204, %v32
    %v206 = vpop.permute.xlu0 %205
    %208 = vset.pattern.permute.xlu0 2
    %209 = vperm.xlu0 %208, %v33
    %v210 = vpop.permute.xlu0 %209
    %v212 = vmul.f32 %v182, %v172
    %v213 = vmul.f32 %v182, %v173
    %v214 = vmul.f32 %v186, %v174
    %v215 = vmul.f32 %v186, %v175
    %v216 = vmul.f32 %v190, %v176
    %v217 = vmul.f32 %v190, %v177
    %v218 = vmul.f32 %v194, %v178
    %v219 = vmul.f32 %v194, %v179
    %v220 = vmul.f32 %v198, %v172
    %v221 = vmul.f32 %v198, %v173
    %v222 = vmul.f32 %v202, %v174
    %v223 = vmul.f32 %v202, %v175
    %v224 = vmul.f32 %v206, %v176
    %v225 = vmul.f32 %v206, %v177
    %v226 = vmul.f32 %v210, %v178
    %v227 = vmul.f32 %v210, %v179
    %v228 = vadd.f32 %v155, %v212
    %v229 = vadd.f32 %v156, %v213
    %v230 = vadd.f32 %v157, %v214
    %v231 = vadd.f32 %v158, %v215
    %v232 = vadd.f32 %v159, %v216
    %v233 = vadd.f32 %v160, %v217
    %v234 = vadd.f32 %v161, %v218
    %v235 = vadd.f32 %v162, %v219
    %v236 = vadd.f32 %v163, %v220
    %v237 = vadd.f32 %v164, %v221
    %v238 = vadd.f32 %v165, %v222
    %v239 = vadd.f32 %v166, %v223
    %v240 = vadd.f32 %v167, %v224
    %v241 = vadd.f32 %v168, %v225
    %v242 = vadd.f32 %v169, %v226
    %v243 = vadd.f32 %v170, %v227
    %s244 = scalar_lea.vmem [#allocation2], 192
    %v245 = vld [vmem:[%s244] sm:$0xff]
    %v246 = vld [vmem:[%s244 + $0x8] sm:$0xff]
    %v247 = vld [vmem:[%s244 + $0x10] sm:$0xff]
    %v248 = vld [vmem:[%s244 + $0x18] sm:$0xff]
    %v249 = vld [vmem:[%s244 + $0x20] sm:$0xff]
    %v250 = vld [vmem:[%s244 + $0x28] sm:$0xff]
    %v251 = vld [vmem:[%s244 + $0x30] sm:$0xff]
    %v252 = vld [vmem:[%s244 + $0x38] sm:$0xff]
    %253 = vset.pattern.permute.xlu0 3
    %254 = vperm.xlu0 %253, %v26
    %v255 = vpop.permute.xlu0 %254
    %257 = vset.pattern.permute.xlu0 3
    %258 = vperm.xlu0 %257, %v27
    %v259 = vpop.permute.xlu0 %258
    %261 = vset.pattern.permute.xlu0 3
    %262 = vperm.xlu0 %261, %v28
    %v263 = vpop.permute.xlu0 %262
    %265 = vset.pattern.permute.xlu0 3
    %266 = vperm.xlu0 %265, %v29
    %v267 = vpop.permute.xlu0 %266
    %269 = vset.pattern.permute.xlu0 3
    %270 = vperm.xlu0 %269, %v30
    %v271 = vpop.permute.xlu0 %270
    %273 = vset.pattern.permute.xlu0 3
    %274 = vperm.xlu0 %273, %v31
    %v275 = vpop.permute.xlu0 %274
    %277 = vset.pattern.permute.xlu0 3
    %278 = vperm.xlu0 %277, %v32
    %v279 = vpop.permute.xlu0 %278
    %281 = vset.pattern.permute.xlu0 3
    %282 = vperm.xlu0 %281, %v33
    %v283 = vpop.permute.xlu0 %282
    %v285 = vmul.f32 %v255, %v245
    %v286 = vmul.f32 %v255, %v246
    %v287 = vmul.f32 %v259, %v247
    %v288 = vmul.f32 %v259, %v248
    %v289 = vmul.f32 %v263, %v249
    %v290 = vmul.f32 %v263, %v250
    %v291 = vmul.f32 %v267, %v251
    %v292 = vmul.f32 %v267, %v252
    %v293 = vmul.f32 %v271, %v245
    %v294 = vmul.f32 %v271, %v246
    %v295 = vmul.f32 %v275, %v247
    %v296 = vmul.f32 %v275, %v248
    %v297 = vmul.f32 %v279, %v249
    %v298 = vmul.f32 %v279, %v250
    %v299 = vmul.f32 %v283, %v251
    %v300 = vmul.f32 %v283, %v252
    %v301 = vadd.f32 %v228, %v285
    %v302 = vadd.f32 %v229, %v286
    %v303 = vadd.f32 %v230, %v287
    %v304 = vadd.f32 %v231, %v288
    %v305 = vadd.f32 %v232, %v289
    %v306 = vadd.f32 %v233, %v290
    %v307 = vadd.f32 %v234, %v291
    %v308 = vadd.f32 %v235, %v292
    %v309 = vadd.f32 %v236, %v293
    %v310 = vadd.f32 %v237, %v294
    %v311 = vadd.f32 %v238, %v295
    %v312 = vadd.f32 %v239, %v296
    %v313 = vadd.f32 %v240, %v297
    %v314 = vadd.f32 %v241, %v298
    %v315 = vadd.f32 %v242, %v299
    %v316 = vadd.f32 %v243, %v300
    %s317 = scalar_lea.vmem [#allocation2], 256
    %v318 = vld [vmem:[%s317] sm:$0xff]
    %v319 = vld [vmem:[%s317 + $0x8] sm:$0xff]
    %v320 = vld [vmem:[%s317 + $0x10] sm:$0xff]
    %v321 = vld [vmem:[%s317 + $0x18] sm:$0xff]
    %v322 = vld [vmem:[%s317 + $0x20] sm:$0xff]
    %v323 = vld [vmem:[%s317 + $0x28] sm:$0xff]
    %v324 = vld [vmem:[%s317 + $0x30] sm:$0xff]
    %v325 = vld [vmem:[%s317 + $0x38] sm:$0xff]
    %326 = vset.pattern.permute.xlu0 4
    %327 = vperm.xlu0 %326, %v26
    %v328 = vpop.permute.xlu0 %327
    %330 = vset.pattern.permute.xlu0 4
    %331 = vperm.xlu0 %330, %v27
    %v332 = vpop.permute.xlu0 %331
    %334 = vset.pattern.permute.xlu0 4
    %335 = vperm.xlu0 %334, %v28
    %v336 = vpop.permute.xlu0 %335
    %338 = vset.pattern.permute.xlu0 4
    %339 = vperm.xlu0 %338, %v29
    %v340 = vpop.permute.xlu0 %339
    %342 = vset.pattern.permute.xlu0 4
    %343 = vperm.xlu0 %342, %v30
    %v344 = vpop.permute.xlu0 %343
    %346 = vset.pattern.permute.xlu0 4
    %347 = vperm.xlu0 %346, %v31
    %v348 = vpop.permute.xlu0 %347
    %350 = vset.pattern.permute.xlu0 4
    %351 = vperm.xlu0 %350, %v32
    %v352 = vpop.permute.xlu0 %351
    %354 = vset.pattern.permute.xlu0 4
    %355 = vperm.xlu0 %354, %v33
    %v356 = vpop.permute.xlu0 %355
    %v358 = vmul.f32 %v328, %v318
    %v359 = vmul.f32 %v328, %v319
    %v360 = vmul.f32 %v332, %v320
    %v361 = vmul.f32 %v332, %v321
    %v362 = vmul.f32 %v336, %v322
    %v363 = vmul.f32 %v336, %v323
    %v364 = vmul.f32 %v340, %v324
    %v365 = vmul.f32 %v340, %v325
    %v366 = vmul.f32 %v344, %v318
    %v367 = vmul.f32 %v344, %v319
    %v368 = vmul.f32 %v348, %v320
    %v369 = vmul.f32 %v348, %v321
    %v370 = vmul.f32 %v352, %v322
    %v371 = vmul.f32 %v352, %v323
    %v372 = vmul.f32 %v356, %v324
    %v373 = vmul.f32 %v356, %v325
    %v374 = vadd.f32 %v301, %v358
    %v375 = vadd.f32 %v302, %v359
    %v376 = vadd.f32 %v303, %v360
    %v377 = vadd.f32 %v304, %v361
    %v378 = vadd.f32 %v305, %v362
    %v379 = vadd.f32 %v306, %v363
    %v380 = vadd.f32 %v307, %v364
    %v381 = vadd.f32 %v308, %v365
    %v382 = vadd.f32 %v309, %v366
    %v383 = vadd.f32 %v310, %v367
    %v384 = vadd.f32 %v311, %v368
    %v385 = vadd.f32 %v312, %v369
    %v386 = vadd.f32 %v313, %v370
    %v387 = vadd.f32 %v314, %v371
    %v388 = vadd.f32 %v315, %v372
    %v389 = vadd.f32 %v316, %v373
    %s390 = scalar_lea.vmem [#allocation2], 320
    %v391 = vld [vmem:[%s390] sm:$0xff]
    %v392 = vld [vmem:[%s390 + $0x8] sm:$0xff]
    %v393 = vld [vmem:[%s390 + $0x10] sm:$0xff]
    %v394 = vld [vmem:[%s390 + $0x18] sm:$0xff]
    %v395 = vld [vmem:[%s390 + $0x20] sm:$0xff]
    %v396 = vld [vmem:[%s390 + $0x28] sm:$0xff]
    %v397 = vld [vmem:[%s390 + $0x30] sm:$0xff]
    %v398 = vld [vmem:[%s390 + $0x38] sm:$0xff]
    %399 = vset.pattern.permute.xlu0 5
    %400 = vperm.xlu0 %399, %v26
    %v401 = vpop.permute.xlu0 %400
    %403 = vset.pattern.permute.xlu0 5
    %404 = vperm.xlu0 %403, %v27
    %v405 = vpop.permute.xlu0 %404
    %407 = vset.pattern.permute.xlu0 5
    %408 = vperm.xlu0 %407, %v28
    %v409 = vpop.permute.xlu0 %408
    %411 = vset.pattern.permute.xlu0 5
    %412 = vperm.xlu0 %411, %v29
    %v413 = vpop.permute.xlu0 %412
    %415 = vset.pattern.permute.xlu0 5
    %416 = vperm.xlu0 %415, %v30
    %v417 = vpop.permute.xlu0 %416
    %419 = vset.pattern.permute.xlu0 5
    %420 = vperm.xlu0 %419, %v31
    %v421 = vpop.permute.xlu0 %420
    %423 = vset.pattern.permute.xlu0 5
    %424 = vperm.xlu0 %423, %v32
    %v425 = vpop.permute.xlu0 %424
    %427 = vset.pattern.permute.xlu0 5
    %428 = vperm.xlu0 %427, %v33
    %v429 = vpop.permute.xlu0 %428
    %v431 = vmul.f32 %v401, %v391
    %v432 = vmul.f32 %v401, %v392
    %v433 = vmul.f32 %v405, %v393
    %v434 = vmul.f32 %v405, %v394
    %v435 = vmul.f32 %v409, %v395
    %v436 = vmul.f32 %v409, %v396
    %v437 = vmul.f32 %v413, %v397
    %v438 = vmul.f32 %v413, %v398
    %v439 = vmul.f32 %v417, %v391
    %v440 = vmul.f32 %v417, %v392
    %v441 = vmul.f32 %v421, %v393
    %v442 = vmul.f32 %v421, %v394
    %v443 = vmul.f32 %v425, %v395
    %v444 = vmul.f32 %v425, %v396
    %v445 = vmul.f32 %v429, %v397
    %v446 = vmul.f32 %v429, %v398
    %v447 = vadd.f32 %v374, %v431
    %v448 = vadd.f32 %v375, %v432
    %v449 = vadd.f32 %v376, %v433
    %v450 = vadd.f32 %v377, %v434
    %v451 = vadd.f32 %v378, %v435
    %v452 = vadd.f32 %v379, %v436
    %v453 = vadd.f32 %v380, %v437
    %v454 = vadd.f32 %v381, %v438
    %v455 = vadd.f32 %v382, %v439
    %v456 = vadd.f32 %v383, %v440
    %v457 = vadd.f32 %v384, %v441
    %v458 = vadd.f32 %v385, %v442
    %v459 = vadd.f32 %v386, %v443
    %v460 = vadd.f32 %v387, %v444
    %v461 = vadd.f32 %v388, %v445
    %v462 = vadd.f32 %v389, %v446
    %s463 = scalar_lea.vmem [#allocation2], 384
    %v464 = vld [vmem:[%s463] sm:$0xff]
    %v465 = vld [vmem:[%s463 + $0x8] sm:$0xff]
    %v466 = vld [vmem:[%s463 + $0x10] sm:$0xff]
    %v467 = vld [vmem:[%s463 + $0x18] sm:$0xff]
    %v468 = vld [vmem:[%s463 + $0x20] sm:$0xff]
    %v469 = vld [vmem:[%s463 + $0x28] sm:$0xff]
    %v470 = vld [vmem:[%s463 + $0x30] sm:$0xff]
    %v471 = vld [vmem:[%s463 + $0x38] sm:$0xff]
    %472 = vset.pattern.permute.xlu0 6
    %473 = vperm.xlu0 %472, %v26
    %v474 = vpop.permute.xlu0 %473
    %476 = vset.pattern.permute.xlu0 6
    %477 = vperm.xlu0 %476, %v27
    %v478 = vpop.permute.xlu0 %477
    %480 = vset.pattern.permute.xlu0 6
    %481 = vperm.xlu0 %480, %v28
    %v482 = vpop.permute.xlu0 %481
    %484 = vset.pattern.permute.xlu0 6
    %485 = vperm.xlu0 %484, %v29
    %v486 = vpop.permute.xlu0 %485
    %488 = vset.pattern.permute.xlu0 6
    %489 = vperm.xlu0 %488, %v30
    %v490 = vpop.permute.xlu0 %489
    %492 = vset.pattern.permute.xlu0 6
    %493 = vperm.xlu0 %492, %v31
    %v494 = vpop.permute.xlu0 %493
    %496 = vset.pattern.permute.xlu0 6
    %497 = vperm.xlu0 %496, %v32
    %v498 = vpop.permute.xlu0 %497
    %500 = vset.pattern.permute.xlu0 6
    %501 = vperm.xlu0 %500, %v33
    %v502 = vpop.permute.xlu0 %501
    %v504 = vmul.f32 %v474, %v464
    %v505 = vmul.f32 %v474, %v465
    %v506 = vmul.f32 %v478, %v466
    %v507 = vmul.f32 %v478, %v467
    %v508 = vmul.f32 %v482, %v468
    %v509 = vmul.f32 %v482, %v469
    %v510 = vmul.f32 %v486, %v470
    %v511 = vmul.f32 %v486, %v471
    %v512 = vmul.f32 %v490, %v464
    %v513 = vmul.f32 %v490, %v465
    %v514 = vmul.f32 %v494, %v466
    %v515 = vmul.f32 %v494, %v467
    %v516 = vmul.f32 %v498, %v468
    %v517 = vmul.f32 %v498, %v469
    %v518 = vmul.f32 %v502, %v470
    %v519 = vmul.f32 %v502, %v471
    %v520 = vadd.f32 %v447, %v504
    %v521 = vadd.f32 %v448, %v505
    %v522 = vadd.f32 %v449, %v506
    %v523 = vadd.f32 %v450, %v507
    %v524 = vadd.f32 %v451, %v508
    %v525 = vadd.f32 %v452, %v509
    %v526 = vadd.f32 %v453, %v510
    %v527 = vadd.f32 %v454, %v511
    %v528 = vadd.f32 %v455, %v512
    %v529 = vadd.f32 %v456, %v513
    %v530 = vadd.f32 %v457, %v514
    %v531 = vadd.f32 %v458, %v515
    %v532 = vadd.f32 %v459, %v516
    %v533 = vadd.f32 %v460, %v517
    %v534 = vadd.f32 %v461, %v518
    %v535 = vadd.f32 %v462, %v519
    %s536 = scalar_lea.vmem [#allocation2], 448
    %v537 = vld [vmem:[%s536] sm:$0xff]
    %v538 = vld [vmem:[%s536 + $0x8] sm:$0xff]
    %v539 = vld [vmem:[%s536 + $0x10] sm:$0xff]
    %v540 = vld [vmem:[%s536 + $0x18] sm:$0xff]
    %v541 = vld [vmem:[%s536 + $0x20] sm:$0xff]
    %v542 = vld [vmem:[%s536 + $0x28] sm:$0xff]
    %v543 = vld [vmem:[%s536 + $0x30] sm:$0xff]
    %v544 = vld [vmem:[%s536 + $0x38] sm:$0xff]
    %545 = vset.pattern.permute.xlu0 7
    %546 = vperm.xlu0 %545, %v26
    %v547 = vpop.permute.xlu0 %546
    %549 = vset.pattern.permute.xlu0 7
    %550 = vperm.xlu0 %549, %v27
    %v551 = vpop.permute.xlu0 %550
    %553 = vset.pattern.permute.xlu0 7
    %554 = vperm.xlu0 %553, %v28
    %v555 = vpop.permute.xlu0 %554
    %557 = vset.pattern.permute.xlu0 7
    %558 = vperm.xlu0 %557, %v29
    %v559 = vpop.permute.xlu0 %558
    %561 = vset.pattern.permute.xlu0 7
    %562 = vperm.xlu0 %561, %v30
    %v563 = vpop.permute.xlu0 %562
    %565 = vset.pattern.permute.xlu0 7
    %566 = vperm.xlu0 %565, %v31
    %v567 = vpop.permute.xlu0 %566
    %569 = vset.pattern.permute.xlu0 7
    %570 = vperm.xlu0 %569, %v32
    %v571 = vpop.permute.xlu0 %570
    %573 = vset.pattern.permute.xlu0 7
    %574 = vperm.xlu0 %573, %v33
    %v575 = vpop.permute.xlu0 %574
    %v577 = vmul.f32 %v547, %v537
    %v578 = vmul.f32 %v547, %v538
    %v579 = vmul.f32 %v551, %v539
    %v580 = vmul.f32 %v551, %v540
    %v581 = vmul.f32 %v555, %v541
    %v582 = vmul.f32 %v555, %v542
    %v583 = vmul.f32 %v559, %v543
    %v584 = vmul.f32 %v559, %v544
    %v585 = vmul.f32 %v563, %v537
    %v586 = vmul.f32 %v563, %v538
    %v587 = vmul.f32 %v567, %v539
    %v588 = vmul.f32 %v567, %v540
    %v589 = vmul.f32 %v571, %v541
    %v590 = vmul.f32 %v571, %v542
    %v591 = vmul.f32 %v575, %v543
    %v592 = vmul.f32 %v575, %v544
    %v593 = vadd.f32 %v520, %v577
    %v594 = vadd.f32 %v521, %v578
    %v595 = vadd.f32 %v522, %v579
    %v596 = vadd.f32 %v523, %v580
    %v597 = vadd.f32 %v524, %v581
    %v598 = vadd.f32 %v525, %v582
    %v599 = vadd.f32 %v526, %v583
    %v600 = vadd.f32 %v527, %v584
    %v601 = vadd.f32 %v528, %v585
    %v602 = vadd.f32 %v529, %v586
    %v603 = vadd.f32 %v530, %v587
    %v604 = vadd.f32 %v531, %v588
    %v605 = vadd.f32 %v532, %v589
    %v606 = vadd.f32 %v533, %v590
    %v607 = vadd.f32 %v534, %v591
    %v608 = vadd.f32 %v535, %v592
    %v609 = vadd.f32 %v593, %v595
    %v610 = vadd.f32 %v609, %v597
    %v611 = vadd.f32 %v610, %v599
    %v612 = vrot.slane %v611, 4
    %v613 = vadd.f32 %v611, %v612
    %v614 = vrot.slane %v613, 2
    %v615 = vadd.f32 %v613, %v614
    %v616 = vrot.slane %v615, 1
    %v617 = vadd.f32 %v615, %v616
    %vm618 = vcmask 261120
    %v619 = vsel %vm618, %v594, 0.0
    %v620 = vsel %vm618, %v596, 0.0
    %v621 = vadd.f32 %v619, %v620
    %v622 = vsel %vm618, %v598, 0.0
    %v623 = vadd.f32 %v621, %v622
    %v624 = vsel %vm618, %v600, 0.0
    %v625 = vadd.f32 %v623, %v624
    %v626 = vrot.slane %v625, 4
    %v627 = vadd.f32 %v625, %v626
    %v628 = vrot.slane %v627, 2
    %v629 = vadd.f32 %v627, %v628
    %v630 = vrot.slane %v629, 1
    %v631 = vadd.f32 %v629, %v630
    %v632 = vadd.f32 %v601, %v603
    %v633 = vadd.f32 %v632, %v605
    %v634 = vadd.f32 %v633, %v607
    %v635 = vrot.slane %v634, 4
    %v636 = vadd.f32 %v634, %v635
    %v637 = vrot.slane %v636, 2
    %v638 = vadd.f32 %v636, %v637
    %v639 = vrot.slane %v638, 1
    %v640 = vadd.f32 %v638, %v639
    %v641 = vsel %vm618, %v602, 0.0
    %v642 = vsel %vm618, %v604, 0.0
    %v643 = vadd.f32 %v641, %v642
    %v644 = vsel %vm618, %v606, 0.0
    %v645 = vadd.f32 %v643, %v644
    %v646 = vsel %vm618, %v608, 0.0
    %v647 = vadd.f32 %v645, %v646
    %v648 = vrot.slane %v647, 4
    %v649 = vadd.f32 %v647, %v648
    %v650 = vrot.slane %v649, 2
    %v651 = vadd.f32 %v649, %v650
    %v652 = vrot.slane %v651, 1
    %v653 = vadd.f32 %v651, %v652
    %v654 = vmul.f32 %v617, 0.03125
    %v655 = vmul.f32 %v631, 0.03125
    %v656 = vmul.f32 %v640, 0.03125
    %v657 = vmul.f32 %v653, 0.03125
    %v658 = vmul.f32 %v654, %v654
    %v659 = vmul.f32 %v655, %v655
    %v660 = vmul.f32 %v656, %v656
    %v661 = vmul.f32 %v657, %v657
    %vm664 = vcmask 1041409
    %v665 = vsel %vm664, %v660, %v658
    %vm667 = vcmask 123904
    %v668 = vsel %vm667, %v665, 0.0
    %669 = vadd.xlane.f32.xlu0 %v668
    %v670 = vpop.xlane.xlu0 %669
    %671 = vrot.lane.b32.xlu0 %v665, 112
    %v672 = vpop.permute.xlu0 %671
    %v674 = vsel %vm667, %v672, 0.0
    %675 = vadd.xlane.f32.xlu0 %v674
    %v676 = vpop.xlane.xlu0 %675
    %677 = vrot.lane.b32.xlu0 %v665, 96
    %v678 = vpop.permute.xlu0 %677
    %v680 = vsel %vm667, %v678, 0.0
    %681 = vadd.xlane.f32.xlu0 %v680
    %v682 = vpop.xlane.xlu0 %681
    %683 = vrot.lane.b32.xlu0 %v665, 80
    %v684 = vpop.permute.xlu0 %683
    %v686 = vsel %vm667, %v684, 0.0
    %687 = vadd.xlane.f32.xlu0 %v686
    %v688 = vpop.xlane.xlu0 %687
    %689 = vrot.lane.b32.xlu0 %v665, 64
    %v690 = vpop.permute.xlu0 %689
    %v692 = vsel %vm667, %v690, 0.0
    %693 = vadd.xlane.f32.xlu0 %v692
    %v694 = vpop.xlane.xlu0 %693
    %695 = vrot.lane.b32.xlu0 %v665, 48
    %v696 = vpop.permute.xlu0 %695
    %v698 = vsel %vm667, %v696, 0.0
    %699 = vadd.xlane.f32.xlu0 %v698
    %v700 = vpop.xlane.xlu0 %699
    %701 = vrot.lane.b32.xlu0 %v665, 32
    %v702 = vpop.permute.xlu0 %701
    %v704 = vsel %vm667, %v702, 0.0
    %705 = vadd.xlane.f32.xlu0 %v704
    %v706 = vpop.xlane.xlu0 %705
    %707 = vrot.lane.b32.xlu0 %v665, 16
    %v708 = vpop.permute.xlu0 %707
    %v710 = vsel %vm667, %v708, 0.0
    %711 = vadd.xlane.f32.xlu0 %v710
    %v712 = vpop.xlane.xlu0 %711
    %v715 = vsel %vm664, %v661, %v659
    %v717 = vsel %vm667, %v715, 0.0
    %718 = vadd.xlane.f32.xlu0 %v717
    %v719 = vpop.xlane.xlu0 %718
    %720 = vrot.lane.b32.xlu0 %v715, 112
    %v721 = vpop.permute.xlu0 %720
    %v723 = vsel %vm667, %v721, 0.0
    %724 = vadd.xlane.f32.xlu0 %v723
    %v725 = vpop.xlane.xlu0 %724
    %vm726 = vcmask 7168
    %v727 = vsel %vm726, %v670, %v676
    %vm728 = vcmask 15360
    %v729 = vsel %vm728, %v727, %v682
    %vm730 = vcmask 23552
    %v731 = vsel %vm730, %v729, %v688
    %vm732 = vcmask 31744
    %v733 = vsel %vm732, %v731, %v694
    %vm734 = vcmask 39936
    %v735 = vsel %vm734, %v733, %v700
    %vm736 = vcmask 48128
    %v737 = vsel %vm736, %v735, %v706
    %vm738 = vcmask 56320
    %v739 = vsel %vm738, %v737, %v712
    %vm740 = vcmask 64512
    %v741 = vsel %vm740, %v739, %v719
    %vm742 = vcmask 72704
    %v743 = vsel %vm742, %v741, %v725
    %v744 = vadd.f32 %v743, 1.0
    %v745 = vrcp.pop %v744
    %v746 = vmul.f32 %v743, %v745
    %v747 = vrsqrt.pop %v743
    %v748 = vmul.f32 %v743, %v747
    %vm749 = vcmp.eq.f32.partialorder %v743, inf
    %v750 = vsel %vm749, %v743, %v748
    %vm751 = vcmp.eq.f32.partialorder %v743, 0.0
    %v752 = vand.u32 %v743, 2147483648
    %v753 = vsel %vm751, %v752, %v750
    %v754 = vrcp.pop %v753
    %v755 = vmul.f32 %v746, %v754
    %757 = vset.pattern.permute.xlu0 0
    %758 = vperm.xlu0 %757, %v755
    %v759 = vpop.permute.xlu0 %758
    %761 = vset.pattern.permute.xlu0 1
    %762 = vperm.xlu0 %761, %v755
    %v763 = vpop.permute.xlu0 %762
    %765 = vset.pattern.permute.xlu0 2
    %766 = vperm.xlu0 %765, %v755
    %v767 = vpop.permute.xlu0 %766
    %769 = vset.pattern.permute.xlu0 3
    %770 = vperm.xlu0 %769, %v755
    %v771 = vpop.permute.xlu0 %770
    %773 = vset.pattern.permute.xlu0 4
    %774 = vperm.xlu0 %773, %v755
    %v775 = vpop.permute.xlu0 %774
    %777 = vset.pattern.permute.xlu0 5
    %778 = vperm.xlu0 %777, %v755
    %v779 = vpop.permute.xlu0 %778
    %781 = vset.pattern.permute.xlu0 6
    %782 = vperm.xlu0 %781, %v755
    %v783 = vpop.permute.xlu0 %782
    %785 = vset.pattern.permute.xlu0 7
    %786 = vperm.xlu0 %785, %v755
    %v787 = vpop.permute.xlu0 %786
    %789 = vset.pattern.permute.xlu0 8
    %790 = vperm.xlu0 %789, %v755
    %v791 = vpop.permute.xlu0 %790
    %793 = vset.pattern.permute.xlu0 9
    %794 = vperm.xlu0 %793, %v755
    %v795 = vpop.permute.xlu0 %794
    %vm797 = vcmask 130048
    %v798 = vsel %vm797, %v759, %v763
    %v799 = vsel %vm618, %v798, %v767
    %vm800 = vcmask 392192
    %v801 = vsel %vm800, %v799, %v771
    %vm802 = vcmask 523264
    %v803 = vsel %vm802, %v801, %v775
    %vm804 = vcmask 654336
    %v805 = vsel %vm804, %v803, %v779
    %vm806 = vcmask 785408
    %v807 = vsel %vm806, %v805, %v783
    %vm808 = vcmask 916480
    %v809 = vsel %vm808, %v807, %v787
    %v810 = vsel %vm797, %v791, %v795
    %v813 = vrot.slane %v809, 1
    %v814 = vrot.slane %v810, 1
    %v819 = vmul.f32 %v654, %v809
    %v820 = vmul.f32 %v655, %v810
    %v821 = vmul.f32 %v656, %v813
    %v822 = vmul.f32 %v657, %v814
    %v823 = vlaneseq
    %v824 = vshrl.u32 %v823, 7
    %v825 = vsub.s32 0, %v824
    %v826 = vrot.slane %v819, %v825
    %v827 = vlaneseq
    %v828 = vshrl.u32 %v827, 7
    %v829 = vsub.s32 0, %v828
    %v830 = vrot.slane %v820, %v829
    %v831 = vlaneseq
    %v832 = vshrl.u32 %v831, 7
    %v833 = vsub.s32 0, %v832
    %v834 = vrot.slane %v821, %v833
    %v835 = vlaneseq
    %v836 = vshrl.u32 %v835, 7
    %v837 = vsub.s32 0, %v836
    %v838 = vrot.slane %v822, %v837
    %v839 = vmul.f32 %v593, %v826
    %v840 = vmul.f32 %v594, %v830
    %v841 = vmul.f32 %v595, %v826
    %v842 = vmul.f32 %v596, %v830
    %v843 = vmul.f32 %v597, %v826
    %v844 = vmul.f32 %v598, %v830
    %v845 = vmul.f32 %v599, %v826
    %v846 = vmul.f32 %v600, %v830
    %v847 = vmul.f32 %v601, %v834
    %v848 = vmul.f32 %v602, %v838
    %v849 = vmul.f32 %v603, %v834
    %v850 = vmul.f32 %v604, %v838
    %v851 = vmul.f32 %v605, %v834
    %v852 = vmul.f32 %v606, %v838
    %v853 = vmul.f32 %v607, %v834
    %v854 = vmul.f32 %v608, %v838
    %v855 = vsel %vm797, %v839, 0.0
    %856 = vadd.xlane.f32.xlu0 %v855
    %v857 = vpop.xlane.xlu0 %856
    %v858 = vsel %vm797, %v841, 0.0
    %859 = vadd.xlane.f32.xlu0 %v858
    %v860 = vpop.xlane.xlu0 %859
    %v861 = vsel %vm797, %v843, 0.0
    %862 = vadd.xlane.f32.xlu0 %v861
    %v863 = vpop.xlane.xlu0 %862
    %v864 = vsel %vm797, %v845, 0.0
    %865 = vadd.xlane.f32.xlu0 %v864
    %v866 = vpop.xlane.xlu0 %865
    %v867 = vsel %vm797, %v847, 0.0
    %868 = vadd.xlane.f32.xlu0 %v867
    %v869 = vpop.xlane.xlu0 %868
    %v870 = vsel %vm797, %v849, 0.0
    %871 = vadd.xlane.f32.xlu0 %v870
    %v872 = vpop.xlane.xlu0 %871
    %v873 = vsel %vm797, %v851, 0.0
    %874 = vadd.xlane.f32.xlu0 %v873
    %v875 = vpop.xlane.xlu0 %874
    %v876 = vsel %vm797, %v853, 0.0
    %877 = vadd.xlane.f32.xlu0 %v876
    %v878 = vpop.xlane.xlu0 %877
    %887 = vrot.lane.b32.xlu0 %v839, 112
    %v888 = vpop.permute.xlu0 %887
    %889 = vrot.lane.b32.xlu0 %v841, 112
    %v890 = vpop.permute.xlu0 %889
    %891 = vrot.lane.b32.xlu0 %v843, 112
    %v892 = vpop.permute.xlu0 %891
    %893 = vrot.lane.b32.xlu0 %v845, 112
    %v894 = vpop.permute.xlu0 %893
    %895 = vrot.lane.b32.xlu0 %v847, 112
    %v896 = vpop.permute.xlu0 %895
    %897 = vrot.lane.b32.xlu0 %v849, 112
    %v898 = vpop.permute.xlu0 %897
    %899 = vrot.lane.b32.xlu0 %v851, 112
    %v900 = vpop.permute.xlu0 %899
    %901 = vrot.lane.b32.xlu0 %v853, 112
    %v902 = vpop.permute.xlu0 %901
    %v911 = vsel %vm797, %v888, 0.0
    %912 = vadd.xlane.f32.xlu0 %v911
    %v913 = vpop.xlane.xlu0 %912
    %v914 = vsel %vm797, %v890, 0.0
    %915 = vadd.xlane.f32.xlu0 %v914
    %v916 = vpop.xlane.xlu0 %915
    %v917 = vsel %vm797, %v892, 0.0
    %918 = vadd.xlane.f32.xlu0 %v917
    %v919 = vpop.xlane.xlu0 %918
    %v920 = vsel %vm797, %v894, 0.0
    %921 = vadd.xlane.f32.xlu0 %v920
    %v922 = vpop.xlane.xlu0 %921
    %v923 = vsel %vm797, %v896, 0.0
    %924 = vadd.xlane.f32.xlu0 %v923
    %v925 = vpop.xlane.xlu0 %924
    %v926 = vsel %vm797, %v898, 0.0
    %927 = vadd.xlane.f32.xlu0 %v926
    %v928 = vpop.xlane.xlu0 %927
    %v929 = vsel %vm797, %v900, 0.0
    %930 = vadd.xlane.f32.xlu0 %v929
    %v931 = vpop.xlane.xlu0 %930
    %v932 = vsel %vm797, %v902, 0.0
    %933 = vadd.xlane.f32.xlu0 %v932
    %v934 = vpop.xlane.xlu0 %933
    %935 = vrot.lane.b32.xlu0 %v839, 96
    %v936 = vpop.permute.xlu0 %935
    %937 = vrot.lane.b32.xlu0 %v841, 96
    %v938 = vpop.permute.xlu0 %937
    %939 = vrot.lane.b32.xlu0 %v843, 96
    %v940 = vpop.permute.xlu0 %939
    %941 = vrot.lane.b32.xlu0 %v845, 96
    %v942 = vpop.permute.xlu0 %941
    %943 = vrot.lane.b32.xlu0 %v847, 96
    %v944 = vpop.permute.xlu0 %943
    %945 = vrot.lane.b32.xlu0 %v849, 96
    %v946 = vpop.permute.xlu0 %945
    %947 = vrot.lane.b32.xlu0 %v851, 96
    %v948 = vpop.permute.xlu0 %947
    %949 = vrot.lane.b32.xlu0 %v853, 96
    %v950 = vpop.permute.xlu0 %949
    %v959 = vsel %vm797, %v936, 0.0
    %960 = vadd.xlane.f32.xlu0 %v959
    %v961 = vpop.xlane.xlu0 %960
    %v962 = vsel %vm797, %v938, 0.0
    %963 = vadd.xlane.f32.xlu0 %v962
    %v964 = vpop.xlane.xlu0 %963
    %v965 = vsel %vm797, %v940, 0.0
    %966 = vadd.xlane.f32.xlu0 %v965
    %v967 = vpop.xlane.xlu0 %966
    %v968 = vsel %vm797, %v942, 0.0
    %969 = vadd.xlane.f32.xlu0 %v968
    %v970 = vpop.xlane.xlu0 %969
    %v971 = vsel %vm797, %v944, 0.0
    %972 = vadd.xlane.f32.xlu0 %v971
    %v973 = vpop.xlane.xlu0 %972
    %v974 = vsel %vm797, %v946, 0.0
    %975 = vadd.xlane.f32.xlu0 %v974
    %v976 = vpop.xlane.xlu0 %975
    %v977 = vsel %vm797, %v948, 0.0
    %978 = vadd.xlane.f32.xlu0 %v977
    %v979 = vpop.xlane.xlu0 %978
    %v980 = vsel %vm797, %v950, 0.0
    %981 = vadd.xlane.f32.xlu0 %v980
    %v982 = vpop.xlane.xlu0 %981
    %983 = vrot.lane.b32.xlu0 %v839, 80
    %v984 = vpop.permute.xlu0 %983
    %985 = vrot.lane.b32.xlu0 %v841, 80
    %v986 = vpop.permute.xlu0 %985
    %987 = vrot.lane.b32.xlu0 %v843, 80
    %v988 = vpop.permute.xlu0 %987
    %989 = vrot.lane.b32.xlu0 %v845, 80
    %v990 = vpop.permute.xlu0 %989
    %991 = vrot.lane.b32.xlu0 %v847, 80
    %v992 = vpop.permute.xlu0 %991
    %993 = vrot.lane.b32.xlu0 %v849, 80
    %v994 = vpop.permute.xlu0 %993
    %995 = vrot.lane.b32.xlu0 %v851, 80
    %v996 = vpop.permute.xlu0 %995
    %997 = vrot.lane.b32.xlu0 %v853, 80
    %v998 = vpop.permute.xlu0 %997
    %v1007 = vsel %vm797, %v984, 0.0
    %1008 = vadd.xlane.f32.xlu0 %v1007
    %v1009 = vpop.xlane.xlu0 %1008
    %v1010 = vsel %vm797, %v986, 0.0
    %1011 = vadd.xlane.f32.xlu0 %v1010
    %v1012 = vpop.xlane.xlu0 %1011
    %v1013 = vsel %vm797, %v988, 0.0
    %1014 = vadd.xlane.f32.xlu0 %v1013
    %v1015 = vpop.xlane.xlu0 %1014
    %v1016 = vsel %vm797, %v990, 0.0
    %1017 = vadd.xlane.f32.xlu0 %v1016
    %v1018 = vpop.xlane.xlu0 %1017
    %v1019 = vsel %vm797, %v992, 0.0
    %1020 = vadd.xlane.f32.xlu0 %v1019
    %v1021 = vpop.xlane.xlu0 %1020
    %v1022 = vsel %vm797, %v994, 0.0
    %1023 = vadd.xlane.f32.xlu0 %v1022
    %v1024 = vpop.xlane.xlu0 %1023
    %v1025 = vsel %vm797, %v996, 0.0
    %1026 = vadd.xlane.f32.xlu0 %v1025
    %v1027 = vpop.xlane.xlu0 %1026
    %v1028 = vsel %vm797, %v998, 0.0
    %1029 = vadd.xlane.f32.xlu0 %v1028
    %v1030 = vpop.xlane.xlu0 %1029
    %1031 = vrot.lane.b32.xlu0 %v839, 64
    %v1032 = vpop.permute.xlu0 %1031
    %1033 = vrot.lane.b32.xlu0 %v841, 64
    %v1034 = vpop.permute.xlu0 %1033
    %1035 = vrot.lane.b32.xlu0 %v843, 64
    %v1036 = vpop.permute.xlu0 %1035
    %1037 = vrot.lane.b32.xlu0 %v845, 64
    %v1038 = vpop.permute.xlu0 %1037
    %1039 = vrot.lane.b32.xlu0 %v847, 64
    %v1040 = vpop.permute.xlu0 %1039
    %1041 = vrot.lane.b32.xlu0 %v849, 64
    %v1042 = vpop.permute.xlu0 %1041
    %1043 = vrot.lane.b32.xlu0 %v851, 64
    %v1044 = vpop.permute.xlu0 %1043
    %1045 = vrot.lane.b32.xlu0 %v853, 64
    %v1046 = vpop.permute.xlu0 %1045
    %v1055 = vsel %vm797, %v1032, 0.0
    %1056 = vadd.xlane.f32.xlu0 %v1055
    %v1057 = vpop.xlane.xlu0 %1056
    %v1058 = vsel %vm797, %v1034, 0.0
    %1059 = vadd.xlane.f32.xlu0 %v1058
    %v1060 = vpop.xlane.xlu0 %1059
    %v1061 = vsel %vm797, %v1036, 0.0
    %1062 = vadd.xlane.f32.xlu0 %v1061
    %v1063 = vpop.xlane.xlu0 %1062
    %v1064 = vsel %vm797, %v1038, 0.0
    %1065 = vadd.xlane.f32.xlu0 %v1064
    %v1066 = vpop.xlane.xlu0 %1065
    %v1067 = vsel %vm797, %v1040, 0.0
    %1068 = vadd.xlane.f32.xlu0 %v1067
    %v1069 = vpop.xlane.xlu0 %1068
    %v1070 = vsel %vm797, %v1042, 0.0
    %1071 = vadd.xlane.f32.xlu0 %v1070
    %v1072 = vpop.xlane.xlu0 %1071
    %v1073 = vsel %vm797, %v1044, 0.0
    %1074 = vadd.xlane.f32.xlu0 %v1073
    %v1075 = vpop.xlane.xlu0 %1074
    %v1076 = vsel %vm797, %v1046, 0.0
    %1077 = vadd.xlane.f32.xlu0 %v1076
    %v1078 = vpop.xlane.xlu0 %1077
    %1079 = vrot.lane.b32.xlu0 %v839, 48
    %v1080 = vpop.permute.xlu0 %1079
    %1081 = vrot.lane.b32.xlu0 %v841, 48
    %v1082 = vpop.permute.xlu0 %1081
    %1083 = vrot.lane.b32.xlu0 %v843, 48
    %v1084 = vpop.permute.xlu0 %1083
    %1085 = vrot.lane.b32.xlu0 %v845, 48
    %v1086 = vpop.permute.xlu0 %1085
    %1087 = vrot.lane.b32.xlu0 %v847, 48
    %v1088 = vpop.permute.xlu0 %1087
    %1089 = vrot.lane.b32.xlu0 %v849, 48
    %v1090 = vpop.permute.xlu0 %1089
    %1091 = vrot.lane.b32.xlu0 %v851, 48
    %v1092 = vpop.permute.xlu0 %1091
    %1093 = vrot.lane.b32.xlu0 %v853, 48
    %v1094 = vpop.permute.xlu0 %1093
    %v1103 = vsel %vm797, %v1080, 0.0
    %1104 = vadd.xlane.f32.xlu0 %v1103
    %v1105 = vpop.xlane.xlu0 %1104
    %v1106 = vsel %vm797, %v1082, 0.0
    %1107 = vadd.xlane.f32.xlu0 %v1106
    %v1108 = vpop.xlane.xlu0 %1107
    %v1109 = vsel %vm797, %v1084, 0.0
    %1110 = vadd.xlane.f32.xlu0 %v1109
    %v1111 = vpop.xlane.xlu0 %1110
    %v1112 = vsel %vm797, %v1086, 0.0
    %1113 = vadd.xlane.f32.xlu0 %v1112
    %v1114 = vpop.xlane.xlu0 %1113
    %v1115 = vsel %vm797, %v1088, 0.0
    %1116 = vadd.xlane.f32.xlu0 %v1115
    %v1117 = vpop.xlane.xlu0 %1116
    %v1118 = vsel %vm797, %v1090, 0.0
    %1119 = vadd.xlane.f32.xlu0 %v1118
    %v1120 = vpop.xlane.xlu0 %1119
    %v1121 = vsel %vm797, %v1092, 0.0
    %1122 = vadd.xlane.f32.xlu0 %v1121
    %v1123 = vpop.xlane.xlu0 %1122
    %v1124 = vsel %vm797, %v1094, 0.0
    %1125 = vadd.xlane.f32.xlu0 %v1124
    %v1126 = vpop.xlane.xlu0 %1125
    %1127 = vrot.lane.b32.xlu0 %v839, 32
    %v1128 = vpop.permute.xlu0 %1127
    %1129 = vrot.lane.b32.xlu0 %v841, 32
    %v1130 = vpop.permute.xlu0 %1129
    %1131 = vrot.lane.b32.xlu0 %v843, 32
    %v1132 = vpop.permute.xlu0 %1131
    %1133 = vrot.lane.b32.xlu0 %v845, 32
    %v1134 = vpop.permute.xlu0 %1133
    %1135 = vrot.lane.b32.xlu0 %v847, 32
    %v1136 = vpop.permute.xlu0 %1135
    %1137 = vrot.lane.b32.xlu0 %v849, 32
    %v1138 = vpop.permute.xlu0 %1137
    %1139 = vrot.lane.b32.xlu0 %v851, 32
    %v1140 = vpop.permute.xlu0 %1139
    %1141 = vrot.lane.b32.xlu0 %v853, 32
    %v1142 = vpop.permute.xlu0 %1141
    %v1151 = vsel %vm797, %v1128, 0.0
    %1152 = vadd.xlane.f32.xlu0 %v1151
    %v1153 = vpop.xlane.xlu0 %1152
    %v1154 = vsel %vm797, %v1130, 0.0
    %1155 = vadd.xlane.f32.xlu0 %v1154
    %v1156 = vpop.xlane.xlu0 %1155
    %v1157 = vsel %vm797, %v1132, 0.0
    %1158 = vadd.xlane.f32.xlu0 %v1157
    %v1159 = vpop.xlane.xlu0 %1158
    %v1160 = vsel %vm797, %v1134, 0.0
    %1161 = vadd.xlane.f32.xlu0 %v1160
    %v1162 = vpop.xlane.xlu0 %1161
    %v1163 = vsel %vm797, %v1136, 0.0
    %1164 = vadd.xlane.f32.xlu0 %v1163
    %v1165 = vpop.xlane.xlu0 %1164
    %v1166 = vsel %vm797, %v1138, 0.0
    %1167 = vadd.xlane.f32.xlu0 %v1166
    %v1168 = vpop.xlane.xlu0 %1167
    %v1169 = vsel %vm797, %v1140, 0.0
    %1170 = vadd.xlane.f32.xlu0 %v1169
    %v1171 = vpop.xlane.xlu0 %1170
    %v1172 = vsel %vm797, %v1142, 0.0
    %1173 = vadd.xlane.f32.xlu0 %v1172
    %v1174 = vpop.xlane.xlu0 %1173
    %1175 = vrot.lane.b32.xlu0 %v839, 16
    %v1176 = vpop.permute.xlu0 %1175
    %1177 = vrot.lane.b32.xlu0 %v841, 16
    %v1178 = vpop.permute.xlu0 %1177
    %1179 = vrot.lane.b32.xlu0 %v843, 16
    %v1180 = vpop.permute.xlu0 %1179
    %1181 = vrot.lane.b32.xlu0 %v845, 16
    %v1182 = vpop.permute.xlu0 %1181
    %1183 = vrot.lane.b32.xlu0 %v847, 16
    %v1184 = vpop.permute.xlu0 %1183
    %1185 = vrot.lane.b32.xlu0 %v849, 16
    %v1186 = vpop.permute.xlu0 %1185
    %1187 = vrot.lane.b32.xlu0 %v851, 16
    %v1188 = vpop.permute.xlu0 %1187
    %1189 = vrot.lane.b32.xlu0 %v853, 16
    %v1190 = vpop.permute.xlu0 %1189
    %v1199 = vsel %vm797, %v1176, 0.0
    %1200 = vadd.xlane.f32.xlu0 %v1199
    %v1201 = vpop.xlane.xlu0 %1200
    %v1202 = vsel %vm797, %v1178, 0.0
    %1203 = vadd.xlane.f32.xlu0 %v1202
    %v1204 = vpop.xlane.xlu0 %1203
    %v1205 = vsel %vm797, %v1180, 0.0
    %1206 = vadd.xlane.f32.xlu0 %v1205
    %v1207 = vpop.xlane.xlu0 %1206
    %v1208 = vsel %vm797, %v1182, 0.0
    %1209 = vadd.xlane.f32.xlu0 %v1208
    %v1210 = vpop.xlane.xlu0 %1209
    %v1211 = vsel %vm797, %v1184, 0.0
    %1212 = vadd.xlane.f32.xlu0 %v1211
    %v1213 = vpop.xlane.xlu0 %1212
    %v1214 = vsel %vm797, %v1186, 0.0
    %1215 = vadd.xlane.f32.xlu0 %v1214
    %v1216 = vpop.xlane.xlu0 %1215
    %v1217 = vsel %vm797, %v1188, 0.0
    %1218 = vadd.xlane.f32.xlu0 %v1217
    %v1219 = vpop.xlane.xlu0 %1218
    %v1220 = vsel %vm797, %v1190, 0.0
    %1221 = vadd.xlane.f32.xlu0 %v1220
    %v1222 = vpop.xlane.xlu0 %1221
    %v1223 = vsel %vm797, %v840, 0.0
    %1224 = vadd.xlane.f32.xlu0 %v1223
    %v1225 = vpop.xlane.xlu0 %1224
    %v1226 = vsel %vm797, %v842, 0.0
    %1227 = vadd.xlane.f32.xlu0 %v1226
    %v1228 = vpop.xlane.xlu0 %1227
    %v1229 = vsel %vm797, %v844, 0.0
    %1230 = vadd.xlane.f32.xlu0 %v1229
    %v1231 = vpop.xlane.xlu0 %1230
    %v1232 = vsel %vm797, %v846, 0.0
    %1233 = vadd.xlane.f32.xlu0 %v1232
    %v1234 = vpop.xlane.xlu0 %1233
    %v1235 = vsel %vm797, %v848, 0.0
    %1236 = vadd.xlane.f32.xlu0 %v1235
    %v1237 = vpop.xlane.xlu0 %1236
    %v1238 = vsel %vm797, %v850, 0.0
    %1239 = vadd.xlane.f32.xlu0 %v1238
    %v1240 = vpop.xlane.xlu0 %1239
    %v1241 = vsel %vm797, %v852, 0.0
    %1242 = vadd.xlane.f32.xlu0 %v1241
    %v1243 = vpop.xlane.xlu0 %1242
    %v1244 = vsel %vm797, %v854, 0.0
    %1245 = vadd.xlane.f32.xlu0 %v1244
    %v1246 = vpop.xlane.xlu0 %1245
    %1255 = vrot.lane.b32.xlu0 %v840, 112
    %v1256 = vpop.permute.xlu0 %1255
    %1257 = vrot.lane.b32.xlu0 %v842, 112
    %v1258 = vpop.permute.xlu0 %1257
    %1259 = vrot.lane.b32.xlu0 %v844, 112
    %v1260 = vpop.permute.xlu0 %1259
    %1261 = vrot.lane.b32.xlu0 %v846, 112
    %v1262 = vpop.permute.xlu0 %1261
    %1263 = vrot.lane.b32.xlu0 %v848, 112
    %v1264 = vpop.permute.xlu0 %1263
    %1265 = vrot.lane.b32.xlu0 %v850, 112
    %v1266 = vpop.permute.xlu0 %1265
    %1267 = vrot.lane.b32.xlu0 %v852, 112
    %v1268 = vpop.permute.xlu0 %1267
    %1269 = vrot.lane.b32.xlu0 %v854, 112
    %v1270 = vpop.permute.xlu0 %1269
    %v1279 = vsel %vm797, %v1256, 0.0
    %1280 = vadd.xlane.f32.xlu0 %v1279
    %v1281 = vpop.xlane.xlu0 %1280
    %v1282 = vsel %vm797, %v1258, 0.0
    %1283 = vadd.xlane.f32.xlu0 %v1282
    %v1284 = vpop.xlane.xlu0 %1283
    %v1285 = vsel %vm797, %v1260, 0.0
    %1286 = vadd.xlane.f32.xlu0 %v1285
    %v1287 = vpop.xlane.xlu0 %1286
    %v1288 = vsel %vm797, %v1262, 0.0
    %1289 = vadd.xlane.f32.xlu0 %v1288
    %v1290 = vpop.xlane.xlu0 %1289
    %v1291 = vsel %vm797, %v1264, 0.0
    %1292 = vadd.xlane.f32.xlu0 %v1291
    %v1293 = vpop.xlane.xlu0 %1292
    %v1294 = vsel %vm797, %v1266, 0.0
    %1295 = vadd.xlane.f32.xlu0 %v1294
    %v1296 = vpop.xlane.xlu0 %1295
    %v1297 = vsel %vm797, %v1268, 0.0
    %1298 = vadd.xlane.f32.xlu0 %v1297
    %v1299 = vpop.xlane.xlu0 %1298
    %v1300 = vsel %vm797, %v1270, 0.0
    %1301 = vadd.xlane.f32.xlu0 %v1300
    %v1302 = vpop.xlane.xlu0 %1301
    %v1303 = vsel %vm726, %v857, %v913
    %v1304 = vsel %vm726, %v860, %v916
    %v1305 = vsel %vm726, %v863, %v919
    %v1306 = vsel %vm726, %v866, %v922
    %v1307 = vsel %vm726, %v869, %v925
    %v1308 = vsel %vm726, %v872, %v928
    %v1309 = vsel %vm726, %v875, %v931
    %v1310 = vsel %vm726, %v878, %v934
    %v1311 = vsel %vm728, %v1303, %v961
    %v1312 = vsel %vm728, %v1304, %v964
    %v1313 = vsel %vm728, %v1305, %v967
    %v1314 = vsel %vm728, %v1306, %v970
    %v1315 = vsel %vm728, %v1307, %v973
    %v1316 = vsel %vm728, %v1308, %v976
    %v1317 = vsel %vm728, %v1309, %v979
    %v1318 = vsel %vm728, %v1310, %v982
    %v1319 = vsel %vm730, %v1311, %v1009
    %v1320 = vsel %vm730, %v1312, %v1012
    %v1321 = vsel %vm730, %v1313, %v1015
    %v1322 = vsel %vm730, %v1314, %v1018
    %v1323 = vsel %vm730, %v1315, %v1021
    %v1324 = vsel %vm730, %v1316, %v1024
    %v1325 = vsel %vm730, %v1317, %v1027
    %v1326 = vsel %vm730, %v1318, %v1030
    %v1327 = vsel %vm732, %v1319, %v1057
    %v1328 = vsel %vm732, %v1320, %v1060
    %v1329 = vsel %vm732, %v1321, %v1063
    %v1330 = vsel %vm732, %v1322, %v1066
    %v1331 = vsel %vm732, %v1323, %v1069
    %v1332 = vsel %vm732, %v1324, %v1072
    %v1333 = vsel %vm732, %v1325, %v1075
    %v1334 = vsel %vm732, %v1326, %v1078
    %v1335 = vsel %vm734, %v1327, %v1105
    %v1336 = vsel %vm734, %v1328, %v1108
    %v1337 = vsel %vm734, %v1329, %v1111
    %v1338 = vsel %vm734, %v1330, %v1114
    %v1339 = vsel %vm734, %v1331, %v1117
    %v1340 = vsel %vm734, %v1332, %v1120
    %v1341 = vsel %vm734, %v1333, %v1123
    %v1342 = vsel %vm734, %v1334, %v1126
    %v1343 = vsel %vm736, %v1335, %v1153
    %v1344 = vsel %vm736, %v1336, %v1156
    %v1345 = vsel %vm736, %v1337, %v1159
    %v1346 = vsel %vm736, %v1338, %v1162
    %v1347 = vsel %vm736, %v1339, %v1165
    %v1348 = vsel %vm736, %v1340, %v1168
    %v1349 = vsel %vm736, %v1341, %v1171
    %v1350 = vsel %vm736, %v1342, %v1174
    %v1351 = vsel %vm738, %v1343, %v1201
    %v1352 = vsel %vm738, %v1344, %v1204
    %v1353 = vsel %vm738, %v1345, %v1207
    %v1354 = vsel %vm738, %v1346, %v1210
    %v1355 = vsel %vm738, %v1347, %v1213
    %v1356 = vsel %vm738, %v1348, %v1216
    %v1357 = vsel %vm738, %v1349, %v1219
    %v1358 = vsel %vm738, %v1350, %v1222
    %v1359 = vsel %vm740, %v1351, %v1225
    %v1360 = vsel %vm740, %v1352, %v1228
    %v1361 = vsel %vm740, %v1353, %v1231
    %v1362 = vsel %vm740, %v1354, %v1234
    %v1363 = vsel %vm740, %v1355, %v1237
    %v1364 = vsel %vm740, %v1356, %v1240
    %v1365 = vsel %vm740, %v1357, %v1243
    %v1366 = vsel %vm740, %v1358, %v1246
    %v1367 = vsel %vm742, %v1359, %v1281
    %v1368 = vsel %vm742, %v1360, %v1284
    %v1369 = vsel %vm742, %v1361, %v1287
    %v1370 = vsel %vm742, %v1362, %v1290
    %v1371 = vsel %vm742, %v1363, %v1293
    %v1372 = vsel %vm742, %v1364, %v1296
    %v1373 = vsel %vm742, %v1365, %v1299
    %v1374 = vsel %vm742, %v1366, %v1302
    %vm1375 = vcmask 80896
    %v1376 = vsel %vm1375, %v1367, -inf
    %v1377 = vsel %vm1375, %v1368, -inf
    %v1378 = vsel %vm1375, %v1369, -inf
    %v1379 = vmax.f32 %v1376, %v1378
    %v1380 = vsel %vm1375, %v1370, -inf
    %v1381 = vmax.f32 %v1377, %v1380
    %v1382 = vmax.f32 %v1379, %v1381
    %v1383 = vrot.slane %v1382, 4
    %v1384 = vmax.f32 %v1382, %v1383
    %v1385 = vrot.slane %v1384, 2
    %v1386 = vmax.f32 %v1384, %v1385
    %v1387 = vrot.slane %v1386, 1
    %v1388 = vmax.f32 %v1386, %v1387
    %v1389 = vsel %vm1375, %v1371, -inf
    %v1390 = vsel %vm1375, %v1372, -inf
    %v1391 = vsel %vm1375, %v1373, -inf
    %v1392 = vmax.f32 %v1389, %v1391
    %v1393 = vsel %vm1375, %v1374, -inf
    %v1394 = vmax.f32 %v1390, %v1393
    %v1395 = vmax.f32 %v1392, %v1394
    %v1396 = vrot.slane %v1395, 4
    %v1397 = vmax.f32 %v1395, %v1396
    %v1398 = vrot.slane %v1397, 2
    %v1399 = vmax.f32 %v1397, %v1398
    %v1400 = vrot.slane %v1399, 1
    %v1401 = vmax.f32 %v1399, %v1400
    %v1402 = vsub.f32 %v1367, %v1388
    %v1403 = vsub.f32 %v1368, %v1388
    %v1404 = vsub.f32 %v1369, %v1388
    %v1405 = vsub.f32 %v1370, %v1388
    %v1406 = vsub.f32 %v1371, %v1401
    %v1407 = vsub.f32 %v1372, %v1401
    %v1408 = vsub.f32 %v1373, %v1401
    %v1409 = vsub.f32 %v1374, %v1401
    %v1410 = vmul.f32 %v1402, 1.442695
    %v1411 = vpow.pop %v1410
    %v1412 = vmul.f32 %v1403, 1.442695
    %v1413 = vpow.pop %v1412
    %v1414 = vmul.f32 %v1404, 1.442695
    %v1415 = vpow.pop %v1414
    %v1416 = vmul.f32 %v1405, 1.442695
    %v1417 = vpow.pop %v1416
    %v1418 = vmul.f32 %v1406, 1.442695
    %v1419 = vpow.pop %v1418
    %v1420 = vmul.f32 %v1407, 1.442695
    %v1421 = vpow.pop %v1420
    %v1422 = vmul.f32 %v1408, 1.442695
    %v1423 = vpow.pop %v1422
    %v1424 = vmul.f32 %v1409, 1.442695
    %v1425 = vpow.pop %v1424
    %v1426 = vsel %vm1375, %v1411, 0.0
    %v1427 = vsel %vm1375, %v1413, 0.0
    %v1428 = vadd.f32 %v1426, %v1427
    %v1429 = vsel %vm1375, %v1415, 0.0
    %v1430 = vadd.f32 %v1428, %v1429
    %v1431 = vsel %vm1375, %v1417, 0.0
    %v1432 = vadd.f32 %v1430, %v1431
    %v1433 = vrot.slane %v1432, 4
    %v1434 = vadd.f32 %v1432, %v1433
    %v1435 = vrot.slane %v1434, 2
    %v1436 = vadd.f32 %v1434, %v1435
    %v1437 = vrot.slane %v1436, 1
    %v1438 = vadd.f32 %v1436, %v1437
    %v1439 = vsel %vm1375, %v1419, 0.0
    %v1440 = vsel %vm1375, %v1421, 0.0
    %v1441 = vadd.f32 %v1439, %v1440
    %v1442 = vsel %vm1375, %v1423, 0.0
    %v1443 = vadd.f32 %v1441, %v1442
    %v1444 = vsel %vm1375, %v1425, 0.0
    %v1445 = vadd.f32 %v1443, %v1444
    %v1446 = vrot.slane %v1445, 4
    %v1447 = vadd.f32 %v1445, %v1446
    %v1448 = vrot.slane %v1447, 2
    %v1449 = vadd.f32 %v1447, %v1448
    %v1450 = vrot.slane %v1449, 1
    %v1451 = vadd.f32 %v1449, %v1450
    %v1452 = vrcp.pop %v1438
    %v1453 = vrcp.pop %v1451
    %v1454 = vmul.f32 %v1411, %v1452
    %v1455 = vmul.f32 %v1413, %v1452
    %v1456 = vmul.f32 %v1415, %v1452
    %v1457 = vmul.f32 %v1417, %v1452
    %v1458 = vmul.f32 %v1419, %v1453
    %v1459 = vmul.f32 %v1421, %v1453
    %v1460 = vmul.f32 %v1423, %v1453
    %v1461 = vmul.f32 %v1425, %v1453
    %1463 = vset.pattern.permute.xlu0 0
    %1464 = vperm.xlu0 %1463, %v1454
    %v1465 = vpop.permute.xlu0 %1464
    %1468 = vset.pattern.permute.xlu0 0
    %1469 = vperm.xlu0 %1468, %v1455
    %v1470 = vpop.permute.xlu0 %1469
    %1473 = vset.pattern.permute.xlu0 0
    %1474 = vperm.xlu0 %1473, %v1456
    %v1475 = vpop.permute.xlu0 %1474
    %1478 = vset.pattern.permute.xlu0 0
    %1479 = vperm.xlu0 %1478, %v1457
    %v1480 = vpop.permute.xlu0 %1479
    %1483 = vset.pattern.permute.xlu0 0
    %1484 = vperm.xlu0 %1483, %v1458
    %v1485 = vpop.permute.xlu0 %1484
    %1488 = vset.pattern.permute.xlu0 0
    %1489 = vperm.xlu0 %1488, %v1459
    %v1490 = vpop.permute.xlu0 %1489
    %1493 = vset.pattern.permute.xlu0 0
    %1494 = vperm.xlu0 %1493, %v1460
    %v1495 = vpop.permute.xlu0 %1494
    %1498 = vset.pattern.permute.xlu0 0
    %1499 = vperm.xlu0 %1498, %v1461
    %v1500 = vpop.permute.xlu0 %1499
    %1502 = vset.pattern.permute.xlu0 1
    %1503 = vperm.xlu0 %1502, %v1454
    %v1504 = vpop.permute.xlu0 %1503
    %1506 = vset.pattern.permute.xlu0 1
    %1507 = vperm.xlu0 %1506, %v1455
    %v1508 = vpop.permute.xlu0 %1507
    %1510 = vset.pattern.permute.xlu0 1
    %1511 = vperm.xlu0 %1510, %v1456
    %v1512 = vpop.permute.xlu0 %1511
    %1514 = vset.pattern.permute.xlu0 1
    %1515 = vperm.xlu0 %1514, %v1457
    %v1516 = vpop.permute.xlu0 %1515
    %1518 = vset.pattern.permute.xlu0 1
    %1519 = vperm.xlu0 %1518, %v1458
    %v1520 = vpop.permute.xlu0 %1519
    %1522 = vset.pattern.permute.xlu0 1
    %1523 = vperm.xlu0 %1522, %v1459
    %v1524 = vpop.permute.xlu0 %1523
    %1526 = vset.pattern.permute.xlu0 1
    %1527 = vperm.xlu0 %1526, %v1460
    %v1528 = vpop.permute.xlu0 %1527
    %1530 = vset.pattern.permute.xlu0 1
    %1531 = vperm.xlu0 %1530, %v1461
    %v1532 = vpop.permute.xlu0 %1531
    %1534 = vset.pattern.permute.xlu0 2
    %1535 = vperm.xlu0 %1534, %v1454
    %v1536 = vpop.permute.xlu0 %1535
    %1538 = vset.pattern.permute.xlu0 2
    %1539 = vperm.xlu0 %1538, %v1455
    %v1540 = vpop.permute.xlu0 %1539
    %1542 = vset.pattern.permute.xlu0 2
    %1543 = vperm.xlu0 %1542, %v1456
    %v1544 = vpop.permute.xlu0 %1543
    %1546 = vset.pattern.permute.xlu0 2
    %1547 = vperm.xlu0 %1546, %v1457
    %v1548 = vpop.permute.xlu0 %1547
    %1550 = vset.pattern.permute.xlu0 2
    %1551 = vperm.xlu0 %1550, %v1458
    %v1552 = vpop.permute.xlu0 %1551
    %1554 = vset.pattern.permute.xlu0 2
    %1555 = vperm.xlu0 %1554, %v1459
    %v1556 = vpop.permute.xlu0 %1555
    %1558 = vset.pattern.permute.xlu0 2
    %1559 = vperm.xlu0 %1558, %v1460
    %v1560 = vpop.permute.xlu0 %1559
    %1562 = vset.pattern.permute.xlu0 2
    %1563 = vperm.xlu0 %1562, %v1461
    %v1564 = vpop.permute.xlu0 %1563
    %1566 = vset.pattern.permute.xlu0 3
    %1567 = vperm.xlu0 %1566, %v1454
    %v1568 = vpop.permute.xlu0 %1567
    %1570 = vset.pattern.permute.xlu0 3
    %1571 = vperm.xlu0 %1570, %v1455
    %v1572 = vpop.permute.xlu0 %1571
    %1574 = vset.pattern.permute.xlu0 3
    %1575 = vperm.xlu0 %1574, %v1456
    %v1576 = vpop.permute.xlu0 %1575
    %1578 = vset.pattern.permute.xlu0 3
    %1579 = vperm.xlu0 %1578, %v1457
    %v1580 = vpop.permute.xlu0 %1579
    %1582 = vset.pattern.permute.xlu0 3
    %1583 = vperm.xlu0 %1582, %v1458
    %v1584 = vpop.permute.xlu0 %1583
    %1586 = vset.pattern.permute.xlu0 3
    %1587 = vperm.xlu0 %1586, %v1459
    %v1588 = vpop.permute.xlu0 %1587
    %1590 = vset.pattern.permute.xlu0 3
    %1591 = vperm.xlu0 %1590, %v1460
    %v1592 = vpop.permute.xlu0 %1591
    %1594 = vset.pattern.permute.xlu0 3
    %1595 = vperm.xlu0 %1594, %v1461
    %v1596 = vpop.permute.xlu0 %1595
    %1598 = vset.pattern.permute.xlu0 4
    %1599 = vperm.xlu0 %1598, %v1454
    %v1600 = vpop.permute.xlu0 %1599
    %1602 = vset.pattern.permute.xlu0 4
    %1603 = vperm.xlu0 %1602, %v1455
    %v1604 = vpop.permute.xlu0 %1603
    %1606 = vset.pattern.permute.xlu0 4
    %1607 = vperm.xlu0 %1606, %v1456
    %v1608 = vpop.permute.xlu0 %1607
    %1610 = vset.pattern.permute.xlu0 4
    %1611 = vperm.xlu0 %1610, %v1457
    %v1612 = vpop.permute.xlu0 %1611
    %1614 = vset.pattern.permute.xlu0 4
    %1615 = vperm.xlu0 %1614, %v1458
    %v1616 = vpop.permute.xlu0 %1615
    %1618 = vset.pattern.permute.xlu0 4
    %1619 = vperm.xlu0 %1618, %v1459
    %v1620 = vpop.permute.xlu0 %1619
    %1622 = vset.pattern.permute.xlu0 4
    %1623 = vperm.xlu0 %1622, %v1460
    %v1624 = vpop.permute.xlu0 %1623
    %1626 = vset.pattern.permute.xlu0 4
    %1627 = vperm.xlu0 %1626, %v1461
    %v1628 = vpop.permute.xlu0 %1627
    %1630 = vset.pattern.permute.xlu0 5
    %1631 = vperm.xlu0 %1630, %v1454
    %v1632 = vpop.permute.xlu0 %1631
    %1634 = vset.pattern.permute.xlu0 5
    %1635 = vperm.xlu0 %1634, %v1455
    %v1636 = vpop.permute.xlu0 %1635
    %1638 = vset.pattern.permute.xlu0 5
    %1639 = vperm.xlu0 %1638, %v1456
    %v1640 = vpop.permute.xlu0 %1639
    %1642 = vset.pattern.permute.xlu0 5
    %1643 = vperm.xlu0 %1642, %v1457
    %v1644 = vpop.permute.xlu0 %1643
    %1646 = vset.pattern.permute.xlu0 5
    %1647 = vperm.xlu0 %1646, %v1458
    %v1648 = vpop.permute.xlu0 %1647
    %1650 = vset.pattern.permute.xlu0 5
    %1651 = vperm.xlu0 %1650, %v1459
    %v1652 = vpop.permute.xlu0 %1651
    %1654 = vset.pattern.permute.xlu0 5
    %1655 = vperm.xlu0 %1654, %v1460
    %v1656 = vpop.permute.xlu0 %1655
    %1658 = vset.pattern.permute.xlu0 5
    %1659 = vperm.xlu0 %1658, %v1461
    %v1660 = vpop.permute.xlu0 %1659
    %1662 = vset.pattern.permute.xlu0 6
    %1663 = vperm.xlu0 %1662, %v1454
    %v1664 = vpop.permute.xlu0 %1663
    %1666 = vset.pattern.permute.xlu0 6
    %1667 = vperm.xlu0 %1666, %v1455
    %v1668 = vpop.permute.xlu0 %1667
    %1670 = vset.pattern.permute.xlu0 6
    %1671 = vperm.xlu0 %1670, %v1456
    %v1672 = vpop.permute.xlu0 %1671
    %1674 = vset.pattern.permute.xlu0 6
    %1675 = vperm.xlu0 %1674, %v1457
    %v1676 = vpop.permute.xlu0 %1675
    %1678 = vset.pattern.permute.xlu0 6
    %1679 = vperm.xlu0 %1678, %v1458
    %v1680 = vpop.permute.xlu0 %1679
    %1682 = vset.pattern.permute.xlu0 6
    %1683 = vperm.xlu0 %1682, %v1459
    %v1684 = vpop.permute.xlu0 %1683
    %1686 = vset.pattern.permute.xlu0 6
    %1687 = vperm.xlu0 %1686, %v1460
    %v1688 = vpop.permute.xlu0 %1687
    %1690 = vset.pattern.permute.xlu0 6
    %1691 = vperm.xlu0 %1690, %v1461
    %v1692 = vpop.permute.xlu0 %1691
    %1694 = vset.pattern.permute.xlu0 7
    %1695 = vperm.xlu0 %1694, %v1454
    %v1696 = vpop.permute.xlu0 %1695
    %1698 = vset.pattern.permute.xlu0 7
    %1699 = vperm.xlu0 %1698, %v1455
    %v1700 = vpop.permute.xlu0 %1699
    %1702 = vset.pattern.permute.xlu0 7
    %1703 = vperm.xlu0 %1702, %v1456
    %v1704 = vpop.permute.xlu0 %1703
    %1706 = vset.pattern.permute.xlu0 7
    %1707 = vperm.xlu0 %1706, %v1457
    %v1708 = vpop.permute.xlu0 %1707
    %1710 = vset.pattern.permute.xlu0 7
    %1711 = vperm.xlu0 %1710, %v1458
    %v1712 = vpop.permute.xlu0 %1711
    %1714 = vset.pattern.permute.xlu0 7
    %1715 = vperm.xlu0 %1714, %v1459
    %v1716 = vpop.permute.xlu0 %1715
    %1718 = vset.pattern.permute.xlu0 7
    %1719 = vperm.xlu0 %1718, %v1460
    %v1720 = vpop.permute.xlu0 %1719
    %1722 = vset.pattern.permute.xlu0 7
    %1723 = vperm.xlu0 %1722, %v1461
    %v1724 = vpop.permute.xlu0 %1723
    %1726 = vset.pattern.permute.xlu0 8
    %1727 = vperm.xlu0 %1726, %v1454
    %v1728 = vpop.permute.xlu0 %1727
    %1730 = vset.pattern.permute.xlu0 8
    %1731 = vperm.xlu0 %1730, %v1455
    %v1732 = vpop.permute.xlu0 %1731
    %1734 = vset.pattern.permute.xlu0 8
    %1735 = vperm.xlu0 %1734, %v1456
    %v1736 = vpop.permute.xlu0 %1735
    %1738 = vset.pattern.permute.xlu0 8
    %1739 = vperm.xlu0 %1738, %v1457
    %v1740 = vpop.permute.xlu0 %1739
    %1742 = vset.pattern.permute.xlu0 8
    %1743 = vperm.xlu0 %1742, %v1458
    %v1744 = vpop.permute.xlu0 %1743
    %1746 = vset.pattern.permute.xlu0 8
    %1747 = vperm.xlu0 %1746, %v1459
    %v1748 = vpop.permute.xlu0 %1747
    %1750 = vset.pattern.permute.xlu0 8
    %1751 = vperm.xlu0 %1750, %v1460
    %v1752 = vpop.permute.xlu0 %1751
    %1754 = vset.pattern.permute.xlu0 8
    %1755 = vperm.xlu0 %1754, %v1461
    %v1756 = vpop.permute.xlu0 %1755
    %1758 = vset.pattern.permute.xlu0 9
    %1759 = vperm.xlu0 %1758, %v1454
    %v1760 = vpop.permute.xlu0 %1759
    %1762 = vset.pattern.permute.xlu0 9
    %1763 = vperm.xlu0 %1762, %v1455
    %v1764 = vpop.permute.xlu0 %1763
    %1766 = vset.pattern.permute.xlu0 9
    %1767 = vperm.xlu0 %1766, %v1456
    %v1768 = vpop.permute.xlu0 %1767
    %1770 = vset.pattern.permute.xlu0 9
    %1771 = vperm.xlu0 %1770, %v1457
    %v1772 = vpop.permute.xlu0 %1771
    %1774 = vset.pattern.permute.xlu0 9
    %1775 = vperm.xlu0 %1774, %v1458
    %v1776 = vpop.permute.xlu0 %1775
    %1778 = vset.pattern.permute.xlu0 9
    %1779 = vperm.xlu0 %1778, %v1459
    %v1780 = vpop.permute.xlu0 %1779
    %1782 = vset.pattern.permute.xlu0 9
    %1783 = vperm.xlu0 %1782, %v1460
    %v1784 = vpop.permute.xlu0 %1783
    %1786 = vset.pattern.permute.xlu0 9
    %1787 = vperm.xlu0 %1786, %v1461
    %v1788 = vpop.permute.xlu0 %1787
    %v1790 = vsel %vm797, %v1465, %v1504
    %v1791 = vsel %vm797, %v1470, %v1508
    %v1792 = vsel %vm797, %v1475, %v1512
    %v1793 = vsel %vm797, %v1480, %v1516
    %v1794 = vsel %vm797, %v1485, %v1520
    %v1795 = vsel %vm797, %v1490, %v1524
    %v1796 = vsel %vm797, %v1495, %v1528
    %v1797 = vsel %vm797, %v1500, %v1532
    %v1798 = vsel %vm618, %v1790, %v1536
    %v1799 = vsel %vm618, %v1791, %v1540
    %v1800 = vsel %vm618, %v1792, %v1544
    %v1801 = vsel %vm618, %v1793, %v1548
    %v1802 = vsel %vm618, %v1794, %v1552
    %v1803 = vsel %vm618, %v1795, %v1556
    %v1804 = vsel %vm618, %v1796, %v1560
    %v1805 = vsel %vm618, %v1797, %v1564
    %v1806 = vsel %vm800, %v1798, %v1568
    %v1807 = vsel %vm800, %v1799, %v1572
    %v1808 = vsel %vm800, %v1800, %v1576
    %v1809 = vsel %vm800, %v1801, %v1580
    %v1810 = vsel %vm800, %v1802, %v1584
    %v1811 = vsel %vm800, %v1803, %v1588
    %v1812 = vsel %vm800, %v1804, %v1592
    %v1813 = vsel %vm800, %v1805, %v1596
    %v1814 = vsel %vm802, %v1806, %v1600
    %v1815 = vsel %vm802, %v1807, %v1604
    %v1816 = vsel %vm802, %v1808, %v1608
    %v1817 = vsel %vm802, %v1809, %v1612
    %v1818 = vsel %vm802, %v1810, %v1616
    %v1819 = vsel %vm802, %v1811, %v1620
    %v1820 = vsel %vm802, %v1812, %v1624
    %v1821 = vsel %vm802, %v1813, %v1628
    %v1822 = vsel %vm804, %v1814, %v1632
    %v1823 = vsel %vm804, %v1815, %v1636
    %v1824 = vsel %vm804, %v1816, %v1640
    %v1825 = vsel %vm804, %v1817, %v1644
    %v1826 = vsel %vm804, %v1818, %v1648
    %v1827 = vsel %vm804, %v1819, %v1652
    %v1828 = vsel %vm804, %v1820, %v1656
    %v1829 = vsel %vm804, %v1821, %v1660
    %v1830 = vsel %vm806, %v1822, %v1664
    %v1831 = vsel %vm806, %v1823, %v1668
    %v1832 = vsel %vm806, %v1824, %v1672
    %v1833 = vsel %vm806, %v1825, %v1676
    %v1834 = vsel %vm806, %v1826, %v1680
    %v1835 = vsel %vm806, %v1827, %v1684
    %v1836 = vsel %vm806, %v1828, %v1688
    %v1837 = vsel %vm806, %v1829, %v1692
    %v1838 = vsel %vm808, %v1830, %v1696
    %v1839 = vsel %vm808, %v1831, %v1700
    %v1840 = vsel %vm808, %v1832, %v1704
    %v1841 = vsel %vm808, %v1833, %v1708
    %v1842 = vsel %vm808, %v1834, %v1712
    %v1843 = vsel %vm808, %v1835, %v1716
    %v1844 = vsel %vm808, %v1836, %v1720
    %v1845 = vsel %vm808, %v1837, %v1724
    %v1846 = vsel %vm797, %v1728, %v1760
    %v1847 = vsel %vm797, %v1732, %v1764
    %v1848 = vsel %vm797, %v1736, %v1768
    %v1849 = vsel %vm797, %v1740, %v1772
    %v1850 = vsel %vm797, %v1744, %v1776
    %v1851 = vsel %vm797, %v1748, %v1780
    %v1852 = vsel %vm797, %v1752, %v1784
    %v1853 = vsel %vm797, %v1756, %v1788
    %v1854 = vmul.f32 %v1838, %v593
    %v1855 = vmul.f32 %v1846, %v594
    %v1856 = vmul.f32 %v1839, %v595
    %v1857 = vmul.f32 %v1847, %v596
    %v1858 = vmul.f32 %v1840, %v597
    %v1859 = vmul.f32 %v1848, %v598
    %v1860 = vmul.f32 %v1841, %v599
    %v1861 = vmul.f32 %v1849, %v600
    %v1862 = vmul.f32 %v1842, %v601
    %v1863 = vmul.f32 %v1850, %v602
    %v1864 = vmul.f32 %v1843, %v603
    %v1865 = vmul.f32 %v1851, %v604
    %v1866 = vmul.f32 %v1844, %v605
    %v1867 = vmul.f32 %v1852, %v606
    %v1868 = vmul.f32 %v1845, %v607
    %v1869 = vmul.f32 %v1853, %v608
    %v1870 = vadd.f32 %v1854, %v1856
    %v1871 = vadd.f32 %v1870, %v1858
    %v1872 = vadd.f32 %v1871, %v1860
    %v1873 = vrot.slane %v1872, 4
    %v1874 = vadd.f32 %v1872, %v1873
    %v1875 = vrot.slane %v1874, 2
    %v1876 = vadd.f32 %v1874, %v1875
    %v1877 = vrot.slane %v1876, 1
    %v1878 = vadd.f32 %v1876, %v1877
    %v1879 = vsel %vm618, %v1855, 0.0
    %v1880 = vsel %vm618, %v1857, 0.0
    %v1881 = vadd.f32 %v1879, %v1880
    %v1882 = vsel %vm618, %v1859, 0.0
    %v1883 = vadd.f32 %v1881, %v1882
    %v1884 = vsel %vm618, %v1861, 0.0
    %v1885 = vadd.f32 %v1883, %v1884
    %v1886 = vrot.slane %v1885, 4
    %v1887 = vadd.f32 %v1885, %v1886
    %v1888 = vrot.slane %v1887, 2
    %v1889 = vadd.f32 %v1887, %v1888
    %v1890 = vrot.slane %v1889, 1
    %v1891 = vadd.f32 %v1889, %v1890
    %v1892 = vadd.f32 %v1862, %v1864
    %v1893 = vadd.f32 %v1892, %v1866
    %v1894 = vadd.f32 %v1893, %v1868
    %v1895 = vrot.slane %v1894, 4
    %v1896 = vadd.f32 %v1894, %v1895
    %v1897 = vrot.slane %v1896, 2
    %v1898 = vadd.f32 %v1896, %v1897
    %v1899 = vrot.slane %v1898, 1
    %v1900 = vadd.f32 %v1898, %v1899
    %v1901 = vsel %vm618, %v1863, 0.0
    %v1902 = vsel %vm618, %v1865, 0.0
    %v1903 = vadd.f32 %v1901, %v1902
    %v1904 = vsel %vm618, %v1867, 0.0
    %v1905 = vadd.f32 %v1903, %v1904
    %v1906 = vsel %vm618, %v1869, 0.0
    %v1907 = vadd.f32 %v1905, %v1906
    %v1908 = vrot.slane %v1907, 4
    %v1909 = vadd.f32 %v1907, %v1908
    %v1910 = vrot.slane %v1909, 2
    %v1911 = vadd.f32 %v1909, %v1910
    %v1912 = vrot.slane %v1911, 1
    %v1913 = vadd.f32 %v1911, %v1912
    %v1914 = vmul.f32 %v1878, %v1878
    %v1915 = vmul.f32 %v1891, %v1891
    %v1916 = vmul.f32 %v1900, %v1900
    %v1917 = vmul.f32 %v1913, %v1913
    %v1920 = vsel %vm664, %v1916, %v1914
    %v1922 = vsel %vm667, %v1920, 0.0
    %1923 = vadd.xlane.f32.xlu0 %v1922
    %v1924 = vpop.xlane.xlu0 %1923
    %1925 = vrot.lane.b32.xlu0 %v1920, 112
    %v1926 = vpop.permute.xlu0 %1925
    %v1928 = vsel %vm667, %v1926, 0.0
    %1929 = vadd.xlane.f32.xlu0 %v1928
    %v1930 = vpop.xlane.xlu0 %1929
    %1931 = vrot.lane.b32.xlu0 %v1920, 96
    %v1932 = vpop.permute.xlu0 %1931
    %v1934 = vsel %vm667, %v1932, 0.0
    %1935 = vadd.xlane.f32.xlu0 %v1934
    %v1936 = vpop.xlane.xlu0 %1935
    %1937 = vrot.lane.b32.xlu0 %v1920, 80
    %v1938 = vpop.permute.xlu0 %1937
    %v1940 = vsel %vm667, %v1938, 0.0
    %1941 = vadd.xlane.f32.xlu0 %v1940
    %v1942 = vpop.xlane.xlu0 %1941
    %1943 = vrot.lane.b32.xlu0 %v1920, 64
    %v1944 = vpop.permute.xlu0 %1943
    %v1946 = vsel %vm667, %v1944, 0.0
    %1947 = vadd.xlane.f32.xlu0 %v1946
    %v1948 = vpop.xlane.xlu0 %1947
    %1949 = vrot.lane.b32.xlu0 %v1920, 48
    %v1950 = vpop.permute.xlu0 %1949
    %v1952 = vsel %vm667, %v1950, 0.0
    %1953 = vadd.xlane.f32.xlu0 %v1952
    %v1954 = vpop.xlane.xlu0 %1953
    %1955 = vrot.lane.b32.xlu0 %v1920, 32
    %v1956 = vpop.permute.xlu0 %1955
    %v1958 = vsel %vm667, %v1956, 0.0
    %1959 = vadd.xlane.f32.xlu0 %v1958
    %v1960 = vpop.xlane.xlu0 %1959
    %1961 = vrot.lane.b32.xlu0 %v1920, 16
    %v1962 = vpop.permute.xlu0 %1961
    %v1964 = vsel %vm667, %v1962, 0.0
    %1965 = vadd.xlane.f32.xlu0 %v1964
    %v1966 = vpop.xlane.xlu0 %1965
    %v1969 = vsel %vm664, %v1917, %v1915
    %v1971 = vsel %vm667, %v1969, 0.0
    %1972 = vadd.xlane.f32.xlu0 %v1971
    %v1973 = vpop.xlane.xlu0 %1972
    %1974 = vrot.lane.b32.xlu0 %v1969, 112
    %v1975 = vpop.permute.xlu0 %1974
    %v1977 = vsel %vm667, %v1975, 0.0
    %1978 = vadd.xlane.f32.xlu0 %v1977
    %v1979 = vpop.xlane.xlu0 %1978
    %v1980 = vsel %vm726, %v1924, %v1930
    %v1981 = vsel %vm728, %v1980, %v1936
    %v1982 = vsel %vm730, %v1981, %v1942
    %v1983 = vsel %vm732, %v1982, %v1948
    %v1984 = vsel %vm734, %v1983, %v1954
    %v1985 = vsel %vm736, %v1984, %v1960
    %v1986 = vsel %vm738, %v1985, %v1966
    %v1987 = vsel %vm740, %v1986, %v1973
    %v1988 = vsel %vm742, %v1987, %v1979
    %v1989 = vadd.f32 %v1988, 1.0
    %v1990 = vrcp.pop %v1989
    %v1991 = vmul.f32 %v1988, %v1990
    %v1992 = vrsqrt.pop %v1988
    %v1993 = vmul.f32 %v1988, %v1992
    %vm1994 = vcmp.eq.f32.partialorder %v1988, inf
    %v1995 = vsel %vm1994, %v1988, %v1993
    %vm1996 = vcmp.eq.f32.partialorder %v1988, 0.0
    %v1997 = vand.u32 %v1988, 2147483648
    %v1998 = vsel %vm1996, %v1997, %v1995
    %v1999 = vrcp.pop %v1998
    %v2000 = vmul.f32 %v1991, %v1999
    %2002 = vset.pattern.permute.xlu0 0
    %2003 = vperm.xlu0 %2002, %v2000
    %v2004 = vpop.permute.xlu0 %2003
    %2006 = vset.pattern.permute.xlu0 1
    %2007 = vperm.xlu0 %2006, %v2000
    %v2008 = vpop.permute.xlu0 %2007
    %2010 = vset.pattern.permute.xlu0 2
    %2011 = vperm.xlu0 %2010, %v2000
    %v2012 = vpop.permute.xlu0 %2011
    %2014 = vset.pattern.permute.xlu0 3
    %2015 = vperm.xlu0 %2014, %v2000
    %v2016 = vpop.permute.xlu0 %2015
    %2018 = vset.pattern.permute.xlu0 4
    %2019 = vperm.xlu0 %2018, %v2000
    %v2020 = vpop.permute.xlu0 %2019
    %2022 = vset.pattern.permute.xlu0 5
    %2023 = vperm.xlu0 %2022, %v2000
    %v2024 = vpop.permute.xlu0 %2023
    %2026 = vset.pattern.permute.xlu0 6
    %2027 = vperm.xlu0 %2026, %v2000
    %v2028 = vpop.permute.xlu0 %2027
    %2030 = vset.pattern.permute.xlu0 7
    %2031 = vperm.xlu0 %2030, %v2000
    %v2032 = vpop.permute.xlu0 %2031
    %2034 = vset.pattern.permute.xlu0 8
    %2035 = vperm.xlu0 %2034, %v2000
    %v2036 = vpop.permute.xlu0 %2035
    %2038 = vset.pattern.permute.xlu0 9
    %2039 = vperm.xlu0 %2038, %v2000
    %v2040 = vpop.permute.xlu0 %2039
    %v2042 = vsel %vm797, %v2004, %v2008
    %v2043 = vsel %vm618, %v2042, %v2012
    %v2044 = vsel %vm800, %v2043, %v2016
    %v2045 = vsel %vm802, %v2044, %v2020
    %v2046 = vsel %vm804, %v2045, %v2024
    %v2047 = vsel %vm806, %v2046, %v2028
    %v2048 = vsel %vm808, %v2047, %v2032
    %v2049 = vsel %vm797, %v2036, %v2040
    %v2052 = vrot.slane %v2048, 1
    %v2053 = vrot.slane %v2049, 1
    %v2058 = vmul.f32 %v1878, %v2048
    %v2059 = vmul.f32 %v1891, %v2049
    %v2060 = vmul.f32 %v1900, %v2052
    %v2061 = vmul.f32 %v1913, %v2053
    %v2062 = vlaneseq
    %v2063 = vshrl.u32 %v2062, 7
    %v2064 = vsub.s32 0, %v2063
    %v2065 = vrot.slane %v2058, %v2064
    %v2066 = vlaneseq
    %v2067 = vshrl.u32 %v2066, 7
    %v2068 = vsub.s32 0, %v2067
    %v2069 = vrot.slane %v2059, %v2068
    %v2070 = vlaneseq
    %v2071 = vshrl.u32 %v2070, 7
    %v2072 = vsub.s32 0, %v2071
    %v2073 = vrot.slane %v2060, %v2072
    %v2074 = vlaneseq
    %v2075 = vshrl.u32 %v2074, 7
    %v2076 = vsub.s32 0, %v2075
    %v2077 = vrot.slane %v2061, %v2076
    %v2078 = vmul.f32 %v593, %v2065
    %v2079 = vmul.f32 %v594, %v2069
    %v2080 = vmul.f32 %v595, %v2065
    %v2081 = vmul.f32 %v596, %v2069
    %v2082 = vmul.f32 %v597, %v2065
    %v2083 = vmul.f32 %v598, %v2069
    %v2084 = vmul.f32 %v599, %v2065
    %v2085 = vmul.f32 %v600, %v2069
    %v2086 = vmul.f32 %v601, %v2073
    %v2087 = vmul.f32 %v602, %v2077
    %v2088 = vmul.f32 %v603, %v2073
    %v2089 = vmul.f32 %v604, %v2077
    %v2090 = vmul.f32 %v605, %v2073
    %v2091 = vmul.f32 %v606, %v2077
    %v2092 = vmul.f32 %v607, %v2073
    %v2093 = vmul.f32 %v608, %v2077
    %v2094 = vsel %vm797, %v2078, 0.0
    %2095 = vadd.xlane.f32.xlu0 %v2094
    %v2096 = vpop.xlane.xlu0 %2095
    %v2097 = vsel %vm797, %v2080, 0.0
    %2098 = vadd.xlane.f32.xlu0 %v2097
    %v2099 = vpop.xlane.xlu0 %2098
    %v2100 = vsel %vm797, %v2082, 0.0
    %2101 = vadd.xlane.f32.xlu0 %v2100
    %v2102 = vpop.xlane.xlu0 %2101
    %v2103 = vsel %vm797, %v2084, 0.0
    %2104 = vadd.xlane.f32.xlu0 %v2103
    %v2105 = vpop.xlane.xlu0 %2104
    %v2106 = vsel %vm797, %v2086, 0.0
    %2107 = vadd.xlane.f32.xlu0 %v2106
    %v2108 = vpop.xlane.xlu0 %2107
    %v2109 = vsel %vm797, %v2088, 0.0
    %2110 = vadd.xlane.f32.xlu0 %v2109
    %v2111 = vpop.xlane.xlu0 %2110
    %v2112 = vsel %vm797, %v2090, 0.0
    %2113 = vadd.xlane.f32.xlu0 %v2112
    %v2114 = vpop.xlane.xlu0 %2113
    %v2115 = vsel %vm797, %v2092, 0.0
    %2116 = vadd.xlane.f32.xlu0 %v2115
    %v2117 = vpop.xlane.xlu0 %2116
    %2126 = vrot.lane.b32.xlu0 %v2078, 112
    %v2127 = vpop.permute.xlu0 %2126
    %2128 = vrot.lane.b32.xlu0 %v2080, 112
    %v2129 = vpop.permute.xlu0 %2128
    %2130 = vrot.lane.b32.xlu0 %v2082, 112
    %v2131 = vpop.permute.xlu0 %2130
    %2132 = vrot.lane.b32.xlu0 %v2084, 112
    %v2133 = vpop.permute.xlu0 %2132
    %2134 = vrot.lane.b32.xlu0 %v2086, 112
    %v2135 = vpop.permute.xlu0 %2134
    %2136 = vrot.lane.b32.xlu0 %v2088, 112
    %v2137 = vpop.permute.xlu0 %2136
    %2138 = vrot.lane.b32.xlu0 %v2090, 112
    %v2139 = vpop.permute.xlu0 %2138
    %2140 = vrot.lane.b32.xlu0 %v2092, 112
    %v2141 = vpop.permute.xlu0 %2140
    %v2150 = vsel %vm797, %v2127, 0.0
    %2151 = vadd.xlane.f32.xlu0 %v2150
    %v2152 = vpop.xlane.xlu0 %2151
    %v2153 = vsel %vm797, %v2129, 0.0
    %2154 = vadd.xlane.f32.xlu0 %v2153
    %v2155 = vpop.xlane.xlu0 %2154
    %v2156 = vsel %vm797, %v2131, 0.0
    %2157 = vadd.xlane.f32.xlu0 %v2156
    %v2158 = vpop.xlane.xlu0 %2157
    %v2159 = vsel %vm797, %v2133, 0.0
    %2160 = vadd.xlane.f32.xlu0 %v2159
    %v2161 = vpop.xlane.xlu0 %2160
    %v2162 = vsel %vm797, %v2135, 0.0
    %2163 = vadd.xlane.f32.xlu0 %v2162
    %v2164 = vpop.xlane.xlu0 %2163
    %v2165 = vsel %vm797, %v2137, 0.0
    %2166 = vadd.xlane.f32.xlu0 %v2165
    %v2167 = vpop.xlane.xlu0 %2166
    %v2168 = vsel %vm797, %v2139, 0.0
    %2169 = vadd.xlane.f32.xlu0 %v2168
    %v2170 = vpop.xlane.xlu0 %2169
    %v2171 = vsel %vm797, %v2141, 0.0
    %2172 = vadd.xlane.f32.xlu0 %v2171
    %v2173 = vpop.xlane.xlu0 %2172
    %2174 = vrot.lane.b32.xlu0 %v2078, 96
    %v2175 = vpop.permute.xlu0 %2174
    %2176 = vrot.lane.b32.xlu0 %v2080, 96
    %v2177 = vpop.permute.xlu0 %2176
    %2178 = vrot.lane.b32.xlu0 %v2082, 96
    %v2179 = vpop.permute.xlu0 %2178
    %2180 = vrot.lane.b32.xlu0 %v2084, 96
    %v2181 = vpop.permute.xlu0 %2180
    %2182 = vrot.lane.b32.xlu0 %v2086, 96
    %v2183 = vpop.permute.xlu0 %2182
    %2184 = vrot.lane.b32.xlu0 %v2088, 96
    %v2185 = vpop.permute.xlu0 %2184
    %2186 = vrot.lane.b32.xlu0 %v2090, 96
    %v2187 = vpop.permute.xlu0 %2186
    %2188 = vrot.lane.b32.xlu0 %v2092, 96
    %v2189 = vpop.permute.xlu0 %2188
    %v2198 = vsel %vm797, %v2175, 0.0
    %2199 = vadd.xlane.f32.xlu0 %v2198
    %v2200 = vpop.xlane.xlu0 %2199
    %v2201 = vsel %vm797, %v2177, 0.0
    %2202 = vadd.xlane.f32.xlu0 %v2201
    %v2203 = vpop.xlane.xlu0 %2202
    %v2204 = vsel %vm797, %v2179, 0.0
    %2205 = vadd.xlane.f32.xlu0 %v2204
    %v2206 = vpop.xlane.xlu0 %2205
    %v2207 = vsel %vm797, %v2181, 0.0
    %2208 = vadd.xlane.f32.xlu0 %v2207
    %v2209 = vpop.xlane.xlu0 %2208
    %v2210 = vsel %vm797, %v2183, 0.0
    %2211 = vadd.xlane.f32.xlu0 %v2210
    %v2212 = vpop.xlane.xlu0 %2211
    %v2213 = vsel %vm797, %v2185, 0.0
    %2214 = vadd.xlane.f32.xlu0 %v2213
    %v2215 = vpop.xlane.xlu0 %2214
    %v2216 = vsel %vm797, %v2187, 0.0
    %2217 = vadd.xlane.f32.xlu0 %v2216
    %v2218 = vpop.xlane.xlu0 %2217
    %v2219 = vsel %vm797, %v2189, 0.0
    %2220 = vadd.xlane.f32.xlu0 %v2219
    %v2221 = vpop.xlane.xlu0 %2220
    %2222 = vrot.lane.b32.xlu0 %v2078, 80
    %v2223 = vpop.permute.xlu0 %2222
    %2224 = vrot.lane.b32.xlu0 %v2080, 80
    %v2225 = vpop.permute.xlu0 %2224
    %2226 = vrot.lane.b32.xlu0 %v2082, 80
    %v2227 = vpop.permute.xlu0 %2226
    %2228 = vrot.lane.b32.xlu0 %v2084, 80
    %v2229 = vpop.permute.xlu0 %2228
    %2230 = vrot.lane.b32.xlu0 %v2086, 80
    %v2231 = vpop.permute.xlu0 %2230
    %2232 = vrot.lane.b32.xlu0 %v2088, 80
    %v2233 = vpop.permute.xlu0 %2232
    %2234 = vrot.lane.b32.xlu0 %v2090, 80
    %v2235 = vpop.permute.xlu0 %2234
    %2236 = vrot.lane.b32.xlu0 %v2092, 80
    %v2237 = vpop.permute.xlu0 %2236
    %v2246 = vsel %vm797, %v2223, 0.0
    %2247 = vadd.xlane.f32.xlu0 %v2246
    %v2248 = vpop.xlane.xlu0 %2247
    %v2249 = vsel %vm797, %v2225, 0.0
    %2250 = vadd.xlane.f32.xlu0 %v2249
    %v2251 = vpop.xlane.xlu0 %2250
    %v2252 = vsel %vm797, %v2227, 0.0
    %2253 = vadd.xlane.f32.xlu0 %v2252
    %v2254 = vpop.xlane.xlu0 %2253
    %v2255 = vsel %vm797, %v2229, 0.0
    %2256 = vadd.xlane.f32.xlu0 %v2255
    %v2257 = vpop.xlane.xlu0 %2256
    %v2258 = vsel %vm797, %v2231, 0.0
    %2259 = vadd.xlane.f32.xlu0 %v2258
    %v2260 = vpop.xlane.xlu0 %2259
    %v2261 = vsel %vm797, %v2233, 0.0
    %2262 = vadd.xlane.f32.xlu0 %v2261
    %v2263 = vpop.xlane.xlu0 %2262
    %v2264 = vsel %vm797, %v2235, 0.0
    %2265 = vadd.xlane.f32.xlu0 %v2264
    %v2266 = vpop.xlane.xlu0 %2265
    %v2267 = vsel %vm797, %v2237, 0.0
    %2268 = vadd.xlane.f32.xlu0 %v2267
    %v2269 = vpop.xlane.xlu0 %2268
    %2270 = vrot.lane.b32.xlu0 %v2078, 64
    %v2271 = vpop.permute.xlu0 %2270
    %2272 = vrot.lane.b32.xlu0 %v2080, 64
    %v2273 = vpop.permute.xlu0 %2272
    %2274 = vrot.lane.b32.xlu0 %v2082, 64
    %v2275 = vpop.permute.xlu0 %2274
    %2276 = vrot.lane.b32.xlu0 %v2084, 64
    %v2277 = vpop.permute.xlu0 %2276
    %2278 = vrot.lane.b32.xlu0 %v2086, 64
    %v2279 = vpop.permute.xlu0 %2278
    %2280 = vrot.lane.b32.xlu0 %v2088, 64
    %v2281 = vpop.permute.xlu0 %2280
    %2282 = vrot.lane.b32.xlu0 %v2090, 64
    %v2283 = vpop.permute.xlu0 %2282
    %2284 = vrot.lane.b32.xlu0 %v2092, 64
    %v2285 = vpop.permute.xlu0 %2284
    %v2294 = vsel %vm797, %v2271, 0.0
    %2295 = vadd.xlane.f32.xlu0 %v2294
    %v2296 = vpop.xlane.xlu0 %2295
    %v2297 = vsel %vm797, %v2273, 0.0
    %2298 = vadd.xlane.f32.xlu0 %v2297
    %v2299 = vpop.xlane.xlu0 %2298
    %v2300 = vsel %vm797, %v2275, 0.0
    %2301 = vadd.xlane.f32.xlu0 %v2300
    %v2302 = vpop.xlane.xlu0 %2301
    %v2303 = vsel %vm797, %v2277, 0.0
    %2304 = vadd.xlane.f32.xlu0 %v2303
    %v2305 = vpop.xlane.xlu0 %2304
    %v2306 = vsel %vm797, %v2279, 0.0
    %2307 = vadd.xlane.f32.xlu0 %v2306
    %v2308 = vpop.xlane.xlu0 %2307
    %v2309 = vsel %vm797, %v2281, 0.0
    %2310 = vadd.xlane.f32.xlu0 %v2309
    %v2311 = vpop.xlane.xlu0 %2310
    %v2312 = vsel %vm797, %v2283, 0.0
    %2313 = vadd.xlane.f32.xlu0 %v2312
    %v2314 = vpop.xlane.xlu0 %2313
    %v2315 = vsel %vm797, %v2285, 0.0
    %2316 = vadd.xlane.f32.xlu0 %v2315
    %v2317 = vpop.xlane.xlu0 %2316
    %2318 = vrot.lane.b32.xlu0 %v2078, 48
    %v2319 = vpop.permute.xlu0 %2318
    %2320 = vrot.lane.b32.xlu0 %v2080, 48
    %v2321 = vpop.permute.xlu0 %2320
    %2322 = vrot.lane.b32.xlu0 %v2082, 48
    %v2323 = vpop.permute.xlu0 %2322
    %2324 = vrot.lane.b32.xlu0 %v2084, 48
    %v2325 = vpop.permute.xlu0 %2324
    %2326 = vrot.lane.b32.xlu0 %v2086, 48
    %v2327 = vpop.permute.xlu0 %2326
    %2328 = vrot.lane.b32.xlu0 %v2088, 48
    %v2329 = vpop.permute.xlu0 %2328
    %2330 = vrot.lane.b32.xlu0 %v2090, 48
    %v2331 = vpop.permute.xlu0 %2330
    %2332 = vrot.lane.b32.xlu0 %v2092, 48
    %v2333 = vpop.permute.xlu0 %2332
    %v2342 = vsel %vm797, %v2319, 0.0
    %2343 = vadd.xlane.f32.xlu0 %v2342
    %v2344 = vpop.xlane.xlu0 %2343
    %v2345 = vsel %vm797, %v2321, 0.0
    %2346 = vadd.xlane.f32.xlu0 %v2345
    %v2347 = vpop.xlane.xlu0 %2346
    %v2348 = vsel %vm797, %v2323, 0.0
    %2349 = vadd.xlane.f32.xlu0 %v2348
    %v2350 = vpop.xlane.xlu0 %2349
    %v2351 = vsel %vm797, %v2325, 0.0
    %2352 = vadd.xlane.f32.xlu0 %v2351
    %v2353 = vpop.xlane.xlu0 %2352
    %v2354 = vsel %vm797, %v2327, 0.0
    %2355 = vadd.xlane.f32.xlu0 %v2354
    %v2356 = vpop.xlane.xlu0 %2355
    %v2357 = vsel %vm797, %v2329, 0.0
    %2358 = vadd.xlane.f32.xlu0 %v2357
    %v2359 = vpop.xlane.xlu0 %2358
    %v2360 = vsel %vm797, %v2331, 0.0
    %2361 = vadd.xlane.f32.xlu0 %v2360
    %v2362 = vpop.xlane.xlu0 %2361
    %v2363 = vsel %vm797, %v2333, 0.0
    %2364 = vadd.xlane.f32.xlu0 %v2363
    %v2365 = vpop.xlane.xlu0 %2364
    %2366 = vrot.lane.b32.xlu0 %v2078, 32
    %v2367 = vpop.permute.xlu0 %2366
    %2368 = vrot.lane.b32.xlu0 %v2080, 32
    %v2369 = vpop.permute.xlu0 %2368
    %2370 = vrot.lane.b32.xlu0 %v2082, 32
    %v2371 = vpop.permute.xlu0 %2370
    %2372 = vrot.lane.b32.xlu0 %v2084, 32
    %v2373 = vpop.permute.xlu0 %2372
    %2374 = vrot.lane.b32.xlu0 %v2086, 32
    %v2375 = vpop.permute.xlu0 %2374
    %2376 = vrot.lane.b32.xlu0 %v2088, 32
    %v2377 = vpop.permute.xlu0 %2376
    %2378 = vrot.lane.b32.xlu0 %v2090, 32
    %v2379 = vpop.permute.xlu0 %2378
    %2380 = vrot.lane.b32.xlu0 %v2092, 32
    %v2381 = vpop.permute.xlu0 %2380
    %v2390 = vsel %vm797, %v2367, 0.0
    %2391 = vadd.xlane.f32.xlu0 %v2390
    %v2392 = vpop.xlane.xlu0 %2391
    %v2393 = vsel %vm797, %v2369, 0.0
    %2394 = vadd.xlane.f32.xlu0 %v2393
    %v2395 = vpop.xlane.xlu0 %2394
    %v2396 = vsel %vm797, %v2371, 0.0
    %2397 = vadd.xlane.f32.xlu0 %v2396
    %v2398 = vpop.xlane.xlu0 %2397
    %v2399 = vsel %vm797, %v2373, 0.0
    %2400 = vadd.xlane.f32.xlu0 %v2399
    %v2401 = vpop.xlane.xlu0 %2400
    %v2402 = vsel %vm797, %v2375, 0.0
    %2403 = vadd.xlane.f32.xlu0 %v2402
    %v2404 = vpop.xlane.xlu0 %2403
    %v2405 = vsel %vm797, %v2377, 0.0
    %2406 = vadd.xlane.f32.xlu0 %v2405
    %v2407 = vpop.xlane.xlu0 %2406
    %v2408 = vsel %vm797, %v2379, 0.0
    %2409 = vadd.xlane.f32.xlu0 %v2408
    %v2410 = vpop.xlane.xlu0 %2409
    %v2411 = vsel %vm797, %v2381, 0.0
    %2412 = vadd.xlane.f32.xlu0 %v2411
    %v2413 = vpop.xlane.xlu0 %2412
    %2414 = vrot.lane.b32.xlu0 %v2078, 16
    %v2415 = vpop.permute.xlu0 %2414
    %2416 = vrot.lane.b32.xlu0 %v2080, 16
    %v2417 = vpop.permute.xlu0 %2416
    %2418 = vrot.lane.b32.xlu0 %v2082, 16
    %v2419 = vpop.permute.xlu0 %2418
    %2420 = vrot.lane.b32.xlu0 %v2084, 16
    %v2421 = vpop.permute.xlu0 %2420
    %2422 = vrot.lane.b32.xlu0 %v2086, 16
    %v2423 = vpop.permute.xlu0 %2422
    %2424 = vrot.lane.b32.xlu0 %v2088, 16
    %v2425 = vpop.permute.xlu0 %2424
    %2426 = vrot.lane.b32.xlu0 %v2090, 16
    %v2427 = vpop.permute.xlu0 %2426
    %2428 = vrot.lane.b32.xlu0 %v2092, 16
    %v2429 = vpop.permute.xlu0 %2428
    %v2438 = vsel %vm797, %v2415, 0.0
    %2439 = vadd.xlane.f32.xlu0 %v2438
    %v2440 = vpop.xlane.xlu0 %2439
    %v2441 = vsel %vm797, %v2417, 0.0
    %2442 = vadd.xlane.f32.xlu0 %v2441
    %v2443 = vpop.xlane.xlu0 %2442
    %v2444 = vsel %vm797, %v2419, 0.0
    %2445 = vadd.xlane.f32.xlu0 %v2444
    %v2446 = vpop.xlane.xlu0 %2445
    %v2447 = vsel %vm797, %v2421, 0.0
    %2448 = vadd.xlane.f32.xlu0 %v2447
    %v2449 = vpop.xlane.xlu0 %2448
    %v2450 = vsel %vm797, %v2423, 0.0
    %2451 = vadd.xlane.f32.xlu0 %v2450
    %v2452 = vpop.xlane.xlu0 %2451
    %v2453 = vsel %vm797, %v2425, 0.0
    %2454 = vadd.xlane.f32.xlu0 %v2453
    %v2455 = vpop.xlane.xlu0 %2454
    %v2456 = vsel %vm797, %v2427, 0.0
    %2457 = vadd.xlane.f32.xlu0 %v2456
    %v2458 = vpop.xlane.xlu0 %2457
    %v2459 = vsel %vm797, %v2429, 0.0
    %2460 = vadd.xlane.f32.xlu0 %v2459
    %v2461 = vpop.xlane.xlu0 %2460
    %v2462 = vsel %vm797, %v2079, 0.0
    %2463 = vadd.xlane.f32.xlu0 %v2462
    %v2464 = vpop.xlane.xlu0 %2463
    %v2465 = vsel %vm797, %v2081, 0.0
    %2466 = vadd.xlane.f32.xlu0 %v2465
    %v2467 = vpop.xlane.xlu0 %2466
    %v2468 = vsel %vm797, %v2083, 0.0
    %2469 = vadd.xlane.f32.xlu0 %v2468
    %v2470 = vpop.xlane.xlu0 %2469
    %v2471 = vsel %vm797, %v2085, 0.0
    %2472 = vadd.xlane.f32.xlu0 %v2471
    %v2473 = vpop.xlane.xlu0 %2472
    %v2474 = vsel %vm797, %v2087, 0.0
    %2475 = vadd.xlane.f32.xlu0 %v2474
    %v2476 = vpop.xlane.xlu0 %2475
    %v2477 = vsel %vm797, %v2089, 0.0
    %2478 = vadd.xlane.f32.xlu0 %v2477
    %v2479 = vpop.xlane.xlu0 %2478
    %v2480 = vsel %vm797, %v2091, 0.0
    %2481 = vadd.xlane.f32.xlu0 %v2480
    %v2482 = vpop.xlane.xlu0 %2481
    %v2483 = vsel %vm797, %v2093, 0.0
    %2484 = vadd.xlane.f32.xlu0 %v2483
    %v2485 = vpop.xlane.xlu0 %2484
    %2494 = vrot.lane.b32.xlu0 %v2079, 112
    %v2495 = vpop.permute.xlu0 %2494
    %2496 = vrot.lane.b32.xlu0 %v2081, 112
    %v2497 = vpop.permute.xlu0 %2496
    %2498 = vrot.lane.b32.xlu0 %v2083, 112
    %v2499 = vpop.permute.xlu0 %2498
    %2500 = vrot.lane.b32.xlu0 %v2085, 112
    %v2501 = vpop.permute.xlu0 %2500
    %2502 = vrot.lane.b32.xlu0 %v2087, 112
    %v2503 = vpop.permute.xlu0 %2502
    %2504 = vrot.lane.b32.xlu0 %v2089, 112
    %v2505 = vpop.permute.xlu0 %2504
    %2506 = vrot.lane.b32.xlu0 %v2091, 112
    %v2507 = vpop.permute.xlu0 %2506
    %2508 = vrot.lane.b32.xlu0 %v2093, 112
    %v2509 = vpop.permute.xlu0 %2508
    %v2518 = vsel %vm797, %v2495, 0.0
    %2519 = vadd.xlane.f32.xlu0 %v2518
    %v2520 = vpop.xlane.xlu0 %2519
    %v2521 = vsel %vm797, %v2497, 0.0
    %2522 = vadd.xlane.f32.xlu0 %v2521
    %v2523 = vpop.xlane.xlu0 %2522
    %v2524 = vsel %vm797, %v2499, 0.0
    %2525 = vadd.xlane.f32.xlu0 %v2524
    %v2526 = vpop.xlane.xlu0 %2525
    %v2527 = vsel %vm797, %v2501, 0.0
    %2528 = vadd.xlane.f32.xlu0 %v2527
    %v2529 = vpop.xlane.xlu0 %2528
    %v2530 = vsel %vm797, %v2503, 0.0
    %2531 = vadd.xlane.f32.xlu0 %v2530
    %v2532 = vpop.xlane.xlu0 %2531
    %v2533 = vsel %vm797, %v2505, 0.0
    %2534 = vadd.xlane.f32.xlu0 %v2533
    %v2535 = vpop.xlane.xlu0 %2534
    %v2536 = vsel %vm797, %v2507, 0.0
    %2537 = vadd.xlane.f32.xlu0 %v2536
    %v2538 = vpop.xlane.xlu0 %2537
    %v2539 = vsel %vm797, %v2509, 0.0
    %2540 = vadd.xlane.f32.xlu0 %v2539
    %v2541 = vpop.xlane.xlu0 %2540
    %v2542 = vsel %vm726, %v2096, %v2152
    %v2543 = vsel %vm726, %v2099, %v2155
    %v2544 = vsel %vm726, %v2102, %v2158
    %v2545 = vsel %vm726, %v2105, %v2161
    %v2546 = vsel %vm726, %v2108, %v2164
    %v2547 = vsel %vm726, %v2111, %v2167
    %v2548 = vsel %vm726, %v2114, %v2170
    %v2549 = vsel %vm726, %v2117, %v2173
    %v2550 = vsel %vm728, %v2542, %v2200
    %v2551 = vsel %vm728, %v2543, %v2203
    %v2552 = vsel %vm728, %v2544, %v2206
    %v2553 = vsel %vm728, %v2545, %v2209
    %v2554 = vsel %vm728, %v2546, %v2212
    %v2555 = vsel %vm728, %v2547, %v2215
    %v2556 = vsel %vm728, %v2548, %v2218
    %v2557 = vsel %vm728, %v2549, %v2221
    %v2558 = vsel %vm730, %v2550, %v2248
    %v2559 = vsel %vm730, %v2551, %v2251
    %v2560 = vsel %vm730, %v2552, %v2254
    %v2561 = vsel %vm730, %v2553, %v2257
    %v2562 = vsel %vm730, %v2554, %v2260
    %v2563 = vsel %vm730, %v2555, %v2263
    %v2564 = vsel %vm730, %v2556, %v2266
    %v2565 = vsel %vm730, %v2557, %v2269
    %v2566 = vsel %vm732, %v2558, %v2296
    %v2567 = vsel %vm732, %v2559, %v2299
    %v2568 = vsel %vm732, %v2560, %v2302
    %v2569 = vsel %vm732, %v2561, %v2305
    %v2570 = vsel %vm732, %v2562, %v2308
    %v2571 = vsel %vm732, %v2563, %v2311
    %v2572 = vsel %vm732, %v2564, %v2314
    %v2573 = vsel %vm732, %v2565, %v2317
    %v2574 = vsel %vm734, %v2566, %v2344
    %v2575 = vsel %vm734, %v2567, %v2347
    %v2576 = vsel %vm734, %v2568, %v2350
    %v2577 = vsel %vm734, %v2569, %v2353
    %v2578 = vsel %vm734, %v2570, %v2356
    %v2579 = vsel %vm734, %v2571, %v2359
    %v2580 = vsel %vm734, %v2572, %v2362
    %v2581 = vsel %vm734, %v2573, %v2365
    %v2582 = vsel %vm736, %v2574, %v2392
    %v2583 = vsel %vm736, %v2575, %v2395
    %v2584 = vsel %vm736, %v2576, %v2398
    %v2585 = vsel %vm736, %v2577, %v2401
    %v2586 = vsel %vm736, %v2578, %v2404
    %v2587 = vsel %vm736, %v2579, %v2407
    %v2588 = vsel %vm736, %v2580, %v2410
    %v2589 = vsel %vm736, %v2581, %v2413
    %v2590 = vsel %vm738, %v2582, %v2440
    %v2591 = vsel %vm738, %v2583, %v2443
    %v2592 = vsel %vm738, %v2584, %v2446
    %v2593 = vsel %vm738, %v2585, %v2449
    %v2594 = vsel %vm738, %v2586, %v2452
    %v2595 = vsel %vm738, %v2587, %v2455
    %v2596 = vsel %vm738, %v2588, %v2458
    %v2597 = vsel %vm738, %v2589, %v2461
    %v2598 = vsel %vm740, %v2590, %v2464
    %v2599 = vsel %vm740, %v2591, %v2467
    %v2600 = vsel %vm740, %v2592, %v2470
    %v2601 = vsel %vm740, %v2593, %v2473
    %v2602 = vsel %vm740, %v2594, %v2476
    %v2603 = vsel %vm740, %v2595, %v2479
    %v2604 = vsel %vm740, %v2596, %v2482
    %v2605 = vsel %vm740, %v2597, %v2485
    %v2606 = vsel %vm742, %v2598, %v2520
    %v2607 = vsel %vm742, %v2599, %v2523
    %v2608 = vsel %vm742, %v2600, %v2526
    %v2609 = vsel %vm742, %v2601, %v2529
    %v2610 = vsel %vm742, %v2602, %v2532
    %v2611 = vsel %vm742, %v2603, %v2535
    %v2612 = vsel %vm742, %v2604, %v2538
    %v2613 = vsel %vm742, %v2605, %v2541
    %v2614 = vadd.f32 %v1367, %v2606
    %v2615 = vadd.f32 %v1368, %v2607
    %v2616 = vadd.f32 %v1369, %v2608
    %v2617 = vadd.f32 %v1370, %v2609
    %v2618 = vadd.f32 %v1371, %v2610
    %v2619 = vadd.f32 %v1372, %v2611
    %v2620 = vadd.f32 %v1373, %v2612
    %v2621 = vadd.f32 %v1374, %v2613
    %v2622 = vsel %vm1375, %v2614, -inf
    %v2623 = vsel %vm1375, %v2615, -inf
    %v2624 = vsel %vm1375, %v2616, -inf
    %v2625 = vmax.f32 %v2622, %v2624
    %v2626 = vsel %vm1375, %v2617, -inf
    %v2627 = vmax.f32 %v2623, %v2626
    %v2628 = vmax.f32 %v2625, %v2627
    %v2629 = vrot.slane %v2628, 4
    %v2630 = vmax.f32 %v2628, %v2629
    %v2631 = vrot.slane %v2630, 2
    %v2632 = vmax.f32 %v2630, %v2631
    %v2633 = vrot.slane %v2632, 1
    %v2634 = vmax.f32 %v2632, %v2633
    %v2635 = vsel %vm1375, %v2618, -inf
    %v2636 = vsel %vm1375, %v2619, -inf
    %v2637 = vsel %vm1375, %v2620, -inf
    %v2638 = vmax.f32 %v2635, %v2637
    %v2639 = vsel %vm1375, %v2621, -inf
    %v2640 = vmax.f32 %v2636, %v2639
    %v2641 = vmax.f32 %v2638, %v2640
    %v2642 = vrot.slane %v2641, 4
    %v2643 = vmax.f32 %v2641, %v2642
    %v2644 = vrot.slane %v2643, 2
    %v2645 = vmax.f32 %v2643, %v2644
    %v2646 = vrot.slane %v2645, 1
    %v2647 = vmax.f32 %v2645, %v2646
    %v2648 = vsub.f32 %v2614, %v2634
    %v2649 = vsub.f32 %v2615, %v2634
    %v2650 = vsub.f32 %v2616, %v2634
    %v2651 = vsub.f32 %v2617, %v2634
    %v2652 = vsub.f32 %v2618, %v2647
    %v2653 = vsub.f32 %v2619, %v2647
    %v2654 = vsub.f32 %v2620, %v2647
    %v2655 = vsub.f32 %v2621, %v2647
    %v2656 = vmul.f32 %v2648, 1.442695
    %v2657 = vpow.pop %v2656
    %v2658 = vmul.f32 %v2649, 1.442695
    %v2659 = vpow.pop %v2658
    %v2660 = vmul.f32 %v2650, 1.442695
    %v2661 = vpow.pop %v2660
    %v2662 = vmul.f32 %v2651, 1.442695
    %v2663 = vpow.pop %v2662
    %v2664 = vmul.f32 %v2652, 1.442695
    %v2665 = vpow.pop %v2664
    %v2666 = vmul.f32 %v2653, 1.442695
    %v2667 = vpow.pop %v2666
    %v2668 = vmul.f32 %v2654, 1.442695
    %v2669 = vpow.pop %v2668
    %v2670 = vmul.f32 %v2655, 1.442695
    %v2671 = vpow.pop %v2670
    %v2672 = vsel %vm1375, %v2657, 0.0
    %v2673 = vsel %vm1375, %v2659, 0.0
    %v2674 = vadd.f32 %v2672, %v2673
    %v2675 = vsel %vm1375, %v2661, 0.0
    %v2676 = vadd.f32 %v2674, %v2675
    %v2677 = vsel %vm1375, %v2663, 0.0
    %v2678 = vadd.f32 %v2676, %v2677
    %v2679 = vrot.slane %v2678, 4
    %v2680 = vadd.f32 %v2678, %v2679
    %v2681 = vrot.slane %v2680, 2
    %v2682 = vadd.f32 %v2680, %v2681
    %v2683 = vrot.slane %v2682, 1
    %v2684 = vadd.f32 %v2682, %v2683
    %v2685 = vsel %vm1375, %v2665, 0.0
    %v2686 = vsel %vm1375, %v2667, 0.0
    %v2687 = vadd.f32 %v2685, %v2686
    %v2688 = vsel %vm1375, %v2669, 0.0
    %v2689 = vadd.f32 %v2687, %v2688
    %v2690 = vsel %vm1375, %v2671, 0.0
    %v2691 = vadd.f32 %v2689, %v2690
    %v2692 = vrot.slane %v2691, 4
    %v2693 = vadd.f32 %v2691, %v2692
    %v2694 = vrot.slane %v2693, 2
    %v2695 = vadd.f32 %v2693, %v2694
    %v2696 = vrot.slane %v2695, 1
    %v2697 = vadd.f32 %v2695, %v2696
    %v2698 = vrcp.pop %v2684
    %v2699 = vrcp.pop %v2697
    %v2700 = vmul.f32 %v2657, %v2698
    %v2701 = vmul.f32 %v2659, %v2698
    %v2702 = vmul.f32 %v2661, %v2698
    %v2703 = vmul.f32 %v2663, %v2698
    %v2704 = vmul.f32 %v2665, %v2699
    %v2705 = vmul.f32 %v2667, %v2699
    %v2706 = vmul.f32 %v2669, %v2699
    %v2707 = vmul.f32 %v2671, %v2699
    %2709 = vset.pattern.permute.xlu0 0
    %2710 = vperm.xlu0 %2709, %v2700
    %v2711 = vpop.permute.xlu0 %2710
    %2714 = vset.pattern.permute.xlu0 0
    %2715 = vperm.xlu0 %2714, %v2701
    %v2716 = vpop.permute.xlu0 %2715
    %2719 = vset.pattern.permute.xlu0 0
    %2720 = vperm.xlu0 %2719, %v2702
    %v2721 = vpop.permute.xlu0 %2720
    %2724 = vset.pattern.permute.xlu0 0
    %2725 = vperm.xlu0 %2724, %v2703
    %v2726 = vpop.permute.xlu0 %2725
    %2729 = vset.pattern.permute.xlu0 0
    %2730 = vperm.xlu0 %2729, %v2704
    %v2731 = vpop.permute.xlu0 %2730
    %2734 = vset.pattern.permute.xlu0 0
    %2735 = vperm.xlu0 %2734, %v2705
    %v2736 = vpop.permute.xlu0 %2735
    %2739 = vset.pattern.permute.xlu0 0
    %2740 = vperm.xlu0 %2739, %v2706
    %v2741 = vpop.permute.xlu0 %2740
    %2744 = vset.pattern.permute.xlu0 0
    %2745 = vperm.xlu0 %2744, %v2707
    %v2746 = vpop.permute.xlu0 %2745
    %2748 = vset.pattern.permute.xlu0 1
    %2749 = vperm.xlu0 %2748, %v2700
    %v2750 = vpop.permute.xlu0 %2749
    %2752 = vset.pattern.permute.xlu0 1
    %2753 = vperm.xlu0 %2752, %v2701
    %v2754 = vpop.permute.xlu0 %2753
    %2756 = vset.pattern.permute.xlu0 1
    %2757 = vperm.xlu0 %2756, %v2702
    %v2758 = vpop.permute.xlu0 %2757
    %2760 = vset.pattern.permute.xlu0 1
    %2761 = vperm.xlu0 %2760, %v2703
    %v2762 = vpop.permute.xlu0 %2761
    %2764 = vset.pattern.permute.xlu0 1
    %2765 = vperm.xlu0 %2764, %v2704
    %v2766 = vpop.permute.xlu0 %2765
    %2768 = vset.pattern.permute.xlu0 1
    %2769 = vperm.xlu0 %2768, %v2705
    %v2770 = vpop.permute.xlu0 %2769
    %2772 = vset.pattern.permute.xlu0 1
    %2773 = vperm.xlu0 %2772, %v2706
    %v2774 = vpop.permute.xlu0 %2773
    %2776 = vset.pattern.permute.xlu0 1
    %2777 = vperm.xlu0 %2776, %v2707
    %v2778 = vpop.permute.xlu0 %2777
    %2780 = vset.pattern.permute.xlu0 2
    %2781 = vperm.xlu0 %2780, %v2700
    %v2782 = vpop.permute.xlu0 %2781
    %2784 = vset.pattern.permute.xlu0 2
    %2785 = vperm.xlu0 %2784, %v2701
    %v2786 = vpop.permute.xlu0 %2785
    %2788 = vset.pattern.permute.xlu0 2
    %2789 = vperm.xlu0 %2788, %v2702
    %v2790 = vpop.permute.xlu0 %2789
    %2792 = vset.pattern.permute.xlu0 2
    %2793 = vperm.xlu0 %2792, %v2703
    %v2794 = vpop.permute.xlu0 %2793
    %2796 = vset.pattern.permute.xlu0 2
    %2797 = vperm.xlu0 %2796, %v2704
    %v2798 = vpop.permute.xlu0 %2797
    %2800 = vset.pattern.permute.xlu0 2
    %2801 = vperm.xlu0 %2800, %v2705
    %v2802 = vpop.permute.xlu0 %2801
    %2804 = vset.pattern.permute.xlu0 2
    %2805 = vperm.xlu0 %2804, %v2706
    %v2806 = vpop.permute.xlu0 %2805
    %2808 = vset.pattern.permute.xlu0 2
    %2809 = vperm.xlu0 %2808, %v2707
    %v2810 = vpop.permute.xlu0 %2809
    %2812 = vset.pattern.permute.xlu0 3
    %2813 = vperm.xlu0 %2812, %v2700
    %v2814 = vpop.permute.xlu0 %2813
    %2816 = vset.pattern.permute.xlu0 3
    %2817 = vperm.xlu0 %2816, %v2701
    %v2818 = vpop.permute.xlu0 %2817
    %2820 = vset.pattern.permute.xlu0 3
    %2821 = vperm.xlu0 %2820, %v2702
    %v2822 = vpop.permute.xlu0 %2821
    %2824 = vset.pattern.permute.xlu0 3
    %2825 = vperm.xlu0 %2824, %v2703
    %v2826 = vpop.permute.xlu0 %2825
    %2828 = vset.pattern.permute.xlu0 3
    %2829 = vperm.xlu0 %2828, %v2704
    %v2830 = vpop.permute.xlu0 %2829
    %2832 = vset.pattern.permute.xlu0 3
    %2833 = vperm.xlu0 %2832, %v2705
    %v2834 = vpop.permute.xlu0 %2833
    %2836 = vset.pattern.permute.xlu0 3
    %2837 = vperm.xlu0 %2836, %v2706
    %v2838 = vpop.permute.xlu0 %2837
    %2840 = vset.pattern.permute.xlu0 3
    %2841 = vperm.xlu0 %2840, %v2707
    %v2842 = vpop.permute.xlu0 %2841
    %2844 = vset.pattern.permute.xlu0 4
    %2845 = vperm.xlu0 %2844, %v2700
    %v2846 = vpop.permute.xlu0 %2845
    %2848 = vset.pattern.permute.xlu0 4
    %2849 = vperm.xlu0 %2848, %v2701
    %v2850 = vpop.permute.xlu0 %2849
    %2852 = vset.pattern.permute.xlu0 4
    %2853 = vperm.xlu0 %2852, %v2702
    %v2854 = vpop.permute.xlu0 %2853
    %2856 = vset.pattern.permute.xlu0 4
    %2857 = vperm.xlu0 %2856, %v2703
    %v2858 = vpop.permute.xlu0 %2857
    %2860 = vset.pattern.permute.xlu0 4
    %2861 = vperm.xlu0 %2860, %v2704
    %v2862 = vpop.permute.xlu0 %2861
    %2864 = vset.pattern.permute.xlu0 4
    %2865 = vperm.xlu0 %2864, %v2705
    %v2866 = vpop.permute.xlu0 %2865
    %2868 = vset.pattern.permute.xlu0 4
    %2869 = vperm.xlu0 %2868, %v2706
    %v2870 = vpop.permute.xlu0 %2869
    %2872 = vset.pattern.permute.xlu0 4
    %2873 = vperm.xlu0 %2872, %v2707
    %v2874 = vpop.permute.xlu0 %2873
    %2876 = vset.pattern.permute.xlu0 5
    %2877 = vperm.xlu0 %2876, %v2700
    %v2878 = vpop.permute.xlu0 %2877
    %2880 = vset.pattern.permute.xlu0 5
    %2881 = vperm.xlu0 %2880, %v2701
    %v2882 = vpop.permute.xlu0 %2881
    %2884 = vset.pattern.permute.xlu0 5
    %2885 = vperm.xlu0 %2884, %v2702
    %v2886 = vpop.permute.xlu0 %2885
    %2888 = vset.pattern.permute.xlu0 5
    %2889 = vperm.xlu0 %2888, %v2703
    %v2890 = vpop.permute.xlu0 %2889
    %2892 = vset.pattern.permute.xlu0 5
    %2893 = vperm.xlu0 %2892, %v2704
    %v2894 = vpop.permute.xlu0 %2893
    %2896 = vset.pattern.permute.xlu0 5
    %2897 = vperm.xlu0 %2896, %v2705
    %v2898 = vpop.permute.xlu0 %2897
    %2900 = vset.pattern.permute.xlu0 5
    %2901 = vperm.xlu0 %2900, %v2706
    %v2902 = vpop.permute.xlu0 %2901
    %2904 = vset.pattern.permute.xlu0 5
    %2905 = vperm.xlu0 %2904, %v2707
    %v2906 = vpop.permute.xlu0 %2905
    %2908 = vset.pattern.permute.xlu0 6
    %2909 = vperm.xlu0 %2908, %v2700
    %v2910 = vpop.permute.xlu0 %2909
    %2912 = vset.pattern.permute.xlu0 6
    %2913 = vperm.xlu0 %2912, %v2701
    %v2914 = vpop.permute.xlu0 %2913
    %2916 = vset.pattern.permute.xlu0 6
    %2917 = vperm.xlu0 %2916, %v2702
    %v2918 = vpop.permute.xlu0 %2917
    %2920 = vset.pattern.permute.xlu0 6
    %2921 = vperm.xlu0 %2920, %v2703
    %v2922 = vpop.permute.xlu0 %2921
    %2924 = vset.pattern.permute.xlu0 6
    %2925 = vperm.xlu0 %2924, %v2704
    %v2926 = vpop.permute.xlu0 %2925
    %2928 = vset.pattern.permute.xlu0 6
    %2929 = vperm.xlu0 %2928, %v2705
    %v2930 = vpop.permute.xlu0 %2929
    %2932 = vset.pattern.permute.xlu0 6
    %2933 = vperm.xlu0 %2932, %v2706
    %v2934 = vpop.permute.xlu0 %2933
    %2936 = vset.pattern.permute.xlu0 6
    %2937 = vperm.xlu0 %2936, %v2707
    %v2938 = vpop.permute.xlu0 %2937
    %2940 = vset.pattern.permute.xlu0 7
    %2941 = vperm.xlu0 %2940, %v2700
    %v2942 = vpop.permute.xlu0 %2941
    %2944 = vset.pattern.permute.xlu0 7
    %2945 = vperm.xlu0 %2944, %v2701
    %v2946 = vpop.permute.xlu0 %2945
    %2948 = vset.pattern.permute.xlu0 7
    %2949 = vperm.xlu0 %2948, %v2702
    %v2950 = vpop.permute.xlu0 %2949
    %2952 = vset.pattern.permute.xlu0 7
    %2953 = vperm.xlu0 %2952, %v2703
    %v2954 = vpop.permute.xlu0 %2953
    %2956 = vset.pattern.permute.xlu0 7
    %2957 = vperm.xlu0 %2956, %v2704
    %v2958 = vpop.permute.xlu0 %2957
    %2960 = vset.pattern.permute.xlu0 7
    %2961 = vperm.xlu0 %2960, %v2705
    %v2962 = vpop.permute.xlu0 %2961
    %2964 = vset.pattern.permute.xlu0 7
    %2965 = vperm.xlu0 %2964, %v2706
    %v2966 = vpop.permute.xlu0 %2965
    %2968 = vset.pattern.permute.xlu0 7
    %2969 = vperm.xlu0 %2968, %v2707
    %v2970 = vpop.permute.xlu0 %2969
    %2972 = vset.pattern.permute.xlu0 8
    %2973 = vperm.xlu0 %2972, %v2700
    %v2974 = vpop.permute.xlu0 %2973
    %2976 = vset.pattern.permute.xlu0 8
    %2977 = vperm.xlu0 %2976, %v2701
    %v2978 = vpop.permute.xlu0 %2977
    %2980 = vset.pattern.permute.xlu0 8
    %2981 = vperm.xlu0 %2980, %v2702
    %v2982 = vpop.permute.xlu0 %2981
    %2984 = vset.pattern.permute.xlu0 8
    %2985 = vperm.xlu0 %2984, %v2703
    %v2986 = vpop.permute.xlu0 %2985
    %2988 = vset.pattern.permute.xlu0 8
    %2989 = vperm.xlu0 %2988, %v2704
    %v2990 = vpop.permute.xlu0 %2989
    %2992 = vset.pattern.permute.xlu0 8
    %2993 = vperm.xlu0 %2992, %v2705
    %v2994 = vpop.permute.xlu0 %2993
    %2996 = vset.pattern.permute.xlu0 8
    %2997 = vperm.xlu0 %2996, %v2706
    %v2998 = vpop.permute.xlu0 %2997
    %3000 = vset.pattern.permute.xlu0 8
    %3001 = vperm.xlu0 %3000, %v2707
    %v3002 = vpop.permute.xlu0 %3001
    %3004 = vset.pattern.permute.xlu0 9
    %3005 = vperm.xlu0 %3004, %v2700
    %v3006 = vpop.permute.xlu0 %3005
    %3008 = vset.pattern.permute.xlu0 9
    %3009 = vperm.xlu0 %3008, %v2701
    %v3010 = vpop.permute.xlu0 %3009
    %3012 = vset.pattern.permute.xlu0 9
    %3013 = vperm.xlu0 %3012, %v2702
    %v3014 = vpop.permute.xlu0 %3013
    %3016 = vset.pattern.permute.xlu0 9
    %3017 = vperm.xlu0 %3016, %v2703
    %v3018 = vpop.permute.xlu0 %3017
    %3020 = vset.pattern.permute.xlu0 9
    %3021 = vperm.xlu0 %3020, %v2704
    %v3022 = vpop.permute.xlu0 %3021
    %3024 = vset.pattern.permute.xlu0 9
    %3025 = vperm.xlu0 %3024, %v2705
    %v3026 = vpop.permute.xlu0 %3025
    %3028 = vset.pattern.permute.xlu0 9
    %3029 = vperm.xlu0 %3028, %v2706
    %v3030 = vpop.permute.xlu0 %3029
    %3032 = vset.pattern.permute.xlu0 9
    %3033 = vperm.xlu0 %3032, %v2707
    %v3034 = vpop.permute.xlu0 %3033
    %v3036 = vsel %vm797, %v2711, %v2750
    %v3037 = vsel %vm797, %v2716, %v2754
    %v3038 = vsel %vm797, %v2721, %v2758
    %v3039 = vsel %vm797, %v2726, %v2762
    %v3040 = vsel %vm797, %v2731, %v2766
    %v3041 = vsel %vm797, %v2736, %v2770
    %v3042 = vsel %vm797, %v2741, %v2774
    %v3043 = vsel %vm797, %v2746, %v2778
    %v3044 = vsel %vm618, %v3036, %v2782
    %v3045 = vsel %vm618, %v3037, %v2786
    %v3046 = vsel %vm618, %v3038, %v2790
    %v3047 = vsel %vm618, %v3039, %v2794
    %v3048 = vsel %vm618, %v3040, %v2798
    %v3049 = vsel %vm618, %v3041, %v2802
    %v3050 = vsel %vm618, %v3042, %v2806
    %v3051 = vsel %vm618, %v3043, %v2810
    %v3052 = vsel %vm800, %v3044, %v2814
    %v3053 = vsel %vm800, %v3045, %v2818
    %v3054 = vsel %vm800, %v3046, %v2822
    %v3055 = vsel %vm800, %v3047, %v2826
    %v3056 = vsel %vm800, %v3048, %v2830
    %v3057 = vsel %vm800, %v3049, %v2834
    %v3058 = vsel %vm800, %v3050, %v2838
    %v3059 = vsel %vm800, %v3051, %v2842
    %v3060 = vsel %vm802, %v3052, %v2846
    %v3061 = vsel %vm802, %v3053, %v2850
    %v3062 = vsel %vm802, %v3054, %v2854
    %v3063 = vsel %vm802, %v3055, %v2858
    %v3064 = vsel %vm802, %v3056, %v2862
    %v3065 = vsel %vm802, %v3057, %v2866
    %v3066 = vsel %vm802, %v3058, %v2870
    %v3067 = vsel %vm802, %v3059, %v2874
    %v3068 = vsel %vm804, %v3060, %v2878
    %v3069 = vsel %vm804, %v3061, %v2882
    %v3070 = vsel %vm804, %v3062, %v2886
    %v3071 = vsel %vm804, %v3063, %v2890
    %v3072 = vsel %vm804, %v3064, %v2894
    %v3073 = vsel %vm804, %v3065, %v2898
    %v3074 = vsel %vm804, %v3066, %v2902
    %v3075 = vsel %vm804, %v3067, %v2906
    %v3076 = vsel %vm806, %v3068, %v2910
    %v3077 = vsel %vm806, %v3069, %v2914
    %v3078 = vsel %vm806, %v3070, %v2918
    %v3079 = vsel %vm806, %v3071, %v2922
    %v3080 = vsel %vm806, %v3072, %v2926
    %v3081 = vsel %vm806, %v3073, %v2930
    %v3082 = vsel %vm806, %v3074, %v2934
    %v3083 = vsel %vm806, %v3075, %v2938
    %v3084 = vsel %vm808, %v3076, %v2942
    %v3085 = vsel %vm808, %v3077, %v2946
    %v3086 = vsel %vm808, %v3078, %v2950
    %v3087 = vsel %vm808, %v3079, %v2954
    %v3088 = vsel %vm808, %v3080, %v2958
    %v3089 = vsel %vm808, %v3081, %v2962
    %v3090 = vsel %vm808, %v3082, %v2966
    %v3091 = vsel %vm808, %v3083, %v2970
    %v3092 = vsel %vm797, %v2974, %v3006
    %v3093 = vsel %vm797, %v2978, %v3010
    %v3094 = vsel %vm797, %v2982, %v3014
    %v3095 = vsel %vm797, %v2986, %v3018
    %v3096 = vsel %vm797, %v2990, %v3022
    %v3097 = vsel %vm797, %v2994, %v3026
    %v3098 = vsel %vm797, %v2998, %v3030
    %v3099 = vsel %vm797, %v3002, %v3034
    %v3100 = vmul.f32 %v3084, %v593
    %v3101 = vmul.f32 %v3092, %v594
    %v3102 = vmul.f32 %v3085, %v595
    %v3103 = vmul.f32 %v3093, %v596
    %v3104 = vmul.f32 %v3086, %v597
    %v3105 = vmul.f32 %v3094, %v598
    %v3106 = vmul.f32 %v3087, %v599
    %v3107 = vmul.f32 %v3095, %v600
    %v3108 = vmul.f32 %v3088, %v601
    %v3109 = vmul.f32 %v3096, %v602
    %v3110 = vmul.f32 %v3089, %v603
    %v3111 = vmul.f32 %v3097, %v604
    %v3112 = vmul.f32 %v3090, %v605
    %v3113 = vmul.f32 %v3098, %v606
    %v3114 = vmul.f32 %v3091, %v607
    %v3115 = vmul.f32 %v3099, %v608
    %v3116 = vadd.f32 %v3100, %v3102
    %v3117 = vadd.f32 %v3116, %v3104
    %v3118 = vadd.f32 %v3117, %v3106
    %v3119 = vrot.slane %v3118, 4
    %v3120 = vadd.f32 %v3118, %v3119
    %v3121 = vrot.slane %v3120, 2
    %v3122 = vadd.f32 %v3120, %v3121
    %v3123 = vrot.slane %v3122, 1
    %v3124 = vadd.f32 %v3122, %v3123
    %v3125 = vsel %vm618, %v3101, 0.0
    %v3126 = vsel %vm618, %v3103, 0.0
    %v3127 = vadd.f32 %v3125, %v3126
    %v3128 = vsel %vm618, %v3105, 0.0
    %v3129 = vadd.f32 %v3127, %v3128
    %v3130 = vsel %vm618, %v3107, 0.0
    %v3131 = vadd.f32 %v3129, %v3130
    %v3132 = vrot.slane %v3131, 4
    %v3133 = vadd.f32 %v3131, %v3132
    %v3134 = vrot.slane %v3133, 2
    %v3135 = vadd.f32 %v3133, %v3134
    %v3136 = vrot.slane %v3135, 1
    %v3137 = vadd.f32 %v3135, %v3136
    %v3138 = vadd.f32 %v3108, %v3110
    %v3139 = vadd.f32 %v3138, %v3112
    %v3140 = vadd.f32 %v3139, %v3114
    %v3141 = vrot.slane %v3140, 4
    %v3142 = vadd.f32 %v3140, %v3141
    %v3143 = vrot.slane %v3142, 2
    %v3144 = vadd.f32 %v3142, %v3143
    %v3145 = vrot.slane %v3144, 1
    %v3146 = vadd.f32 %v3144, %v3145
    %v3147 = vsel %vm618, %v3109, 0.0
    %v3148 = vsel %vm618, %v3111, 0.0
    %v3149 = vadd.f32 %v3147, %v3148
    %v3150 = vsel %vm618, %v3113, 0.0
    %v3151 = vadd.f32 %v3149, %v3150
    %v3152 = vsel %vm618, %v3115, 0.0
    %v3153 = vadd.f32 %v3151, %v3152
    %v3154 = vrot.slane %v3153, 4
    %v3155 = vadd.f32 %v3153, %v3154
    %v3156 = vrot.slane %v3155, 2
    %v3157 = vadd.f32 %v3155, %v3156
    %v3158 = vrot.slane %v3157, 1
    %v3159 = vadd.f32 %v3157, %v3158
    %v3160 = vmul.f32 %v3124, %v3124
    %v3161 = vmul.f32 %v3137, %v3137
    %v3162 = vmul.f32 %v3146, %v3146
    %v3163 = vmul.f32 %v3159, %v3159
    %v3166 = vsel %vm664, %v3162, %v3160
    %v3168 = vsel %vm667, %v3166, 0.0
    %3169 = vadd.xlane.f32.xlu0 %v3168
    %v3170 = vpop.xlane.xlu0 %3169
    %3171 = vrot.lane.b32.xlu0 %v3166, 112
    %v3172 = vpop.permute.xlu0 %3171
    %v3174 = vsel %vm667, %v3172, 0.0
    %3175 = vadd.xlane.f32.xlu0 %v3174
    %v3176 = vpop.xlane.xlu0 %3175
    %3177 = vrot.lane.b32.xlu0 %v3166, 96
    %v3178 = vpop.permute.xlu0 %3177
    %v3180 = vsel %vm667, %v3178, 0.0
    %3181 = vadd.xlane.f32.xlu0 %v3180
    %v3182 = vpop.xlane.xlu0 %3181
    %3183 = vrot.lane.b32.xlu0 %v3166, 80
    %v3184 = vpop.permute.xlu0 %3183
    %v3186 = vsel %vm667, %v3184, 0.0
    %3187 = vadd.xlane.f32.xlu0 %v3186
    %v3188 = vpop.xlane.xlu0 %3187
    %3189 = vrot.lane.b32.xlu0 %v3166, 64
    %v3190 = vpop.permute.xlu0 %3189
    %v3192 = vsel %vm667, %v3190, 0.0
    %3193 = vadd.xlane.f32.xlu0 %v3192
    %v3194 = vpop.xlane.xlu0 %3193
    %3195 = vrot.lane.b32.xlu0 %v3166, 48
    %v3196 = vpop.permute.xlu0 %3195
    %v3198 = vsel %vm667, %v3196, 0.0
    %3199 = vadd.xlane.f32.xlu0 %v3198
    %v3200 = vpop.xlane.xlu0 %3199
    %3201 = vrot.lane.b32.xlu0 %v3166, 32
    %v3202 = vpop.permute.xlu0 %3201
    %v3204 = vsel %vm667, %v3202, 0.0
    %3205 = vadd.xlane.f32.xlu0 %v3204
    %v3206 = vpop.xlane.xlu0 %3205
    %3207 = vrot.lane.b32.xlu0 %v3166, 16
    %v3208 = vpop.permute.xlu0 %3207
    %v3210 = vsel %vm667, %v3208, 0.0
    %3211 = vadd.xlane.f32.xlu0 %v3210
    %v3212 = vpop.xlane.xlu0 %3211
    %v3215 = vsel %vm664, %v3163, %v3161
    %v3217 = vsel %vm667, %v3215, 0.0
    %3218 = vadd.xlane.f32.xlu0 %v3217
    %v3219 = vpop.xlane.xlu0 %3218
    %3220 = vrot.lane.b32.xlu0 %v3215, 112
    %v3221 = vpop.permute.xlu0 %3220
    %v3223 = vsel %vm667, %v3221, 0.0
    %3224 = vadd.xlane.f32.xlu0 %v3223
    %v3225 = vpop.xlane.xlu0 %3224
    %v3226 = vsel %vm726, %v3170, %v3176
    %v3227 = vsel %vm728, %v3226, %v3182
    %v3228 = vsel %vm730, %v3227, %v3188
    %v3229 = vsel %vm732, %v3228, %v3194
    %v3230 = vsel %vm734, %v3229, %v3200
    %v3231 = vsel %vm736, %v3230, %v3206
    %v3232 = vsel %vm738, %v3231, %v3212
    %v3233 = vsel %vm740, %v3232, %v3219
    %v3234 = vsel %vm742, %v3233, %v3225
    %v3235 = vadd.f32 %v3234, 1.0
    %v3236 = vrcp.pop %v3235
    %v3237 = vmul.f32 %v3234, %v3236
    %v3238 = vrsqrt.pop %v3234
    %v3239 = vmul.f32 %v3234, %v3238
    %vm3240 = vcmp.eq.f32.partialorder %v3234, inf
    %v3241 = vsel %vm3240, %v3234, %v3239
    %vm3242 = vcmp.eq.f32.partialorder %v3234, 0.0
    %v3243 = vand.u32 %v3234, 2147483648
    %v3244 = vsel %vm3242, %v3243, %v3241
    %v3245 = vrcp.pop %v3244
    %v3246 = vmul.f32 %v3237, %v3245
    %3248 = vset.pattern.permute.xlu0 0
    %3249 = vperm.xlu0 %3248, %v3246
    %v3250 = vpop.permute.xlu0 %3249
    %3252 = vset.pattern.permute.xlu0 1
    %3253 = vperm.xlu0 %3252, %v3246
    %v3254 = vpop.permute.xlu0 %3253
    %3256 = vset.pattern.permute.xlu0 2
    %3257 = vperm.xlu0 %3256, %v3246
    %v3258 = vpop.permute.xlu0 %3257
    %3260 = vset.pattern.permute.xlu0 3
    %3261 = vperm.xlu0 %3260, %v3246
    %v3262 = vpop.permute.xlu0 %3261
    %3264 = vset.pattern.permute.xlu0 4
    %3265 = vperm.xlu0 %3264, %v3246
    %v3266 = vpop.permute.xlu0 %3265
    %3268 = vset.pattern.permute.xlu0 5
    %3269 = vperm.xlu0 %3268, %v3246
    %v3270 = vpop.permute.xlu0 %3269
    %3272 = vset.pattern.permute.xlu0 6
    %3273 = vperm.xlu0 %3272, %v3246
    %v3274 = vpop.permute.xlu0 %3273
    %3276 = vset.pattern.permute.xlu0 7
    %3277 = vperm.xlu0 %3276, %v3246
    %v3278 = vpop.permute.xlu0 %3277
    %3280 = vset.pattern.permute.xlu0 8
    %3281 = vperm.xlu0 %3280, %v3246
    %v3282 = vpop.permute.xlu0 %3281
    %3284 = vset.pattern.permute.xlu0 9
    %3285 = vperm.xlu0 %3284, %v3246
    %v3286 = vpop.permute.xlu0 %3285
    %v3288 = vsel %vm797, %v3250, %v3254
    %v3289 = vsel %vm618, %v3288, %v3258
    %v3290 = vsel %vm800, %v3289, %v3262
    %v3291 = vsel %vm802, %v3290, %v3266
    %v3292 = vsel %vm804, %v3291, %v3270
    %v3293 = vsel %vm806, %v3292, %v3274
    %v3294 = vsel %vm808, %v3293, %v3278
    %v3295 = vsel %vm797, %v3282, %v3286
    %v3298 = vrot.slane %v3294, 1
    %v3299 = vrot.slane %v3295, 1
    %v3304 = vmul.f32 %v3124, %v3294
    %v3305 = vmul.f32 %v3137, %v3295
    %v3306 = vmul.f32 %v3146, %v3298
    %v3307 = vmul.f32 %v3159, %v3299
    %v3312 = vcombine.low %v3304, %v3305
    %v3314 = vunpack.c.l.s4 1983009808
    %v3315 = vunpack.c.0.s8 %v3314
    %v3316 = vlaneseq
    %v3317 = vshrl.u32 %v3316, 7
    %v3318 = vsub.s32 %v3315, %v3317
    %v3319 = vrot.slane %v3312, %v3318
    %v3320 = vcombine.low %v3306, %v3307
    %v3322 = vunpack.c.l.s4 1983009808
    %v3323 = vunpack.c.0.s8 %v3322
    %v3324 = vlaneseq
    %v3325 = vshrl.u32 %v3324, 7
    %v3326 = vsub.s32 %v3323, %v3325
    %v3327 = vrot.slane %v3320, %v3326
    %vm3328 = vcmask 1044484
    %v3329 = vsel %vm3328, %v3319, %v3319
    %vm3330 = vcmask 1046534
    %v3331 = vsel %vm3330, %v3319, %v3329
    %v3332 = vrot.slane %v3327, 7
    %v3333 = vsel %vm664, %v3332, %v3331
    %vm3334 = vcmask 1043459
    %v3335 = vsel %vm3334, %v3332, %v3333
    %vm3336 = vcmask 1045509
    %v3337 = vsel %vm3336, %v3332, %v3335
    %vm3338 = vcmask 1047559
    %v3339 = vsel %vm3338, %v3332, %v3337
    %vm3341 = vcmask 1041408
    %vm3342 = vcmask 257026
    %vm3343 = vmor %vm3342, %vm3341
    %3344 = vst.msk [vmem:[#allocation5] sm:$0xf] %vm3343, %v3339
    // Predicated region
    $region14: #{tpu_custom_call.1} parent=1 // pred_check
      _
    $region15: #{tpu_custom_call.1} parent=1 // pred_check_branch
      %3346 = sbr.rel (0) target = $region17
    $region16: #{tpu_custom_call.1} parent=1 // pred_region
      %s3348 = ssub.s32 64, 64
      %3349 = vsyncadd [#allocation4], %s3348
      %s3351 = sshll.u32 [#allocation5], 4
      %s3352 = int_to_ptr.vmem [resolvable:$true] %s3351
      %3354 = dma.vmem_to_hbm [thread:$0]  %s3352, 64, %s2, [#allocation4]
    $region17: #{tpu_custom_call.1} parent=1 // pred_fallthru
      _
    // Predicated region
    $region18: #{tpu_custom_call.1} parent=1 // pred_check
      _
    $region19: #{tpu_custom_call.1} parent=1 // pred_check_branch
      %3356 = sbr.rel (0) target = $region21
    $region20: #{tpu_custom_call.1} parent=1 // pred_region
      %3357 = dma.done [#allocation4], 64
    $region21: #{tpu_custom_call.1} parent=1 // pred_fallthru
      _
    %3358 = vsyncpa [#allocation3], 1
    %3359 = vsyncpa [#allocation4], 1

</llo_original>
